<compile_context>
chip_gen: v6e
topology: v6e:2x2x1
jax: 0.10.0
libtpu: 0.0.40
codegen_flags: <defaults>
</compile_context>

<pallas_src>
import functools

import jax
import jax.numpy as jnp
from jax.experimental import pallas as pl
from jax.experimental.pallas import tpu as pltpu


# --------------------------------------------------------------------------
# Per-generation tuning knobs.
# --------------------------------------------------------------------------
def _detect_vmem_limit():
    """Scoped-VMEM budget ~= half of physical VMEM.
    v5e/v6e (128 MiB) -> 64 MiB, v7x (64 MiB) -> 32 MiB; floor 32, cap 96 MiB."""
    try:
        cap = int(pltpu.get_tpu_info().vmem_capacity_bytes)
        return int(max(32 << 20, min(96 << 20, cap // 2)))
    except Exception:  # interpreter / older jax: safe default
        return 32 << 20


_VMEM_LIMIT = _detect_vmem_limit()
# Bigger lane tiles when VMEM allows (v5e/v6e); modest on v7x (64 MiB VMEM).
_TARGET_TILE = 4096 if _VMEM_LIMIT >= (64 << 20) else 2048


def _pick_tile(P, target):
    """Largest lane tile (multiple of 128) dividing P, capped at `target`,
    preferring >=4 blocks so v7x (2 TCs) gets >=2 pipelined steps per core."""
    assert P % 128 == 0
    if P >= 512:
        cap = P // 4
    elif P >= 256:
        cap = P // 2
    else:
        cap = P
    cap = max((min(target, cap) // 128) * 128, 128)
    for t in range(cap, 0, -128):
        if P % t == 0:
            return t
    return 128


def _pad_lanes(a, mult=128):
    pad = (-a.shape[-1]) % mult
    if pad:
        a = jnp.pad(a, [(0, 0)] * (a.ndim - 1) + [(0, pad)])
    return a


# --------------------------------------------------------------------------
# Pointwise (1x1 conv) kernel:  out = W @ x + bias [+ add] [-> swish]
# Loads are widened to f32 (v5e has no bf16 VPU/EUP), stores cast to out dtype.
# --------------------------------------------------------------------------
def _make_pw_kernel(act, has_add):
    def kernel(x_ref, w_ref, b_ref, *rest):
        if has_add:
            a_ref, o_ref = rest
        else:
            (o_ref,) = rest
        x = x_ref[...].astype(jnp.float32)
        y = jnp.dot(w_ref[...], x, preferred_element_type=jnp.float32)
        y = y + b_ref[...].astype(jnp.float32)
        if has_add:
            y = y + a_ref[...].astype(jnp.float32)
        if act:
            y = y * jax.nn.sigmoid(y)  # swish / SiLU
        o_ref[...] = y.astype(o_ref.dtype)
    return kernel


def pointwise_conv(x, w, b, add=None, act=False, out_dtype=jnp.float32,
                   target_tile=None, donate=False):
    # x: (Cin, P); w: (Cout, Cin); b: (Cout,); add: (Cout, P) or None
    Cin, P = x.shape
    Cout = w.shape[0]
    if target_tile is None:
        target_tile = _TARGET_TILE

    padded = (P % 128 != 0)
    if padded:                      # masked-tail replacement: pad + slice back
        x = _pad_lanes(x)
        if add is not None:
            add = _pad_lanes(add)
        donate = False
    Pp = x.shape[-1]
    tile = _pick_tile(Pp, target_tile)
    has_add = add is not None

    in_specs = [pl.BlockSpec((Cin, tile), lambda j: (0, j)),
                pl.BlockSpec((Cout, Cin), lambda j: (0, 0)),
                pl.BlockSpec((Cout, 1), lambda j: (0, 0))]
    args = [x, w.astype(jnp.float32), b.reshape(Cout, 1).astype(jnp.float32)]
    if has_add:
        in_specs.append(pl.BlockSpec((Cout, tile), lambda j: (0, j)))
        args.append(add)

    call_kwargs = {}
    if donate and Cin == Cout and x.dtype == jnp.dtype(out_dtype):
        # In-place update of the activation stream (layer loop): no extra
        # (width, P) HBM allocation per layer.
        call_kwargs["input_output_aliases"] = {0: 0}

    out = pl.pallas_call(
        _make_pw_kernel(act, has_add),
        out_shape=jax.ShapeDtypeStruct((Cout, Pp), out_dtype),
        grid=(Pp // tile,),
        in_specs=in_specs,
        out_specs=pl.BlockSpec((Cout, tile), lambda j: (0, j)),
        compiler_params=pltpu.CompilerParams(
            dimension_semantics=("parallel",),
            vmem_limit_bytes=_VMEM_LIMIT),
        **call_kwargs,
    )(*args)
    return out[:, :P] if padded else out


# --------------------------------------------------------------------------
# fc0: grid channels folded into a resident per-pixel bias (no HBM grid).
# --------------------------------------------------------------------------
def fc0_conv(x, w, b, H, W, out_dtype=jnp.float32, max_img_block=16384):
    # x: (D, N, H, W) state channels only; w: (width, D+2); b: (width,)
    D, N = x.shape[0], x.shape[1]
    width = w.shape[0]
    HW = H * W
    P = N * HW

    gx = jnp.linspace(0.0, 1.0, H, dtype=jnp.float32)
    gy = jnp.linspace(0.0, 1.0, W, dtype=jnp.float32)
    grid2 = jnp.stack([jnp.broadcast_to(gx[:, None], (H, W)).reshape(HW),
                       jnp.broadcast_to(gy[None, :], (H, W)).reshape(HW)], axis=0)
    xf = x.reshape(D, P)

    if HW % 128 == 0 and HW <= max_img_block:
        # per-pixel bias = w_grid @ grid + b; resident in VMEM (constant index map)
        gbias = jnp.dot(w[:, D:], grid2) + b[:, None]          # (width, HW)
        return pl.pallas_call(
            _make_pw_kernel(act=False, has_add=False),
            out_shape=jax.ShapeDtypeStruct((width, P), out_dtype),
            grid=(N,),
            in_specs=[pl.BlockSpec((D, HW), lambda n: (0, n)),
                      pl.BlockSpec((width, D), lambda n: (0, 0)),
                      pl.BlockSpec((width, HW), lambda n: (0, 0))],
            out_specs=pl.BlockSpec((width, HW), lambda n: (0, n)),
            compiler_params=pltpu.CompilerParams(
                dimension_semantics=("parallel",),
                vmem_limit_bytes=_VMEM_LIMIT),
        )(xf, w[:, :D], gbias)

    # TODO(synk): odd image sizes fall back to materializing the 2 grid channels.
    gfull = jnp.broadcast_to(grid2.reshape(2, 1, HW), (2, N, HW)).reshape(2, P)
    return pointwise_conv(jnp.concatenate([xf, gfull], axis=0), w, b,
                          out_dtype=out_dtype)


# --------------------------------------------------------------------------
# Fused fc1 (grouped 1x1 conv) + swish + fc2: exactly two MXU matmuls.
# --------------------------------------------------------------------------
def _fc12_kernel(x_ref, w1_ref, b1_ref, w2_ref, b2_ref, o_ref):
    x = x_ref[...].astype(jnp.float32)                          # (width, tile)
    h = jnp.dot(w1_ref[...], x, preferred_element_type=jnp.float32) + b1_ref[...]
    h = h * jax.nn.sigmoid(h)                                   # swish in f32
    y = jnp.dot(w2_ref[...], h, preferred_element_type=jnp.float32) + b2_ref[...]
    o_ref[...] = y.astype(o_ref.dtype)


def fc12_conv(x, fc1_s, fc1_b, fc2_w, fc2_b, target_tile=None):
    width, P = x.shape
    KW = fc1_s.shape[0]
    K = KW // width
    Dout = fc2_w.shape[0]
    if target_tile is None:
        target_tile = _TARGET_TILE

    padded = (P % 128 != 0)
    if padded:
        x = _pad_lanes(x)
    Pp = x.shape[-1]
    tile = _pick_tile(Pp, target_tile)

    # Dense block-diagonal fc1 weight: PyTorch Conv2d(width, K*width, groups=width)
    # -> output channel g*K+k reads input channel g with scalar fc1_s[g*K+k].
    s = fc1_s.reshape(width, K)
    w1 = (s[:, :, None] *
          jnp.eye(width, dtype=jnp.float32)[:, None, :]).reshape(KW, width)
    b1 = fc1_b.reshape(KW, 1)
    b2 = fc2_b.reshape(Dout, 1)

    out = pl.pallas_call(
        _fc12_kernel,
        out_shape=jax.ShapeDtypeStruct((Dout, Pp), jnp.float32),
        grid=(Pp // tile,),
        in_specs=[pl.BlockSpec((width, tile), lambda j: (0, j)),
                  pl.BlockSpec((KW, width), lambda j: (0, 0)),
                  pl.BlockSpec((KW, 1), lambda j: (0, 0)),
                  pl.BlockSpec((Dout, KW), lambda j: (0, 0)),
                  pl.BlockSpec((Dout, 1), lambda j: (0, 0))],
        out_specs=pl.BlockSpec((Dout, tile), lambda j: (0, j)),
        compiler_params=pltpu.CompilerParams(
            dimension_semantics=("parallel",),
            vmem_limit_bytes=_VMEM_LIMIT),
    )(x, w1, b1, fc2_w.astype(jnp.float32), b2)
    return out[:, :P] if padded else out


# --------------------------------------------------------------------------
# Spectral mixing (GroupSpectralConv2d channel mixing), lane-dense layout.
#   out[k,e,b,o*M+m] = sum_i x[k,e,b,i,m] * Weff[k,e,i,o*M+m]     (complex)
# Grid = (block, env, batch); per-env weights are DMA'd once per (block, env)
# and re-used across B pipelined steps. The Cout-broadcast of x is done with a
# tiny resident tiling-matrix matmul (MXU), the Cin-reduction with one sublane
# sum -- no big lane-padded intermediates.
# --------------------------------------------------------------------------
def _spectral_mix_kernel(xr_ref, xi_ref, wr_ref, wi_ref, t_ref, or_ref, oi_ref):
    t = t_ref[...]                                              # (M, Cout*M)
    xr = jnp.dot(xr_ref[...], t, preferred_element_type=jnp.float32)  # (Cin, Cout*M)
    xi = jnp.dot(xi_ref[...], t, preferred_element_type=jnp.float32)
    wr = wr_ref[...]
    wi = wi_ref[...]
    or_ref[...] = jnp.sum(xr * wr - xi * wi, axis=0, keepdims=True)
    oi_ref[...] = jnp.sum(xr * wi + xi * wr, axis=0, keepdims=True)


def spectral_mix(xr, xi, wr, wi):
    # xr/xi: (2, E, B, Cin, M); wr/wi: (2, E, Cin, Cout*M) lane-dense
    _, E, B, Cin, M = xr.shape
    CoutM = wr.shape[-1]
    Cout = CoutM // M
    tmat = jnp.tile(jnp.eye(M, dtype=jnp.float32), (1, Cout))   # (M, Cout*M)

    x_spec = pl.BlockSpec((None, None, None, Cin, M),
                          lambda k, e, b: (k, e, b, 0, 0))
    w_spec = pl.BlockSpec((None, None, Cin, CoutM),
                          lambda k, e, b: (k, e, 0, 0))
    t_spec = pl.BlockSpec((M, CoutM), lambda k, e, b: (0, 0))
    o_spec = pl.BlockSpec((None, None, None, 1, CoutM),
                          lambda k, e, b: (k, e, b, 0, 0))
    o_shape = jax.ShapeDtypeStruct((2, E, B, 1, CoutM), jnp.float32)

    return pl.pallas_call(
        _spectral_mix_kernel,
        out_shape=(o_shape, o_shape),
        grid=(2, E, B),
        in_specs=[x_spec, x_spec, w_spec, w_spec, t_spec],
        out_specs=(o_spec, o_spec),
        compiler_params=pltpu.CompilerParams(
            dimension_semantics=("parallel", "parallel", "arbitrary"),
            vmem_limit_bytes=_VMEM_LIMIT),
    )(xr, xi, wr, wi, tmat)


def hardsigmoid(x):
    return jnp.clip(x / 6.0 + 0.5, 0.0, 1.0)


def _fold_spectral_weights(p, codes):
    """Fold lam / common / per-env weights for BOTH mode blocks in one einsum,
    emitting the lane-dense (2, E, Cin, Cout*M) effective complex weight."""
    Cin, Cout, m1, m2, _ = p['com_weights1'].shape
    code_dim = codes.shape[1]
    E = codes.shape[0]

    com = jnp.stack([p['com_weights1'], p['com_weights2']], axis=0)
    cw = jnp.stack([p['code_weights1'], p['code_weights2']], axis=0)
    cw = cw.reshape(2, code_dim, Cin, Cout, m1, m2, 2)
    env = jnp.einsum('ec,kcioxyz->keioxyz', codes, cw)          # (2,E,Ci,Co,m1,m2,2)

    # NOTE: the reference forward uses filter_weights1 for BOTH mode blocks
    # (filter_weights2 is unused there); reproduced faithfully.
    lam = hardsigmoid(p['filter_weights1'])[None, None, None, None, :, :, None]
    weff = lam * com[:, None] + (1.0 - lam) * env               # (2,E,Ci,Co,m1,m2,2)

    M = m1 * m2
    wr = weff[..., 0].reshape(2, E, Cin, Cout * M)
    wi = weff[..., 1].reshape(2, E, Cin, Cout * M)
    return wr, wi


# --------------------------------------------------------------------------
# GroupSpectralConv2d forward (FFT in XLA, channel mixing in Pallas).
# x: (Cin, N, H, W), N = B * n_env (batch-major, env-minor)
# --------------------------------------------------------------------------
def group_spectral_conv2d(x, codes, p, B, E, modes1, modes2):
    Cin, N, H, W = x.shape
    Cout = p['com_weights1'].shape[1]
    Wf = W // 2 + 1
    M = modes1 * modes2

    # TODO(synk): rfft2/irfft2 have no Pallas TPU primitive; they stay in XLA.
    x_ft = jnp.fft.rfft2(x)                                     # (Cin, N, H, Wf)
    low = x_ft[:, :, :modes1, :modes2].reshape(Cin, B, E, M)
    high = x_ft[:, :, H - modes1:, :modes2].reshape(Cin, B, E, M)
    blk = jnp.stack([low, high], axis=0)                        # (2, Cin, B, E, M)
    blk = jnp.transpose(blk, (0, 3, 2, 1, 4))                   # (2, E, B, Cin, M)
    xr = jnp.real(blk).astype(jnp.float32)
    xi = jnp.imag(blk).astype(jnp.float32)

    wr, wi = _fold_spectral_weights(p, codes)                   # (2, E, Cin, Cout*M)
    or_, oi_ = spectral_mix(xr, xi, wr, wi)                     # (2, E, B, 1, Cout*M)

    out = jax.lax.complex(or_, oi_).reshape(2, E, B, Cout, modes1, modes2)
    out = jnp.transpose(out, (0, 3, 2, 1, 4, 5))                # (2, Cout, B, E, m1, m2)
    out = out.reshape(2, Cout, N, modes1, modes2)
    low_out, high_out = out[0], out[1]

    pad_w = Wf - modes2
    if H >= 2 * modes1:
        # single padded construction instead of zeros + two scatters
        low_p = jnp.pad(low_out, ((0, 0), (0, 0), (0, 0), (0, pad_w)))
        high_p = jnp.pad(high_out, ((0, 0), (0, 0), (0, 0), (0, pad_w)))
        mid = jnp.zeros((Cout, N, H - 2 * modes1, Wf), dtype=low_p.dtype)
        out_ft = jnp.concatenate([low_p, mid, high_p], axis=2)
    else:
        out_ft = jnp.zeros((Cout, N, H, Wf), dtype=jnp.complex64)
        out_ft = out_ft.at[:, :, :modes1, :modes2].set(low_out)
        out_ft = out_ft.at[:, :, H - modes1:, :modes2].set(high_out)

    return jnp.fft.irfft2(out_ft, s=(H, W))                     # (Cout, N, H, W) f32


# --------------------------------------------------------------------------
# GrayGroupFNO2d forward.
# x: (B, n_env * output_dim, H, W) float32;  codes: (n_env, code_dim)
# --------------------------------------------------------------------------
def gray_group_fno2d(params, x, codes, *, output_dim, n_env, modes1, modes2, width):
    B = x.shape[0]
    H, W = x.shape[-2], x.shape[-1]
    E, D = n_env, output_dim
    N = B * E
    P = N * H * W

    # (B, E*D, H, W) -> (N, D, H, W) -> channel-first (D, N, H, W); only the small
    # D-channel tensors are transposed, width-channel activations never are.
    x = x.reshape(N, D, H, W)
    x = jnp.transpose(x, (1, 0, 2, 3))

    # NOTE: inter-layer activations stay f32 because jnp.fft.rfft2 needs an f32
    # input; storing them bf16 would force an extra (width,P) cast pass per layer
    # and net-increase HBM traffic.  Only the final (FFT-free) activation is bf16.
    xf = fc0_conv(x, params['fc0_w'], params['fc0_b'], H, W)    # (width, P) f32

    for i in range(4):
        x4 = xf.astype(jnp.float32).reshape(width, N, H, W)
        x1 = group_spectral_conv2d(x4, codes, params[f'conv{i}'], B, E, modes1, modes2)
        # TODO(synk): GroupActivation source not provided; 'swish' assumed to be
        # elementwise SiLU (group-independent for an elementwise nonlinearity).
        xf = pointwise_conv(
            xf, params[f'w{i}_w'], params[f'w{i}_b'],
            add=x1.reshape(width, P), act=(i < 3),
            out_dtype=(jnp.bfloat16 if i == 3 else jnp.float32),
            donate=True)

    out = fc12_conv(xf, params['fc1_s'], params['fc1_b'],
                    params['fc2_w'], params['fc2_b'])           # (D, P) f32

    out = out.reshape(D, N, H, W)
    out = jnp.transpose(out, (1, 0, 2, 3)).reshape(B, E * D, H, W)
    return out


# --------------------------------------------------------------------------
# Deterministic parameter init (mirrors the module's __init__ shapes).
# --------------------------------------------------------------------------
def init_params(key, input_dim, output_dim, code_dim, n_env, modes1, modes2, width):
    keys = iter(jax.random.split(key, 40))
    scale = 1.0 / (width * width)

    def rnd(shape, s=1.0):
        return s * jax.random.uniform(next(keys), shape, dtype=jnp.float32)

    p = {}
    p['fc0_w'] = rnd((width, input_dim + 2), 0.3)
    p['fc0_b'] = rnd((width,), 0.1)
    for i in range(4):
        p[f'conv{i}'] = {
            'com_weights1': rnd((width, width, modes1, modes2, 2), scale),
            'com_weights2': rnd((width, width, modes1, modes2, 2), scale),
            'code_weights1': rnd((code_dim * width, width, modes1, modes2, 2), scale),
            'code_weights2': rnd((code_dim * width, width, modes1, modes2, 2), scale),
            'filter_weights1': -3.0 * jnp.ones((modes1, modes2), jnp.float32),
            'filter_weights2': -3.0 * jnp.ones((modes1, modes2), jnp.float32),
        }
        p[f'w{i}_w'] = rnd((width, width), 0.3)
        p[f'w{i}_b'] = rnd((width,), 0.1)

    # fc1: Conv2d(width, K*width, 1, groups=width), K = output_dim // 2 -> one
    # scalar weight per output channel (output channel j reads input channel j//K).
    K = output_dim // 2
    p['fc1_s'] = rnd((K * width,), 0.3)
    p['fc1_b'] = rnd((K * width,), 0.1)
    p['fc2_w'] = rnd((output_dim, K * width), 0.3)
    p['fc2_b'] = rnd((output_dim,), 0.1)
    return p


if __name__ == "__main__":
    B, n_env, output_dim, code_dim = 2, 2, 4, 3   # input_dim == output_dim (state_dim)
    width, modes1, modes2 = 8, 4, 4
    H = W = 16

    key = jax.random.PRNGKey(0)
    kx, kc, kp = jax.random.split(key, 3)
    x = jax.random.normal(kx, (B, n_env * output_dim, H, W), dtype=jnp.float32)
    codes = jax.random.normal(kc, (n_env, code_dim), dtype=jnp.float32)
    params = init_params(kp, output_dim, output_dim, code_dim, n_env,
                         modes1, modes2, width)

    fwd = jax.jit(functools.partial(gray_group_fno2d, output_dim=output_dim,
                                    n_env=n_env, modes1=modes1, modes2=modes2,
                                    width=width))
    out = fwd(params, x, codes)
    jax.block_until_ready(out)
    assert out.shape == (B, n_env * output_dim, H, W)
    assert out.dtype == jnp.float32
    print("KERNEL_OK")
</pallas_src>

<mosaic_0001>
module attributes {stable_mosaic.version = 11 : i64} {
  func.func @kernel(%arg0: i32, %arg1: memref<4x256xf32, #tpu.memory_space<vmem>>, %arg2: memref<8x4xf32, #tpu.memory_space<vmem>>, %arg3: memref<8x256xf32, #tpu.memory_space<vmem>>, %arg4: memref<8x256xf32, #tpu.memory_space<vmem>>) attributes {dimension_semantics = [#tpu.dimension_semantics<parallel>], iteration_bounds = array<i64: 4>, scalar_prefetch = 0 : i64, scratch_operands = 0 : i64, tpu.core_type = #tpu.core_type<tc>, window_params = [{transform_indices = @transform_0, window_bounds = array<i64: 4, 256>}, {pipeline_mode = #tpu.pipeline_mode<synchronous>, transform_indices = @transform_1, window_bounds = array<i64: 8, 4>}, {pipeline_mode = #tpu.pipeline_mode<synchronous>, transform_indices = @transform_2, window_bounds = array<i64: 8, 256>}, {transform_indices = @transform_3, window_bounds = array<i64: 8, 256>}]} {
    %c0 = arith.constant 0 : index
    %c0_0 = arith.constant 0 : index
    %0 = vector.load %arg1[%c0, %c0_0] : memref<4x256xf32, #tpu.memory_space<vmem>>, vector<4x256xf32>
    %c0_1 = arith.constant 0 : index
    %c0_2 = arith.constant 0 : index
    %1 = vector.load %arg2[%c0_1, %c0_2] : memref<8x4xf32, #tpu.memory_space<vmem>>, vector<8x4xf32>
    %cst = arith.constant dense<0.000000e+00> : vector<8x256xf32>
    %2 = tpu.matmul %1, %0, %cst {dimension_numbers = #tpu.dot_dimension_numbers<[1], [0], [0], [1], [0, 0, 1, 1], [], []>} : vector<8x4xf32>, vector<4x256xf32>, vector<8x256xf32> -> vector<8x256xf32>
    %c0_3 = arith.constant 0 : index
    %c0_4 = arith.constant 0 : index
    %3 = vector.load %arg3[%c0_3, %c0_4] : memref<8x256xf32, #tpu.memory_space<vmem>>, vector<8x256xf32>
    %4 = arith.addf %2, %3 : vector<8x256xf32>
    %c0_5 = arith.constant 0 : index
    %c0_6 = arith.constant 0 : index
    %5 = vector.load %arg4[%c0_5, %c0_6] : memref<8x256xf32, #tpu.memory_space<vmem>>, vector<8x256xf32>
    tpu.vector_store %arg4[%c0_5, %c0_6], %4 {strides = array<i32>} : memref<8x256xf32, #tpu.memory_space<vmem>>, vector<8x256xf32>,
    return
  }
  func.func @transform_0(%arg0: i32) -> (i32, i32) {
    %c0_i32 = arith.constant 0 : i32
    %c0_i32_0 = arith.constant 0 : i32
    return %c0_i32, %arg0 : i32, i32
  }
  func.func @transform_1(%arg0: i32) -> (i32, i32) {
    %c0_i32 = arith.constant 0 : i32
    %c0_i32_0 = arith.constant 0 : i32
    %c0_i32_1 = arith.constant 0 : i32
    return %c0_i32, %c0_i32_0 : i32, i32
  }
  func.func @transform_2(%arg0: i32) -> (i32, i32) {
    %c0_i32 = arith.constant 0 : i32
    %c0_i32_0 = arith.constant 0 : i32
    %c0_i32_1 = arith.constant 0 : i32
    return %c0_i32, %c0_i32_0 : i32, i32
  }
  func.func @transform_3(%arg0: i32) -> (i32, i32) {
    %c0_i32 = arith.constant 0 : i32
    %c0_i32_0 = arith.constant 0 : i32
    return %c0_i32, %arg0 : i32, i32
  }
}

module attributes {stable_mosaic.version = 11 : i64} {
  func.func @_spectral_mix_kernel(%arg0: i32, %arg1: i32, %arg2: i32, %arg3: memref<1x1x1x8x16xf32, #tpu.memory_space<vmem>>, %arg4: memref<1x1x1x8x16xf32, #tpu.memory_space<vmem>>, %arg5: memref<1x1x8x128xf32, #tpu.memory_space<vmem>>, %arg6: memref<1x1x8x128xf32, #tpu.memory_space<vmem>>, %arg7: memref<16x128xf32, #tpu.memory_space<vmem>>, %arg8: memref<1x1x1x1x128xf32, #tpu.memory_space<vmem>>, %arg9: memref<1x1x1x1x128xf32, #tpu.memory_space<vmem>>) attributes {dimension_semantics = [#tpu.dimension_semantics<parallel>, #tpu.dimension_semantics<parallel>, #tpu.dimension_semantics<arbitrary>], iteration_bounds = array<i64: 2, 2, 2>, scalar_prefetch = 0 : i64, scratch_operands = 0 : i64, tpu.core_type = #tpu.core_type<tc>, window_params = [{transform_indices = @transform_0, window_bounds = array<i64: 1, 1, 1, 8, 16>}, {transform_indices = @transform_1, window_bounds = array<i64: 1, 1, 1, 8, 16>}, {transform_indices = @transform_2, window_bounds = array<i64: 1, 1, 8, 128>}, {transform_indices = @transform_3, window_bounds = array<i64: 1, 1, 8, 128>}, {pipeline_mode = #tpu.pipeline_mode<synchronous>, transform_indices = @transform_4, window_bounds = array<i64: 16, 128>}, {transform_indices = @transform_5, window_bounds = array<i64: 1, 1, 1, 1, 128>}, {transform_indices = @transform_6, window_bounds = array<i64: 1, 1, 1, 1, 128>}]} {
    %c0 = arith.constant 0 : index
    %c0_0 = arith.constant 0 : index
    %0 = vector.load %arg7[%c0, %c0_0] : memref<16x128xf32, #tpu.memory_space<vmem>>, vector<16x128xf32>
    %c0_1 = arith.constant 0 : index
    %c0_2 = arith.constant 0 : index
    %c0_3 = arith.constant 0 : index
    %c0_4 = arith.constant 0 : index
    %c0_5 = arith.constant 0 : index
    %1 = vector.load %arg3[%c0_1, %c0_2, %c0_3, %c0_4, %c0_5] : memref<1x1x1x8x16xf32, #tpu.memory_space<vmem>>, vector<1x1x1x8x16xf32>
    %2 = vector.shape_cast %1 : vector<1x1x1x8x16xf32> to vector<8x16xf32>
    %cst = arith.constant dense<0.000000e+00> : vector<8x128xf32>
    %3 = tpu.matmul %2, %0, %cst {dimension_numbers = #tpu.dot_dimension_numbers<[1], [0], [0], [1], [0, 0, 1, 1], [], []>} : vector<8x16xf32>, vector<16x128xf32>, vector<8x128xf32> -> vector<8x128xf32>
    %c0_6 = arith.constant 0 : index
    %c0_7 = arith.constant 0 : index
    %c0_8 = arith.constant 0 : index
    %c0_9 = arith.constant 0 : index
    %c0_10 = arith.constant 0 : index
    %4 = vector.load %arg4[%c0_6, %c0_7, %c0_8, %c0_9, %c0_10] : memref<1x1x1x8x16xf32, #tpu.memory_space<vmem>>, vector<1x1x1x8x16xf32>
    %5 = vector.shape_cast %4 : vector<1x1x1x8x16xf32> to vector<8x16xf32>
    %cst_11 = arith.constant dense<0.000000e+00> : vector<8x128xf32>
    %6 = tpu.matmul %5, %0, %cst_11 {dimension_numbers = #tpu.dot_dimension_numbers<[1], [0], [0], [1], [0, 0, 1, 1], [], []>} : vector<8x16xf32>, vector<16x128xf32>, vector<8x128xf32> -> vector<8x128xf32>
    %c0_12 = arith.constant 0 : index
    %c0_13 = arith.constant 0 : index
    %c0_14 = arith.constant 0 : index
    %c0_15 = arith.constant 0 : index
    %7 = vector.load %arg5[%c0_12, %c0_13, %c0_14, %c0_15] : memref<1x1x8x128xf32, #tpu.memory_space<vmem>>, vector<1x1x8x128xf32>
    %8 = vector.shape_cast %7 : vector<1x1x8x128xf32> to vector<8x128xf32>
    %c0_16 = arith.constant 0 : index
    %c0_17 = arith.constant 0 : index
    %c0_18 = arith.constant 0 : index
    %c0_19 = arith.constant 0 : index
    %9 = vector.load %arg6[%c0_16, %c0_17, %c0_18, %c0_19] : memref<1x1x8x128xf32, #tpu.memory_space<vmem>>, vector<1x1x8x128xf32>
    %10 = vector.shape_cast %9 : vector<1x1x8x128xf32> to vector<8x128xf32>
    %11 = arith.mulf %3, %8 : vector<8x128xf32>
    %12 = arith.mulf %6, %10 : vector<8x128xf32>
    %13 = arith.subf %11, %12 : vector<8x128xf32>
    %cst_20 = arith.constant dense<0.000000e+00> : vector<128xf32>
    %14 = vector.multi_reduction <add>, %13, %cst_20 [0] : vector<8x128xf32> to vector<128xf32>
    %15 = vector.shape_cast %14 : vector<128xf32> to vector<1x128xf32>
    %c0_21 = arith.constant 0 : index
    %c0_22 = arith.constant 0 : index
    %c0_23 = arith.constant 0 : index
    %c0_24 = arith.constant 0 : index
    %c0_25 = arith.constant 0 : index
    %16 = vector.load %arg8[%c0_21, %c0_22, %c0_23, %c0_24, %c0_25] : memref<1x1x1x1x128xf32, #tpu.memory_space<vmem>>, vector<1x1x1x1x128xf32>
    %17 = vector.shape_cast %16 : vector<1x1x1x1x128xf32> to vector<1x128xf32>
    %18 = vector.shape_cast %15 : vector<1x128xf32> to vector<1x1x1x1x128xf32>
    tpu.vector_store %arg8[%c0_21, %c0_22, %c0_23, %c0_24, %c0_25], %18 {strides = array<i32>} : memref<1x1x1x1x128xf32, #tpu.memory_space<vmem>>, vector<1x1x1x1x128xf32>,
    %19 = arith.mulf %3, %10 : vector<8x128xf32>
    %20 = arith.mulf %6, %8 : vector<8x128xf32>
    %21 = arith.addf %19, %20 : vector<8x128xf32>
    %cst_26 = arith.constant dense<0.000000e+00> : vector<128xf32>
    %22 = vector.multi_reduction <add>, %21, %cst_26 [0] : vector<8x128xf32> to vector<128xf32>
    %23 = vector.shape_cast %22 : vector<128xf32> to vector<1x128xf32>
    %c0_27 = arith.constant 0 : index
    %c0_28 = arith.constant 0 : index
    %c0_29 = arith.constant 0 : index
    %c0_30 = arith.constant 0 : index
    %c0_31 = arith.constant 0 : index
    %24 = vector.load %arg9[%c0_27, %c0_28, %c0_29, %c0_30, %c0_31] : memref<1x1x1x1x128xf32, #tpu.memory_space<vmem>>, vector<1x1x1x1x128xf32>
    %25 = vector.shape_cast %24 : vector<1x1x1x1x128xf32> to vector<1x128xf32>
    %26 = vector.shape_cast %23 : vector<1x128xf32> to vector<1x1x1x1x128xf32>
    tpu.vector_store %arg9[%c0_27, %c0_28, %c0_29, %c0_30, %c0_31], %26 {strides = array<i32>} : memref<1x1x1x1x128xf32, #tpu.memory_space<vmem>>, vector<1x1x1x1x128xf32>,
    return
  }
  func.func @transform_0(%arg0: i32, %arg1: i32, %arg2: i32) -> (i32, i32, i32, i32, i32) {
    %c0_i32 = arith.constant 0 : i32
    %c0_i32_0 = arith.constant 0 : i32
    %c0_i32_1 = arith.constant 0 : i32
    return %arg0, %arg1, %arg2, %c0_i32, %c0_i32_0 : i32, i32, i32, i32, i32
  }
  func.func @transform_1(%arg0: i32, %arg1: i32, %arg2: i32) -> (i32, i32, i32, i32, i32) {
    %c0_i32 = arith.constant 0 : i32
    %c0_i32_0 = arith.constant 0 : i32
    %c0_i32_1 = arith.constant 0 : i32
    return %arg0, %arg1, %arg2, %c0_i32, %c0_i32_0 : i32, i32, i32, i32, i32
  }
  func.func @transform_2(%arg0: i32, %arg1: i32, %arg2: i32) -> (i32, i32, i32, i32) {
    %c0_i32 = arith.constant 0 : i32
    %c0_i32_0 = arith.constant 0 : i32
    %c0_i32_1 = arith.constant 0 : i32
    return %arg0, %arg1, %c0_i32, %c0_i32_0 : i32, i32, i32, i32
  }
  func.func @transform_3(%arg0: i32, %arg1: i32, %arg2: i32) -> (i32, i32, i32, i32) {
    %c0_i32 = arith.constant 0 : i32
    %c0_i32_0 = arith.constant 0 : i32
    %c0_i32_1 = arith.constant 0 : i32
    return %arg0, %arg1, %c0_i32, %c0_i32_0 : i32, i32, i32, i32
  }
  func.func @transform_4(%arg0: i32, %arg1: i32, %arg2: i32) -> (i32, i32) {
    %c0_i32 = arith.constant 0 : i32
    %c0_i32_0 = arith.constant 0 : i32
    %c0_i32_1 = arith.constant 0 : i32
    return %c0_i32, %c0_i32_0 : i32, i32
  }
  func.func @transform_5(%arg0: i32, %arg1: i32, %arg2: i32) -> (i32, i32, i32, i32, i32) {
    %c0_i32 = arith.constant 0 : i32
    %c0_i32_0 = arith.constant 0 : i32
    %c0_i32_1 = arith.constant 0 : i32
    return %arg0, %arg1, %arg2, %c0_i32, %c0_i32_0 : i32, i32, i32, i32, i32
  }
  func.func @transform_6(%arg0: i32, %arg1: i32, %arg2: i32) -> (i32, i32, i32, i32, i32) {
    %c0_i32 = arith.constant 0 : i32
    %c0_i32_0 = arith.constant 0 : i32
    %c0_i32_1 = arith.constant 0 : i32
    return %arg0, %arg1, %arg2, %c0_i32, %c0_i32_0 : i32, i32, i32, i32, i32
  }
}

module attributes {stable_mosaic.version = 11 : i64} {
  func.func @kernel(%arg0: i32, %arg1: memref<8x256xf32, #tpu.memory_space<vmem>>, %arg2: memref<8x8xf32, #tpu.memory_space<vmem>>, %arg3: memref<8x1xf32, #tpu.memory_space<vmem>>, %arg4: memref<8x256xf32, #tpu.memory_space<vmem>>, %arg5: memref<8x256xf32, #tpu.memory_space<vmem>>) attributes {dimension_semantics = [#tpu.dimension_semantics<parallel>], iteration_bounds = array<i64: 4>, scalar_prefetch = 0 : i64, scratch_operands = 0 : i64, tpu.core_type = #tpu.core_type<tc>, window_params = [{transform_indices = @transform_0, window_bounds = array<i64: 8, 256>}, {pipeline_mode = #tpu.pipeline_mode<synchronous>, transform_indices = @transform_1, window_bounds = array<i64: 8, 8>}, {pipeline_mode = #tpu.pipeline_mode<synchronous>, transform_indices = @transform_2, window_bounds = array<i64: 8, 1>}, {transform_indices = @transform_3, window_bounds = array<i64: 8, 256>}, {transform_indices = @transform_4, window_bounds = array<i64: 8, 256>}]} {
    %c0 = arith.constant 0 : index
    %c0_0 = arith.constant 0 : index
    %0 = vector.load %arg1[%c0, %c0_0] : memref<8x256xf32, #tpu.memory_space<vmem>>, vector<8x256xf32>
    %c0_1 = arith.constant 0 : index
    %c0_2 = arith.constant 0 : index
    %1 = vector.load %arg2[%c0_1, %c0_2] : memref<8x8xf32, #tpu.memory_space<vmem>>, vector<8x8xf32>
    %cst = arith.constant dense<0.000000e+00> : vector<8x256xf32>
    %2 = tpu.matmul %1, %0, %cst {dimension_numbers = #tpu.dot_dimension_numbers<[1], [0], [0], [1], [0, 0, 1, 1], [], []>} : vector<8x8xf32>, vector<8x256xf32>, vector<8x256xf32> -> vector<8x256xf32>
    %c0_3 = arith.constant 0 : index
    %c0_4 = arith.constant 0 : index
    %3 = vector.load %arg3[%c0_3, %c0_4] : memref<8x1xf32, #tpu.memory_space<vmem>>, vector<8x1xf32>
    %4 = vector.broadcast %3 : vector<8x1xf32> to vector<8x256xf32>
    %5 = arith.addf %2, %4 : vector<8x256xf32>
    %c0_5 = arith.constant 0 : index
    %c0_6 = arith.constant 0 : index
    %6 = vector.load %arg4[%c0_5, %c0_6] : memref<8x256xf32, #tpu.memory_space<vmem>>, vector<8x256xf32>
    %7 = arith.addf %5, %6 : vector<8x256xf32>
    %8 = arith.negf %7 : vector<8x256xf32>
    %9 = math.exp %8 : vector<8x256xf32>
    %cst_7 = arith.constant 1.000000e+00 : f32
    %10 = vector.broadcast %cst_7 : f32 to vector<8x256xf32>
    %11 = arith.addf %10, %9 : vector<8x256xf32>
    %12 = arith.divf %10, %11 : vector<8x256xf32>
    %13 = arith.mulf %7, %12 : vector<8x256xf32>
    %c0_8 = arith.constant 0 : index
    %c0_9 = arith.constant 0 : index
    %14 = vector.load %arg5[%c0_8, %c0_9] : memref<8x256xf32, #tpu.memory_space<vmem>>, vector<8x256xf32>
    tpu.vector_store %arg5[%c0_8, %c0_9], %13 {strides = array<i32>} : memref<8x256xf32, #tpu.memory_space<vmem>>, vector<8x256xf32>,
    return
  }
  func.func @transform_0(%arg0: i32) -> (i32, i32) {
    %c0_i32 = arith.constant 0 : i32
    %c0_i32_0 = arith.constant 0 : i32
    return %c0_i32, %arg0 : i32, i32
  }
  func.func @transform_1(%arg0: i32) -> (i32, i32) {
    %c0_i32 = arith.constant 0 : i32
    %c0_i32_0 = arith.constant 0 : i32
    %c0_i32_1 = arith.constant 0 : i32
    return %c0_i32, %c0_i32_0 : i32, i32
  }
  func.func @transform_2(%arg0: i32) -> (i32, i32) {
    %c0_i32 = arith.constant 0 : i32
    %c0_i32_0 = arith.constant 0 : i32
    %c0_i32_1 = arith.constant 0 : i32
    return %c0_i32, %c0_i32_0 : i32, i32
  }
  func.func @transform_3(%arg0: i32) -> (i32, i32) {
    %c0_i32 = arith.constant 0 : i32
    %c0_i32_0 = arith.constant 0 : i32
    return %c0_i32, %arg0 : i32, i32
  }
  func.func @transform_4(%arg0: i32) -> (i32, i32) {
    %c0_i32 = arith.constant 0 : i32
    %c0_i32_0 = arith.constant 0 : i32
    return %c0_i32, %arg0 : i32, i32
  }
}

module attributes {stable_mosaic.version = 11 : i64} {
  func.func @kernel(%arg0: i32, %arg1: memref<8x256xf32, #tpu.memory_space<vmem>>, %arg2: memref<8x8xf32, #tpu.memory_space<vmem>>, %arg3: memref<8x1xf32, #tpu.memory_space<vmem>>, %arg4: memref<8x256xf32, #tpu.memory_space<vmem>>, %arg5: memref<8x256xbf16, #tpu.memory_space<vmem>>) attributes {dimension_semantics = [#tpu.dimension_semantics<parallel>], iteration_bounds = array<i64: 4>, scalar_prefetch = 0 : i64, scratch_operands = 0 : i64, tpu.core_type = #tpu.core_type<tc>, window_params = [{transform_indices = @transform_0, window_bounds = array<i64: 8, 256>}, {pipeline_mode = #tpu.pipeline_mode<synchronous>, transform_indices = @transform_1, window_bounds = array<i64: 8, 8>}, {pipeline_mode = #tpu.pipeline_mode<synchronous>, transform_indices = @transform_2, window_bounds = array<i64: 8, 1>}, {transform_indices = @transform_3, window_bounds = array<i64: 8, 256>}, {transform_indices = @transform_4, window_bounds = array<i64: 8, 256>}]} {
    %c0 = arith.constant 0 : index
    %c0_0 = arith.constant 0 : index
    %0 = vector.load %arg1[%c0, %c0_0] : memref<8x256xf32, #tpu.memory_space<vmem>>, vector<8x256xf32>
    %c0_1 = arith.constant 0 : index
    %c0_2 = arith.constant 0 : index
    %1 = vector.load %arg2[%c0_1, %c0_2] : memref<8x8xf32, #tpu.memory_space<vmem>>, vector<8x8xf32>
    %cst = arith.constant dense<0.000000e+00> : vector<8x256xf32>
    %2 = tpu.matmul %1, %0, %cst {dimension_numbers = #tpu.dot_dimension_numbers<[1], [0], [0], [1], [0, 0, 1, 1], [], []>} : vector<8x8xf32>, vector<8x256xf32>, vector<8x256xf32> -> vector<8x256xf32>
    %c0_3 = arith.constant 0 : index
    %c0_4 = arith.constant 0 : index
    %3 = vector.load %arg3[%c0_3, %c0_4] : memref<8x1xf32, #tpu.memory_space<vmem>>, vector<8x1xf32>
    %4 = vector.broadcast %3 : vector<8x1xf32> to vector<8x256xf32>
    %5 = arith.addf %2, %4 : vector<8x256xf32>
    %c0_5 = arith.constant 0 : index
    %c0_6 = arith.constant 0 : index
    %6 = vector.load %arg4[%c0_5, %c0_6] : memref<8x256xf32, #tpu.memory_space<vmem>>, vector<8x256xf32>
    %7 = arith.addf %5, %6 : vector<8x256xf32>
    %8 = arith.truncf %7 : vector<8x256xf32> to vector<8x256xbf16>
    %c0_7 = arith.constant 0 : index
    %c0_8 = arith.constant 0 : index
    %9 = vector.load %arg5[%c0_7, %c0_8] : memref<8x256xbf16, #tpu.memory_space<vmem>>, vector<8x256xbf16>
    tpu.vector_store %arg5[%c0_7, %c0_8], %8 {strides = array<i32>} : memref<8x256xbf16, #tpu.memory_space<vmem>>, vector<8x256xbf16>,
    return
  }
  func.func @transform_0(%arg0: i32) -> (i32, i32) {
    %c0_i32 = arith.constant 0 : i32
    %c0_i32_0 = arith.constant 0 : i32
    return %c0_i32, %arg0 : i32, i32
  }
  func.func @transform_1(%arg0: i32) -> (i32, i32) {
    %c0_i32 = arith.constant 0 : i32
    %c0_i32_0 = arith.constant 0 : i32
    %c0_i32_1 = arith.constant 0 : i32
    return %c0_i32, %c0_i32_0 : i32, i32
  }
  func.func @transform_2(%arg0: i32) -> (i32, i32) {
    %c0_i32 = arith.constant 0 : i32
    %c0_i32_0 = arith.constant 0 : i32
    %c0_i32_1 = arith.constant 0 : i32
    return %c0_i32, %c0_i32_0 : i32, i32
  }
  func.func @transform_3(%arg0: i32) -> (i32, i32) {
    %c0_i32 = arith.constant 0 : i32
    %c0_i32_0 = arith.constant 0 : i32
    return %c0_i32, %arg0 : i32, i32
  }
  func.func @transform_4(%arg0: i32) -> (i32, i32) {
    %c0_i32 = arith.constant 0 : i32
    %c0_i32_0 = arith.constant 0 : i32
    return %c0_i32, %arg0 : i32, i32
  }
}

module attributes {stable_mosaic.version = 11 : i64} {
  func.func @_fc12_kernel(%arg0: i32, %arg1: memref<8x256xbf16, #tpu.memory_space<vmem>>, %arg2: memref<16x8xf32, #tpu.memory_space<vmem>>, %arg3: memref<16x1xf32, #tpu.memory_space<vmem>>, %arg4: memref<4x16xf32, #tpu.memory_space<vmem>>, %arg5: memref<4x1xf32, #tpu.memory_space<vmem>>, %arg6: memref<4x256xf32, #tpu.memory_space<vmem>>) attributes {dimension_semantics = [#tpu.dimension_semantics<parallel>], iteration_bounds = array<i64: 4>, scalar_prefetch = 0 : i64, scratch_operands = 0 : i64, tpu.core_type = #tpu.core_type<tc>, window_params = [{transform_indices = @transform_0, window_bounds = array<i64: 8, 256>}, {pipeline_mode = #tpu.pipeline_mode<synchronous>, transform_indices = @transform_1, window_bounds = array<i64: 16, 8>}, {pipeline_mode = #tpu.pipeline_mode<synchronous>, transform_indices = @transform_2, window_bounds = array<i64: 16, 1>}, {pipeline_mode = #tpu.pipeline_mode<synchronous>, transform_indices = @transform_3, window_bounds = array<i64: 4, 16>}, {pipeline_mode = #tpu.pipeline_mode<synchronous>, transform_indices = @transform_4, window_bounds = array<i64: 4, 1>}, {transform_indices = @transform_5, window_bounds = array<i64: 4, 256>}]} {
    %c0 = arith.constant 0 : index
    %c0_0 = arith.constant 0 : index
    %0 = vector.load %arg1[%c0, %c0_0] : memref<8x256xbf16, #tpu.memory_space<vmem>>, vector<8x256xbf16>
    %1 = arith.extf %0 : vector<8x256xbf16> to vector<8x256xf32>
    %c0_1 = arith.constant 0 : index
    %c0_2 = arith.constant 0 : index
    %2 = vector.load %arg2[%c0_1, %c0_2] : memref<16x8xf32, #tpu.memory_space<vmem>>, vector<16x8xf32>
    %cst = arith.constant dense<0.000000e+00> : vector<16x256xf32>
    %3 = tpu.matmul %2, %1, %cst {dimension_numbers = #tpu.dot_dimension_numbers<[1], [0], [0], [1], [0, 0, 1, 1], [], []>} : vector<16x8xf32>, vector<8x256xf32>, vector<16x256xf32> -> vector<16x256xf32>
    %c0_3 = arith.constant 0 : index
    %c0_4 = arith.constant 0 : index
    %4 = vector.load %arg3[%c0_3, %c0_4] : memref<16x1xf32, #tpu.memory_space<vmem>>, vector<16x1xf32>
    %5 = vector.broadcast %4 : vector<16x1xf32> to vector<16x256xf32>
    %6 = arith.addf %3, %5 : vector<16x256xf32>
    %7 = arith.negf %6 : vector<16x256xf32>
    %8 = math.exp %7 : vector<16x256xf32>
    %cst_5 = arith.constant 1.000000e+00 : f32
    %9 = vector.broadcast %cst_5 : f32 to vector<16x256xf32>
    %10 = arith.addf %9, %8 : vector<16x256xf32>
    %11 = arith.divf %9, %10 : vector<16x256xf32>
    %12 = arith.mulf %6, %11 : vector<16x256xf32>
    %c0_6 = arith.constant 0 : index
    %c0_7 = arith.constant 0 : index
    %13 = vector.load %arg4[%c0_6, %c0_7] : memref<4x16xf32, #tpu.memory_space<vmem>>, vector<4x16xf32>
    %cst_8 = arith.constant dense<0.000000e+00> : vector<4x256xf32>
    %14 = tpu.matmul %13, %12, %cst_8 {dimension_numbers = #tpu.dot_dimension_numbers<[1], [0], [0], [1], [0, 0, 1, 1], [], []>} : vector<4x16xf32>, vector<16x256xf32>, vector<4x256xf32> -> vector<4x256xf32>
    %c0_9 = arith.constant 0 : index
    %c0_10 = arith.constant 0 : index
    %15 = vector.load %arg5[%c0_9, %c0_10] : memref<4x1xf32, #tpu.memory_space<vmem>>, vector<4x1xf32>
    %16 = vector.broadcast %15 : vector<4x1xf32> to vector<4x256xf32>
    %17 = arith.addf %14, %16 : vector<4x256xf32>
    %c0_11 = arith.constant 0 : index
    %c0_12 = arith.constant 0 : index
    %18 = vector.load %arg6[%c0_11, %c0_12] : memref<4x256xf32, #tpu.memory_space<vmem>>, vector<4x256xf32>
    tpu.vector_store %arg6[%c0_11, %c0_12], %17 {strides = array<i32>} : memref<4x256xf32, #tpu.memory_space<vmem>>, vector<4x256xf32>,
    return
  }
  func.func @transform_0(%arg0: i32) -> (i32, i32) {
    %c0_i32 = arith.constant 0 : i32
    %c0_i32_0 = arith.constant 0 : i32
    return %c0_i32, %arg0 : i32, i32
  }
  func.func @transform_1(%arg0: i32) -> (i32, i32) {
    %c0_i32 = arith.constant 0 : i32
    %c0_i32_0 = arith.constant 0 : i32
    %c0_i32_1 = arith.constant 0 : i32
    return %c0_i32, %c0_i32_0 : i32, i32
  }
  func.func @transform_2(%arg0: i32) -> (i32, i32) {
    %c0_i32 = arith.constant 0 : i32
    %c0_i32_0 = arith.constant 0 : i32
    %c0_i32_1 = arith.constant 0 : i32
    return %c0_i32, %c0_i32_0 : i32, i32
  }
  func.func @transform_3(%arg0: i32) -> (i32, i32) {
    %c0_i32 = arith.constant 0 : i32
    %c0_i32_0 = arith.constant 0 : i32
    %c0_i32_1 = arith.constant 0 : i32
    return %c0_i32, %c0_i32_0 : i32, i32
  }
  func.func @transform_4(%arg0: i32) -> (i32, i32) {
    %c0_i32 = arith.constant 0 : i32
    %c0_i32_0 = arith.constant 0 : i32
    %c0_i32_1 = arith.constant 0 : i32
    return %c0_i32, %c0_i32_0 : i32, i32
  }
  func.func @transform_5(%arg0: i32) -> (i32, i32) {
    %c0_i32 = arith.constant 0 : i32
    %c0_i32_0 = arith.constant 0 : i32
    return %c0_i32, %arg0 : i32, i32
  }
}

</mosaic_0001>

<llo_original>
// kernel: gray_group_fno2d.10
$region0: #{gray_group_fno2d.10}
  #allocation0 [shape = 'u32[]', space=smem, size = 0x4, offset = 0x4, fixed_abs, tag = 'smem constant byte address 0x4 - core index']
  #allocation1 [shape = 'u32[144,128]{1,0:T(1,128)}', space=vmem, size = 0x12000, scoped, tag = 'internal scratch']
  %s0 = inlined_call_operand.vmem [shape: f32[4,1024], index: 0, kind: input, shape index: {}]
  %s1 = inlined_call_operand.vmem [shape: f32[8,4], index: 1, kind: input, shape index: {}]
  %s2 = inlined_call_operand.vmem [shape: f32[8,256], index: 2, kind: input, shape index: {}]
  %s3 = inlined_call_operand.vmem [shape: f32[8,1024], index: 3, kind: output, shape index: {}]
  %s4 = sld [smem:[#allocation0]]
  $region45: #{gray_group_fno2d.10} parent=0
    _
  %s6 = ssub.s32 1, %s4
  %s7 = scalar_select 0, %s6, %s4
  loop: start=0, step=1, limit=6
  $region2: #{gray_group_fno2d.10} parent=0 // loop_pre_header
    _
  $region3: #{gray_group_fno2d.10} parent=0 // loop_header
    %s9 = sphi 0, %s13
    %p10 = scmp.ge.s32.totalorder %s9, 6
    %s19 = sphi 0, %s21
    %s22 = sphi 0, %s19
    %s23 = sphi 0, %s22
    %s39 = sphi 0, %s23
    %s43 = sphi 0, %s43
    %s45 = sphi 0, %s43
    %s46 = sphi 0, %s45
    %s60 = sphi 0, %s46
    %s64 = sphi 0, %s64
    %s66 = sphi 0, %s64
    %s67 = sphi 0, %s66
    %s81 = sphi 0, %s67
    %s87 = sphi 0, %s89
    %s90 = sphi 0, %s87
    %s91 = sphi 0, %s90
    %s107 = sphi 0, %s91
  $region4: #{gray_group_fno2d.10} parent=0 // loop_header_branch
    %12 = sbr.rel (%p10) target = $region8
  $region5: #{gray_group_fno2d.10} parent=0 // loop_body
    %s14 = ssub.s32 %s9, 1
    %s15 = ssub.s32 %s9, 2
    %s16 = sadd.s32 %s9, 1
    %s17 = ssub.s32 %s9, %s16
    %p18 = scmp.eq.s32.totalorder %s17, 0
    %s20 = sadd.s32 %s19, 1
    %s21 = scalar_select %p18, %s19, %s20
    %p24 = pneg %p18
    %p25 = scmp.eq.s32.totalorder %s9, 3
    %p26 = por %p24, %p25
    %p27 = scmp.ne.s32.totalorder %s19, %s22
    %p28 = scmp.eq.s32.totalorder %s9, 0
    %p29 = por %p27, %p28
    %p30 = scmp.ne.s32.totalorder %s19, %s22
    %p31 = scmp.eq.s32.totalorder %s14, 3
    %p32 = por %p30, %p31
    %p33 = scmp.ne.s32.totalorder %s22, %s23
    %p34 = scmp.eq.s32.totalorder %s14, 0
    %p35 = por %p33, %p34
    %p36 = scmp.ne.s32.totalorder %s22, %s23
    %p37 = scmp.eq.s32.totalorder %s15, 3
    %p38 = por %p36, %p37
    %p40 = scmp.ne.s32.totalorder %s23, %s39
    %p41 = scmp.eq.s32.totalorder %s15, 0
    %p42 = por %p40, %p41
    %s44 = sadd.s32 %s43, 1
    %p47 = scmp.eq.s32.totalorder %s9, 3
    %p48 = scmp.ne.s32.totalorder %s43, %s45
    %p49 = scmp.eq.s32.totalorder %s9, 0
    %p50 = por %p48, %p49
    %p51 = scmp.ne.s32.totalorder %s43, %s45
    %p52 = scmp.eq.s32.totalorder %s14, 3
    %p53 = por %p51, %p52
    %p54 = scmp.ne.s32.totalorder %s45, %s46
    %p55 = scmp.eq.s32.totalorder %s14, 0
    %p56 = por %p54, %p55
    %p57 = scmp.ne.s32.totalorder %s45, %s46
    %p58 = scmp.eq.s32.totalorder %s15, 3
    %p59 = por %p57, %p58
    %p61 = scmp.ne.s32.totalorder %s46, %s60
    %p62 = scmp.eq.s32.totalorder %s15, 0
    %p63 = por %p61, %p62
    %s65 = sadd.s32 %s64, 1
    %p68 = scmp.eq.s32.totalorder %s9, 3
    %p69 = scmp.ne.s32.totalorder %s64, %s66
    %p70 = scmp.eq.s32.totalorder %s9, 0
    %p71 = por %p69, %p70
    %p72 = scmp.ne.s32.totalorder %s64, %s66
    %p73 = scmp.eq.s32.totalorder %s14, 3
    %p74 = por %p72, %p73
    %p75 = scmp.ne.s32.totalorder %s66, %s67
    %p76 = scmp.eq.s32.totalorder %s14, 0
    %p77 = por %p75, %p76
    %p78 = scmp.ne.s32.totalorder %s66, %s67
    %p79 = scmp.eq.s32.totalorder %s15, 3
    %p80 = por %p78, %p79
    %p82 = scmp.ne.s32.totalorder %s67, %s81
    %p83 = scmp.eq.s32.totalorder %s15, 0
    %p84 = por %p82, %p83
    %s85 = ssub.s32 %s9, %s16
    %p86 = scmp.eq.s32.totalorder %s85, 0
    %s88 = sadd.s32 %s87, 1
    %s89 = scalar_select %p86, %s87, %s88
    %p92 = pneg %p86
    %p93 = scmp.eq.s32.totalorder %s9, 3
    %p94 = por %p92, %p93
    %p95 = scmp.ne.s32.totalorder %s87, %s90
    %p96 = scmp.eq.s32.totalorder %s9, 0
    %p97 = por %p95, %p96
    %p98 = scmp.ne.s32.totalorder %s87, %s90
    %p99 = scmp.eq.s32.totalorder %s14, 3
    %p100 = por %p98, %p99
    %p101 = scmp.ne.s32.totalorder %s90, %s91
    %p102 = scmp.eq.s32.totalorder %s14, 0
    %p103 = por %p101, %p102
    %p104 = scmp.ne.s32.totalorder %s90, %s91
    %p105 = scmp.eq.s32.totalorder %s15, 3
    %p106 = por %p104, %p105
    %p108 = scmp.ne.s32.totalorder %s91, %s107
    %p109 = scmp.eq.s32.totalorder %s15, 0
    %p110 = por %p108, %p109
    %p111 = scmp.le.s32.totalorder 1, %s9
    %p112 = scmp.lt.s32.totalorder %s9, 5
    %p113 = pnand %p111, %p112
    %p114 = pneg %p113
    // Predicated region
    $region9: #{gray_group_fno2d.10} parent=5 // pred_check
      _
    $region10: #{gray_group_fno2d.10} parent=5 // pred_check_branch
      %116 = sbr.rel (%p113) target = $region12
    $region11: #{gray_group_fno2d.10} parent=5 // pred_region
      %s117 = ssub.s32 %s9, 1
      // Predicated region
      $region13: #{gray_group_fno2d.10} parent=11 // pred_check
        %p118 = pneg %p56
      $region14: #{gray_group_fno2d.10} parent=11 // pred_check_branch
        %120 = sbr.rel (%p118) target = $region16
      $region15: #{gray_group_fno2d.10} parent=11 // pred_region
        _
      $region16: #{gray_group_fno2d.10} parent=11 // pred_fallthru
        _
      // Predicated region
      $region17: #{gray_group_fno2d.10} parent=11 // pred_check
        %p121 = pneg %p77
      $region18: #{gray_group_fno2d.10} parent=11 // pred_check_branch
        %123 = sbr.rel (%p121) target = $region20
      $region19: #{gray_group_fno2d.10} parent=11 // pred_region
        _
      $region20: #{gray_group_fno2d.10} parent=11 // pred_fallthru
        _
    $region12: #{gray_group_fno2d.10} parent=5 // pred_fallthru
      _
    %p124 = scmp.lt.s32.totalorder %s9, 4
    // Predicated region
    $region21: #{gray_group_fno2d.10} parent=5 // pred_check
      %p125 = pneg %p124
    $region22: #{gray_group_fno2d.10} parent=5 // pred_check_branch
      %127 = sbr.rel (%p125) target = $region24
    $region23: #{gray_group_fno2d.10} parent=5 // pred_region
      // Predicated region
      $region25: #{gray_group_fno2d.10} parent=23 // pred_check
        %p128 = pneg %p29
      $region26: #{gray_group_fno2d.10} parent=23 // pred_check_branch
        %130 = sbr.rel (%p128) target = $region28
      $region27: #{gray_group_fno2d.10} parent=23 // pred_region
        %s131 = smul.u32 2, %s9
        %p132 = scmp.lt.s32.totalorder %s131, 7
        %s133 = scalar_select %p132, %s131, 7
        %s134 = smul.addr %s133, 4
        %s135 = scalar_lea.vmem %s0, %s134
        %s136 = smul.u32 2, %s9
      $region28: #{gray_group_fno2d.10} parent=23 // pred_fallthru
        _
    $region24: #{gray_group_fno2d.10} parent=5 // pred_fallthru
      _
    %p137 = scmp.le.s32.totalorder 1, %s9
    %p138 = scmp.lt.s32.totalorder %s9, 5
    %p139 = pnand %p137, %p138
    %p140 = pneg %p139
    // Predicated region
    $region29: #{gray_group_fno2d.10} parent=5 // pred_check
      _
    $region30: #{gray_group_fno2d.10} parent=5 // pred_check_branch
      %142 = sbr.rel (%p139) target = $region32
    $region31: #{gray_group_fno2d.10} parent=5 // pred_region
      %s143 = ssub.s32 %s9, 1
      %s144 = smul.u32 2, %s14
      %p145 = scmp.lt.s32.totalorder %s144, 7
      %s146 = scalar_select %p145, %s144, 7
      %s147 = smul.addr %s146, 4
      %s148 = scalar_lea.vmem %s0, %s147
      %p149 = pneg %p35
      %p150 = pneg %p32
      %p151 = pneg %p56
      %p152 = pneg %p53
      %p153 = pneg %p77
      %p154 = pneg %p74
      %p155 = pneg %p103
      %p156 = pneg %p100
      %s157 = smul.u32 2, %s14
      %p158 = scmp.lt.s32.totalorder %s157, 7
      %s159 = scalar_select %p158, %s157, 7
      %s160 = smul.addr %s159, 8
      %s161 = scalar_lea.vmem %s3, %s160
      %s162 = smul.u32 2, %s14
      %p163 = scmp.lt.s32.totalorder %s162, 7
      %s164 = scalar_select %p163, %s162, 7
      %s165 = smul.addr %s164, 4
      %s166 = scalar_lea.vmem %s0, %s165
      %s167 = smul.u32 2, %s14
      %s168 = smul.u32 2, %s14
      %p169 = scmp.lt.s32.totalorder %s168, 7
      %s170 = scalar_select %p169, %s168, 7
      %s171 = smul.addr %s170, 8
      %s172 = scalar_lea.vmem %s3, %s171
      %s173 = smul.u32 2, %s14
      %v174 = vld [vmem:[%s166] sm:$0xff]
      %v175 = vld [vmem:[%s1] sm:$0xff]
      %v176 = vld [vmem:[%s2] sm:$0xff]
      %v177 = vld [vmem:[%s2 + $0x8] sm:$0xff]
      %v179 = vcombine.high %v174, %v174
      %vm180 = vcmask 31744
      %v182 = vsel %vm180, %v175, 0
      %vm184 = vcmask 1043456
      %v185 = vsel %vm184, %v174, 0
      %v187 = vsel %vm184, %v179, 0
      %189 = vmatprep.subr.mxu0 0.0
      %190 = vmatpush1.msra.mxu0 0.0
      %191 = vmatprep.subr.mxu0 0.0
      %192 = vmatpush1.msra.mxu0 0.0
      %193 = vmatprep.subr.mxu0 0.0
      %194 = vmatpush1.msra.mxu0 0.0
      %195 = vmatprep.subr.mxu0 0.0
      %196 = vmatpush1.msra.mxu0 0.0
      %197 = vmatprep.subr.mxu0 0.0
      %198 = vmatpush1.msra.mxu0 0.0
      %199 = vmatprep.subr.mxu0 0.0
      %200 = vmatpush1.msra.mxu0 0.0
      %201 = vmatprep.subr.mxu0 0.0
      %202 = vmatpush1.msra.mxu0 0.0
      %203 = vmatprep.subr.mxu0 0.0
      %204 = vmatpush1.msra.mxu0 0.0
      %205 = vmatprep.subr.mxu0 0.0
      %206 = vmatpush1.msra.mxu0 0.0
      %207 = vmatprep.subr.mxu0 0.0
      %208 = vmatpush1.msra.mxu0 0.0
      %209 = vmatprep.subr.mxu0 0.0
      %210 = vmatpush1.msra.mxu0 0.0
      %211 = vmatprep.subr.mxu0 0.0
      %212 = vmatpush1.msra.mxu0 0.0
      %213 = vmatprep.subr.mxu0 0.0
      %214 = vmatpush1.msra.mxu0 0.0
      %215 = vmatprep.subr.mxu0 0.0
      %216 = vmatpush1.msra.mxu0 0.0
      %217 = vmatprep.subr.mxu0 0.0
      %218 = vmatpush1.msra.mxu0 0.0
      %219 = vmatprep.subr.mxu0 %v187
      %220 = vmatpush1.msra.mxu0 %v185
      %221 = vmatprep.subr.mxu0 0.0
      %222 = vmatpush2.msra.mxu0 0.0
      %223 = vmatprep.subr.mxu0 0.0
      %224 = vmatpush2.msra.mxu0 0.0
      %225 = vmatprep.subr.mxu0 0.0
      %226 = vmatpush2.msra.mxu0 0.0
      %227 = vmatprep.subr.mxu0 0.0
      %228 = vmatpush2.msra.mxu0 0.0
      %229 = vmatprep.subr.mxu0 0.0
      %230 = vmatpush2.msra.mxu0 0.0
      %231 = vmatprep.subr.mxu0 0.0
      %232 = vmatpush2.msra.mxu0 0.0
      %233 = vmatprep.subr.mxu0 0.0
      %234 = vmatpush2.msra.mxu0 0.0
      %235 = vmatprep.subr.mxu0 0.0
      %236 = vmatpush2.msra.mxu0 0.0
      %237 = vmatprep.subr.mxu0 0.0
      %238 = vmatpush2.msra.mxu0 0.0
      %239 = vmatprep.subr.mxu0 0.0
      %240 = vmatpush2.msra.mxu0 0.0
      %241 = vmatprep.subr.mxu0 0.0
      %242 = vmatpush2.msra.mxu0 0.0
      %243 = vmatprep.subr.mxu0 0.0
      %244 = vmatpush2.msra.mxu0 0.0
      %245 = vmatprep.subr.mxu0 0.0
      %246 = vmatpush2.msra.mxu0 0.0
      %247 = vmatprep.subr.mxu0 0.0
      %248 = vmatpush2.msra.mxu0 0.0
      %249 = vmatprep.subr.mxu0 0.0
      %250 = vmatpush2.msra.mxu0 0.0
      %251 = vmatprep.subr.mxu0 0.0
      %252 = vmatpush2.msra.mxu0 0.0
      %253 = vmatprep.mubr.f32.mxu0 0.0
      %254 = vmatmul.mubr.f32.gmra.mxu0 %v182
      %v255 = vpop.f32.mrf.mxu0
      %v256 = vadd.f32 %v176, %v255
      %v257 = vpop.f32.mrf.mxu0
      %v258 = vadd.f32 %v177, %v257
      %259 = vdwg.mxu0
      %260 = vst [vmem:[%s172] sm:$0xff] %v256
      %261 = vst [vmem:[%s172 + $0x8] sm:$0xff] %v258
      %s262 = smul.u32 2, %s14
      %p263 = scmp.lt.s32.totalorder %s262, 7
      %s264 = scalar_select %p263, %s262, 7
      %s265 = smul.addr %s264, 8
      %s266 = scalar_lea.vmem %s3, %s265
      // Predicated region
      $region33: #{gray_group_fno2d.10} parent=31 // pred_check
        %p267 = pneg %p100
      $region34: #{gray_group_fno2d.10} parent=31 // pred_check_branch
        %269 = sbr.rel (%p267) target = $region36
      $region35: #{gray_group_fno2d.10} parent=31 // pred_region
        %s270 = smul.u32 2, %s14
      $region36: #{gray_group_fno2d.10} parent=31 // pred_fallthru
        _
    $region32: #{gray_group_fno2d.10} parent=5 // pred_fallthru
      _
    %p271 = scmp.le.s32.totalorder 2, %s9
    // Predicated region
    $region37: #{gray_group_fno2d.10} parent=5 // pred_check
      %p272 = pneg %p271
    $region38: #{gray_group_fno2d.10} parent=5 // pred_check_branch
      %274 = sbr.rel (%p272) target = $region40
    $region39: #{gray_group_fno2d.10} parent=5 // pred_region
      %s275 = ssub.s32 %s9, 2
      // Predicated region
      $region41: #{gray_group_fno2d.10} parent=39 // pred_check
        %p276 = pneg %p106
      $region42: #{gray_group_fno2d.10} parent=39 // pred_check_branch
        %278 = sbr.rel (%p276) target = $region44
      $region43: #{gray_group_fno2d.10} parent=39 // pred_region
        %s279 = smul.u32 2, %s15
        %p280 = scmp.lt.s32.totalorder %s279, 7
        %s281 = scalar_select %p280, %s279, 7
        %s282 = smul.addr %s281, 8
        %s283 = scalar_lea.vmem %s3, %s282
      $region44: #{gray_group_fno2d.10} parent=39 // pred_fallthru
        _
    $region40: #{gray_group_fno2d.10} parent=5 // pred_fallthru
      _
  $region6: #{gray_group_fno2d.10} parent=0 // loop_footer
    %s13 = sadd.s32 1, %s9
  $region7: #{gray_group_fno2d.10} parent=0 // loop_footer_branch
    %8 = sbr.rel target = $region3
  $region8: #{gray_group_fno2d.10} parent=0 // loop_exit
    _

// kernel: tile.24
$region0: #{tile.24}
  %s0 = inlined_call_operand.vmem [shape: f32[16,8,16], index: 0, kind: input, shape index: {}]
  %s1 = inlined_call_operand.vmem [shape: f32[16,128], index: 1, kind: output, shape index: {}]
  %v2 = vld [vmem:[%s0] ss:$8 sm:$0xf]
  %v3 = vld [vmem:[%s0] ss:$8 sm:$0xf0]
  %vm4 = vcmask 1047556
  %v5 = vsel %vm4, %v3, %v2
  %vm6 = vcmask 130048
  %7 = vst.msk [vmem:[%s1] sm:$0xff] %vm6, %v5
  %s8 = scalar_lea.vmem %s0, 64
  %v9 = vld [vmem:[%s8] ss:$8 sm:$0xf]
  %s10 = scalar_lea.vmem %s0, 64
  %v11 = vld [vmem:[%s10] ss:$8 sm:$0xf0]
  %vm12 = vcmask 1047556
  %v13 = vsel %vm12, %v11, %v9
  %vm14 = vcmask 130048
  %s15 = scalar_lea.vmem %s1, 8
  %16 = vst.msk [vmem:[%s15] sm:$0xff] %vm14, %v13
  %s17 = scalar_lea.vmem %s0, 7
  %v18 = vld [vmem:[%s17] ss:$8 sm:$0xf]
  %s19 = scalar_lea.vmem %s0, 7
  %v20 = vld [vmem:[%s19] ss:$8 sm:$0xf0]
  %vm21 = vcmask 1047556
  %v22 = vsel %vm21, %v20, %v18
  %23 = vrot.lane.b32.xlu0 %v22, 112
  %v24 = vpop.permute.xlu0 %23
  %vm25 = vcmask 1048448
  %26 = vst.msk [vmem:[%s1] sm:$0xff] %vm25, %v24
  %s27 = scalar_lea.vmem %s0, 71
  %v28 = vld [vmem:[%s27] ss:$8 sm:$0xf]
  %s29 = scalar_lea.vmem %s0, 71
  %v30 = vld [vmem:[%s29] ss:$8 sm:$0xf0]
  %vm31 = vcmask 1047556
  %v32 = vsel %vm31, %v30, %v28
  %33 = vrot.lane.b32.xlu0 %v32, 112
  %v34 = vpop.permute.xlu0 %33
  %vm35 = vcmask 1048448
  %s36 = scalar_lea.vmem %s1, 8
  %37 = vst.msk [vmem:[%s36] sm:$0xff] %vm35, %v34
  %s38 = scalar_lea.vmem %s0, 6
  %v39 = vld [vmem:[%s38] ss:$8 sm:$0xf]
  %s40 = scalar_lea.vmem %s0, 6
  %v41 = vld [vmem:[%s40] ss:$8 sm:$0xf0]
  %vm42 = vcmask 1047556
  %v43 = vsel %vm42, %v41, %v39
  %44 = vrot.lane.b32.xlu0 %v43, 96
  %v45 = vpop.permute.xlu0 %44
  %vm46 = vcmask 917248
  %47 = vst.msk [vmem:[%s1] sm:$0xff] %vm46, %v45
  %s48 = scalar_lea.vmem %s0, 70
  %v49 = vld [vmem:[%s48] ss:$8 sm:$0xf]
  %s50 = scalar_lea.vmem %s0, 70
  %v51 = vld [vmem:[%s50] ss:$8 sm:$0xf0]
  %vm52 = vcmask 1047556
  %v53 = vsel %vm52, %v51, %v49
  %54 = vrot.lane.b32.xlu0 %v53, 96
  %v55 = vpop.permute.xlu0 %54
  %vm56 = vcmask 917248
  %s57 = scalar_lea.vmem %s1, 8
  %58 = vst.msk [vmem:[%s57] sm:$0xff] %vm56, %v55
  %s59 = scalar_lea.vmem %s0, 5
  %v60 = vld [vmem:[%s59] ss:$8 sm:$0xf]
  %s61 = scalar_lea.vmem %s0, 5
  %v62 = vld [vmem:[%s61] ss:$8 sm:$0xf0]
  %vm63 = vcmask 1047556
  %v64 = vsel %vm63, %v62, %v60
  %65 = vrot.lane.b32.xlu0 %v64, 80
  %v66 = vpop.permute.xlu0 %65
  %vm67 = vcmask 786048
  %68 = vst.msk [vmem:[%s1] sm:$0xff] %vm67, %v66
  %s69 = scalar_lea.vmem %s0, 69
  %v70 = vld [vmem:[%s69] ss:$8 sm:$0xf]
  %s71 = scalar_lea.vmem %s0, 69
  %v72 = vld [vmem:[%s71] ss:$8 sm:$0xf0]
  %vm73 = vcmask 1047556
  %v74 = vsel %vm73, %v72, %v70
  %75 = vrot.lane.b32.xlu0 %v74, 80
  %v76 = vpop.permute.xlu0 %75
  %vm77 = vcmask 786048
  %s78 = scalar_lea.vmem %s1, 8
  %79 = vst.msk [vmem:[%s78] sm:$0xff] %vm77, %v76
  %s80 = scalar_lea.vmem %s0, 4
  %v81 = vld [vmem:[%s80] ss:$8 sm:$0xf]
  %s82 = scalar_lea.vmem %s0, 4
  %v83 = vld [vmem:[%s82] ss:$8 sm:$0xf0]
  %vm84 = vcmask 1047556
  %v85 = vsel %vm84, %v83, %v81
  %86 = vrot.lane.b32.xlu0 %v85, 64
  %v87 = vpop.permute.xlu0 %86
  %vm88 = vcmask 654848
  %89 = vst.msk [vmem:[%s1] sm:$0xff] %vm88, %v87
  %s90 = scalar_lea.vmem %s0, 68
  %v91 = vld [vmem:[%s90] ss:$8 sm:$0xf]
  %s92 = scalar_lea.vmem %s0, 68
  %v93 = vld [vmem:[%s92] ss:$8 sm:$0xf0]
  %vm94 = vcmask 1047556
  %v95 = vsel %vm94, %v93, %v91
  %96 = vrot.lane.b32.xlu0 %v95, 64
  %v97 = vpop.permute.xlu0 %96
  %vm98 = vcmask 654848
  %s99 = scalar_lea.vmem %s1, 8
  %100 = vst.msk [vmem:[%s99] sm:$0xff] %vm98, %v97
  %s101 = scalar_lea.vmem %s0, 3
  %v102 = vld [vmem:[%s101] ss:$8 sm:$0xf]
  %s103 = scalar_lea.vmem %s0, 3
  %v104 = vld [vmem:[%s103] ss:$8 sm:$0xf0]
  %vm105 = vcmask 1047556
  %v106 = vsel %vm105, %v104, %v102
  %107 = vrot.lane.b32.xlu0 %v106, 48
  %v108 = vpop.permute.xlu0 %107
  %vm109 = vcmask 523648
  %110 = vst.msk [vmem:[%s1] sm:$0xff] %vm109, %v108
  %s111 = scalar_lea.vmem %s0, 67
  %v112 = vld [vmem:[%s111] ss:$8 sm:$0xf]
  %s113 = scalar_lea.vmem %s0, 67
  %v114 = vld [vmem:[%s113] ss:$8 sm:$0xf0]
  %vm115 = vcmask 1047556
  %v116 = vsel %vm115, %v114, %v112
  %117 = vrot.lane.b32.xlu0 %v116, 48
  %v118 = vpop.permute.xlu0 %117
  %vm119 = vcmask 523648
  %s120 = scalar_lea.vmem %s1, 8
  %121 = vst.msk [vmem:[%s120] sm:$0xff] %vm119, %v118
  %s122 = scalar_lea.vmem %s0, 2
  %v123 = vld [vmem:[%s122] ss:$8 sm:$0xf]
  %s124 = scalar_lea.vmem %s0, 2
  %v125 = vld [vmem:[%s124] ss:$8 sm:$0xf0]
  %vm126 = vcmask 1047556
  %v127 = vsel %vm126, %v125, %v123
  %128 = vrot.lane.b32.xlu0 %v127, 32
  %v129 = vpop.permute.xlu0 %128
  %vm130 = vcmask 392448
  %131 = vst.msk [vmem:[%s1] sm:$0xff] %vm130, %v129
  %s132 = scalar_lea.vmem %s0, 66
  %v133 = vld [vmem:[%s132] ss:$8 sm:$0xf]
  %s134 = scalar_lea.vmem %s0, 66
  %v135 = vld [vmem:[%s134] ss:$8 sm:$0xf0]
  %vm136 = vcmask 1047556
  %v137 = vsel %vm136, %v135, %v133
  %138 = vrot.lane.b32.xlu0 %v137, 32
  %v139 = vpop.permute.xlu0 %138
  %vm140 = vcmask 392448
  %s141 = scalar_lea.vmem %s1, 8
  %142 = vst.msk [vmem:[%s141] sm:$0xff] %vm140, %v139
  %s143 = scalar_lea.vmem %s0, 1
  %v144 = vld [vmem:[%s143] ss:$8 sm:$0xf]
  %s145 = scalar_lea.vmem %s0, 1
  %v146 = vld [vmem:[%s145] ss:$8 sm:$0xf0]
  %vm147 = vcmask 1047556
  %v148 = vsel %vm147, %v146, %v144
  %149 = vrot.lane.b32.xlu0 %v148, 16
  %v150 = vpop.permute.xlu0 %149
  %vm151 = vcmask 261248
  %152 = vst.msk [vmem:[%s1] sm:$0xff] %vm151, %v150
  %s153 = scalar_lea.vmem %s0, 65
  %v154 = vld [vmem:[%s153] ss:$8 sm:$0xf]
  %s155 = scalar_lea.vmem %s0, 65
  %v156 = vld [vmem:[%s155] ss:$8 sm:$0xf0]
  %vm157 = vcmask 1047556
  %v158 = vsel %vm157, %v156, %v154
  %159 = vrot.lane.b32.xlu0 %v158, 16
  %v160 = vpop.permute.xlu0 %159
  %vm161 = vcmask 261248
  %s162 = scalar_lea.vmem %s1, 8
  %163 = vst.msk [vmem:[%s162] sm:$0xff] %vm161, %v160

// kernel: gray_group_fno2d.11
$region0: #{gray_group_fno2d.11}
  #allocation0 [shape = 'u32[]', space=smem, size = 0x4, offset = 0x4, fixed_abs, tag = 'smem constant byte address 0x4 - core index']
  #allocation1 [shape = 'u32[144,128]{1,0:T(1,128)}', space=vmem, size = 0x12000, scoped, tag = 'internal scratch']
  %s0 = inlined_call_operand.vmem [shape: f32[2,2,2,8,16], index: 0, kind: input, shape index: {}]
  %s1 = inlined_call_operand.vmem [shape: f32[2,2,2,8,16], index: 1, kind: input, shape index: {}]
  %s2 = inlined_call_operand.vmem [shape: f32[2,2,8,128], index: 2, kind: input, shape index: {}]
  %s3 = inlined_call_operand.vmem [shape: f32[2,2,8,128], index: 3, kind: input, shape index: {}]
  %s4 = inlined_call_operand.vmem [shape: f32[16,128], index: 4, kind: input, shape index: {}]
  %s5 = inlined_call_operand.vmem [shape: f32[2,2,2,1,128], index: 5, kind: output, shape index: {0}]
  %s6 = inlined_call_operand.vmem [shape: f32[2,2,2,1,128], index: 6, kind: output, shape index: {1}]
  %7 = xla_tuple %s5, %s6
  %s8 = sld [smem:[#allocation0]]
  $region61: #{gray_group_fno2d.11} parent=0
    _
  %s10 = ssub.s32 1, %s8
  %s11 = scalar_select 0, %s10, %s8
  loop: start=0, step=1, limit=10
  $region2: #{gray_group_fno2d.11} parent=0 // loop_pre_header
    _
  $region3: #{gray_group_fno2d.11} parent=0 // loop_header
    %s13 = sphi 0, %s17
    %p14 = scmp.ge.s32.totalorder %s13, 10
    %s20 = sphi 0, %s39
    %s21 = sphi 0, %s35
    %s22 = sphi 0, %s31
    %s23 = sphi 0, %s20
    %s24 = sphi 0, %s21
    %s25 = sphi 0, %s22
    %s26 = sphi 0, %s23
    %s27 = sphi 0, %s24
    %s28 = sphi 0, %s25
    %s46 = sphi 0, %s48
    %s49 = sphi 0, %s46
    %s50 = sphi 0, %s49
    %s66 = sphi 0, %s50
    %s76 = sphi 0, %s78
    %s79 = sphi 0, %s76
    %s80 = sphi 0, %s79
    %s96 = sphi 0, %s80
    %s104 = sphi 0, %s106
    %s107 = sphi 0, %s104
    %s108 = sphi 0, %s107
    %s124 = sphi 0, %s108
    %s132 = sphi 0, %s134
    %s135 = sphi 0, %s132
    %s136 = sphi 0, %s135
    %s152 = sphi 0, %s136
    %s156 = sphi 0, %s156
    %s158 = sphi 0, %s156
    %s159 = sphi 0, %s158
    %s173 = sphi 0, %s159
    %s183 = sphi 0, %s185
    %s186 = sphi 0, %s183
    %s187 = sphi 0, %s186
    %s203 = sphi 0, %s187
    %s213 = sphi 0, %s215
    %s216 = sphi 0, %s213
    %s217 = sphi 0, %s216
    %s233 = sphi 0, %s217
  $region4: #{gray_group_fno2d.11} parent=0 // loop_header_branch
    %16 = sbr.rel (%p14) target = $region8
  $region5: #{gray_group_fno2d.11} parent=0 // loop_body
    %s18 = ssub.s32 %s13, 1
    %s19 = ssub.s32 %s13, 2
    %s29 = sadd.s32 1, %s22
    %p30 = scmp.ge.s32.totalorder %s29, 2
    %s31 = scalar_select %p30, 0, %s29
    %s32 = sadd.s32 1, %s21
    %s33 = scalar_select %p30, %s32, %s21
    %p34 = scmp.ge.s32.totalorder %s33, 2
    %s35 = scalar_select %p34, 0, %s33
    %s36 = sadd.s32 1, %s20
    %s37 = scalar_select %p34, %s36, %s20
    %p38 = scmp.ge.s32.totalorder %s37, 2
    %s39 = scalar_select %p38, 0, %s37
    %s40 = ssub.s32 %s20, %s39
    %s41 = ssub.s32 %s21, %s35
    %s42 = sor.u32 %s40, %s41
    %s43 = ssub.s32 %s22, %s31
    %s44 = sor.u32 %s42, %s43
    %p45 = scmp.eq.s32.totalorder %s44, 0
    %s47 = sadd.s32 %s46, 1
    %s48 = scalar_select %p45, %s46, %s47
    %p51 = pneg %p45
    %p52 = scmp.eq.s32.totalorder %s13, 7
    %p53 = por %p51, %p52
    %p54 = scmp.ne.s32.totalorder %s46, %s49
    %p55 = scmp.eq.s32.totalorder %s13, 0
    %p56 = por %p54, %p55
    %p57 = scmp.ne.s32.totalorder %s46, %s49
    %p58 = scmp.eq.s32.totalorder %s18, 7
    %p59 = por %p57, %p58
    %p60 = scmp.ne.s32.totalorder %s49, %s50
    %p61 = scmp.eq.s32.totalorder %s18, 0
    %p62 = por %p60, %p61
    %p63 = scmp.ne.s32.totalorder %s49, %s50
    %p64 = scmp.eq.s32.totalorder %s19, 7
    %p65 = por %p63, %p64
    %p67 = scmp.ne.s32.totalorder %s50, %s66
    %p68 = scmp.eq.s32.totalorder %s19, 0
    %p69 = por %p67, %p68
    %s70 = ssub.s32 %s20, %s39
    %s71 = ssub.s32 %s21, %s35
    %s72 = sor.u32 %s70, %s71
    %s73 = ssub.s32 %s22, %s31
    %s74 = sor.u32 %s72, %s73
    %p75 = scmp.eq.s32.totalorder %s74, 0
    %s77 = sadd.s32 %s76, 1
    %s78 = scalar_select %p75, %s76, %s77
    %p81 = pneg %p75
    %p82 = scmp.eq.s32.totalorder %s13, 7
    %p83 = por %p81, %p82
    %p84 = scmp.ne.s32.totalorder %s76, %s79
    %p85 = scmp.eq.s32.totalorder %s13, 0
    %p86 = por %p84, %p85
    %p87 = scmp.ne.s32.totalorder %s76, %s79
    %p88 = scmp.eq.s32.totalorder %s18, 7
    %p89 = por %p87, %p88
    %p90 = scmp.ne.s32.totalorder %s79, %s80
    %p91 = scmp.eq.s32.totalorder %s18, 0
    %p92 = por %p90, %p91
    %p93 = scmp.ne.s32.totalorder %s79, %s80
    %p94 = scmp.eq.s32.totalorder %s19, 7
    %p95 = por %p93, %p94
    %p97 = scmp.ne.s32.totalorder %s80, %s96
    %p98 = scmp.eq.s32.totalorder %s19, 0
    %p99 = por %p97, %p98
    %s100 = ssub.s32 %s20, %s39
    %s101 = ssub.s32 %s21, %s35
    %s102 = sor.u32 %s100, %s101
    %p103 = scmp.eq.s32.totalorder %s102, 0
    %s105 = sadd.s32 %s104, 1
    %s106 = scalar_select %p103, %s104, %s105
    %p109 = pneg %p103
    %p110 = scmp.eq.s32.totalorder %s13, 7
    %p111 = por %p109, %p110
    %p112 = scmp.ne.s32.totalorder %s104, %s107
    %p113 = scmp.eq.s32.totalorder %s13, 0
    %p114 = por %p112, %p113
    %p115 = scmp.ne.s32.totalorder %s104, %s107
    %p116 = scmp.eq.s32.totalorder %s18, 7
    %p117 = por %p115, %p116
    %p118 = scmp.ne.s32.totalorder %s107, %s108
    %p119 = scmp.eq.s32.totalorder %s18, 0
    %p120 = por %p118, %p119
    %p121 = scmp.ne.s32.totalorder %s107, %s108
    %p122 = scmp.eq.s32.totalorder %s19, 7
    %p123 = por %p121, %p122
    %p125 = scmp.ne.s32.totalorder %s108, %s124
    %p126 = scmp.eq.s32.totalorder %s19, 0
    %p127 = por %p125, %p126
    %s128 = ssub.s32 %s20, %s39
    %s129 = ssub.s32 %s21, %s35
    %s130 = sor.u32 %s128, %s129
    %p131 = scmp.eq.s32.totalorder %s130, 0
    %s133 = sadd.s32 %s132, 1
    %s134 = scalar_select %p131, %s132, %s133
    %p137 = pneg %p131
    %p138 = scmp.eq.s32.totalorder %s13, 7
    %p139 = por %p137, %p138
    %p140 = scmp.ne.s32.totalorder %s132, %s135
    %p141 = scmp.eq.s32.totalorder %s13, 0
    %p142 = por %p140, %p141
    %p143 = scmp.ne.s32.totalorder %s132, %s135
    %p144 = scmp.eq.s32.totalorder %s18, 7
    %p145 = por %p143, %p144
    %p146 = scmp.ne.s32.totalorder %s135, %s136
    %p147 = scmp.eq.s32.totalorder %s18, 0
    %p148 = por %p146, %p147
    %p149 = scmp.ne.s32.totalorder %s135, %s136
    %p150 = scmp.eq.s32.totalorder %s19, 7
    %p151 = por %p149, %p150
    %p153 = scmp.ne.s32.totalorder %s136, %s152
    %p154 = scmp.eq.s32.totalorder %s19, 0
    %p155 = por %p153, %p154
    %s157 = sadd.s32 %s156, 1
    %p160 = scmp.eq.s32.totalorder %s13, 7
    %p161 = scmp.ne.s32.totalorder %s156, %s158
    %p162 = scmp.eq.s32.totalorder %s13, 0
    %p163 = por %p161, %p162
    %p164 = scmp.ne.s32.totalorder %s156, %s158
    %p165 = scmp.eq.s32.totalorder %s18, 7
    %p166 = por %p164, %p165
    %p167 = scmp.ne.s32.totalorder %s158, %s159
    %p168 = scmp.eq.s32.totalorder %s18, 0
    %p169 = por %p167, %p168
    %p170 = scmp.ne.s32.totalorder %s158, %s159
    %p171 = scmp.eq.s32.totalorder %s19, 7
    %p172 = por %p170, %p171
    %p174 = scmp.ne.s32.totalorder %s159, %s173
    %p175 = scmp.eq.s32.totalorder %s19, 0
    %p176 = por %p174, %p175
    %s177 = ssub.s32 %s20, %s39
    %s178 = ssub.s32 %s21, %s35
    %s179 = sor.u32 %s177, %s178
    %s180 = ssub.s32 %s22, %s31
    %s181 = sor.u32 %s179, %s180
    %p182 = scmp.eq.s32.totalorder %s181, 0
    %s184 = sadd.s32 %s183, 1
    %s185 = scalar_select %p182, %s183, %s184
    %p188 = pneg %p182
    %p189 = scmp.eq.s32.totalorder %s13, 7
    %p190 = por %p188, %p189
    %p191 = scmp.ne.s32.totalorder %s183, %s186
    %p192 = scmp.eq.s32.totalorder %s13, 0
    %p193 = por %p191, %p192
    %p194 = scmp.ne.s32.totalorder %s183, %s186
    %p195 = scmp.eq.s32.totalorder %s18, 7
    %p196 = por %p194, %p195
    %p197 = scmp.ne.s32.totalorder %s186, %s187
    %p198 = scmp.eq.s32.totalorder %s18, 0
    %p199 = por %p197, %p198
    %p200 = scmp.ne.s32.totalorder %s186, %s187
    %p201 = scmp.eq.s32.totalorder %s19, 7
    %p202 = por %p200, %p201
    %p204 = scmp.ne.s32.totalorder %s187, %s203
    %p205 = scmp.eq.s32.totalorder %s19, 0
    %p206 = por %p204, %p205
    %s207 = ssub.s32 %s20, %s39
    %s208 = ssub.s32 %s21, %s35
    %s209 = sor.u32 %s207, %s208
    %s210 = ssub.s32 %s22, %s31
    %s211 = sor.u32 %s209, %s210
    %p212 = scmp.eq.s32.totalorder %s211, 0
    %s214 = sadd.s32 %s213, 1
    %s215 = scalar_select %p212, %s213, %s214
    %p218 = pneg %p212
    %p219 = scmp.eq.s32.totalorder %s13, 7
    %p220 = por %p218, %p219
    %p221 = scmp.ne.s32.totalorder %s213, %s216
    %p222 = scmp.eq.s32.totalorder %s13, 0
    %p223 = por %p221, %p222
    %p224 = scmp.ne.s32.totalorder %s213, %s216
    %p225 = scmp.eq.s32.totalorder %s18, 7
    %p226 = por %p224, %p225
    %p227 = scmp.ne.s32.totalorder %s216, %s217
    %p228 = scmp.eq.s32.totalorder %s18, 0
    %p229 = por %p227, %p228
    %p230 = scmp.ne.s32.totalorder %s216, %s217
    %p231 = scmp.eq.s32.totalorder %s19, 7
    %p232 = por %p230, %p231
    %p234 = scmp.ne.s32.totalorder %s217, %s233
    %p235 = scmp.eq.s32.totalorder %s19, 0
    %p236 = por %p234, %p235
    %p237 = scmp.le.s32.totalorder 1, %s13
    %p238 = scmp.lt.s32.totalorder %s13, 9
    %p239 = pnand %p237, %p238
    %p240 = pneg %p239
    // Predicated region
    $region9: #{gray_group_fno2d.11} parent=5 // pred_check
      _
    $region10: #{gray_group_fno2d.11} parent=5 // pred_check_branch
      %242 = sbr.rel (%p239) target = $region12
    $region11: #{gray_group_fno2d.11} parent=5 // pred_region
      %s243 = ssub.s32 %s13, 1
      // Predicated region
      $region13: #{gray_group_fno2d.11} parent=11 // pred_check
        %p244 = pneg %p169
      $region14: #{gray_group_fno2d.11} parent=11 // pred_check_branch
        %246 = sbr.rel (%p244) target = $region16
      $region15: #{gray_group_fno2d.11} parent=11 // pred_region
        _
      $region16: #{gray_group_fno2d.11} parent=11 // pred_fallthru
        _
    $region12: #{gray_group_fno2d.11} parent=5 // pred_fallthru
      _
    %p247 = scmp.lt.s32.totalorder %s13, 8
    // Predicated region
    $region17: #{gray_group_fno2d.11} parent=5 // pred_check
      %p248 = pneg %p247
    $region18: #{gray_group_fno2d.11} parent=5 // pred_check_branch
      %250 = sbr.rel (%p248) target = $region20
    $region19: #{gray_group_fno2d.11} parent=5 // pred_region
      // Predicated region
      $region21: #{gray_group_fno2d.11} parent=19 // pred_check
        %p251 = pneg %p56
      $region22: #{gray_group_fno2d.11} parent=19 // pred_check_branch
        %253 = sbr.rel (%p251) target = $region24
      $region23: #{gray_group_fno2d.11} parent=19 // pred_region
        %p254 = scmp.lt.s32.totalorder %s20, 1
        %s255 = scalar_select %p254, %s20, 1
        %p256 = scmp.lt.s32.totalorder %s21, 1
        %s257 = scalar_select %p256, %s21, 1
        %p258 = scmp.lt.s32.totalorder %s22, 1
        %s259 = scalar_select %p258, %s22, 1
        %s260 = smul.addr %s257, 2
        %s261 = sadd.s32 %s259, %s260
        %s262 = smul.addr %s255, 4
        %s263 = sadd.s32 %s261, %s262
        %s264 = smul.addr %s263, 8
        %s265 = scalar_lea.vmem %s0, %s264
      $region24: #{gray_group_fno2d.11} parent=19 // pred_fallthru
        _
      // Predicated region
      $region25: #{gray_group_fno2d.11} parent=19 // pred_check
        %p266 = pneg %p86
      $region26: #{gray_group_fno2d.11} parent=19 // pred_check_branch
        %268 = sbr.rel (%p266) target = $region28
      $region27: #{gray_group_fno2d.11} parent=19 // pred_region
        %p269 = scmp.lt.s32.totalorder %s20, 1
        %s270 = scalar_select %p269, %s20, 1
        %p271 = scmp.lt.s32.totalorder %s21, 1
        %s272 = scalar_select %p271, %s21, 1
        %p273 = scmp.lt.s32.totalorder %s22, 1
        %s274 = scalar_select %p273, %s22, 1
        %s275 = smul.addr %s272, 2
        %s276 = sadd.s32 %s274, %s275
        %s277 = smul.addr %s270, 4
        %s278 = sadd.s32 %s276, %s277
        %s279 = smul.addr %s278, 8
        %s280 = scalar_lea.vmem %s1, %s279
      $region28: #{gray_group_fno2d.11} parent=19 // pred_fallthru
        _
      // Predicated region
      $region29: #{gray_group_fno2d.11} parent=19 // pred_check
        %p281 = pneg %p114
      $region30: #{gray_group_fno2d.11} parent=19 // pred_check_branch
        %283 = sbr.rel (%p281) target = $region32
      $region31: #{gray_group_fno2d.11} parent=19 // pred_region
        %p284 = scmp.lt.s32.totalorder %s20, 1
        %s285 = scalar_select %p284, %s20, 1
        %p286 = scmp.lt.s32.totalorder %s21, 1
        %s287 = scalar_select %p286, %s21, 1
        %s288 = smul.addr %s285, 2
        %s289 = sadd.s32 %s287, %s288
        %s290 = smul.addr %s289, 8
        %s291 = scalar_lea.vmem %s2, %s290
      $region32: #{gray_group_fno2d.11} parent=19 // pred_fallthru
        _
      // Predicated region
      $region33: #{gray_group_fno2d.11} parent=19 // pred_check
        %p292 = pneg %p142
      $region34: #{gray_group_fno2d.11} parent=19 // pred_check_branch
        %294 = sbr.rel (%p292) target = $region36
      $region35: #{gray_group_fno2d.11} parent=19 // pred_region
        %p295 = scmp.lt.s32.totalorder %s20, 1
        %s296 = scalar_select %p295, %s20, 1
        %p297 = scmp.lt.s32.totalorder %s21, 1
        %s298 = scalar_select %p297, %s21, 1
        %s299 = smul.addr %s296, 2
        %s300 = sadd.s32 %s298, %s299
        %s301 = smul.addr %s300, 8
        %s302 = scalar_lea.vmem %s3, %s301
      $region36: #{gray_group_fno2d.11} parent=19 // pred_fallthru
        _
    $region20: #{gray_group_fno2d.11} parent=5 // pred_fallthru
      _
    %p303 = scmp.le.s32.totalorder 1, %s13
    %p304 = scmp.lt.s32.totalorder %s13, 9
    %p305 = pnand %p303, %p304
    %p306 = pneg %p305
    // Predicated region
    $region37: #{gray_group_fno2d.11} parent=5 // pred_check
      _
    $region38: #{gray_group_fno2d.11} parent=5 // pred_check_branch
      %308 = sbr.rel (%p305) target = $region40
    $region39: #{gray_group_fno2d.11} parent=5 // pred_region
      %s309 = ssub.s32 %s13, 1
      %p310 = scmp.lt.s32.totalorder %s23, 1
      %s311 = scalar_select %p310, %s23, 1
      %p312 = scmp.lt.s32.totalorder %s24, 1
      %s313 = scalar_select %p312, %s24, 1
      %p314 = scmp.lt.s32.totalorder %s25, 1
      %s315 = scalar_select %p314, %s25, 1
      %s316 = smul.addr %s313, 2
      %s317 = sadd.s32 %s315, %s316
      %s318 = smul.addr %s311, 4
      %s319 = sadd.s32 %s317, %s318
      %s320 = smul.addr %s319, 8
      %s321 = scalar_lea.vmem %s0, %s320
      %p322 = pneg %p62
      %p323 = pneg %p59
      %p324 = scmp.lt.s32.totalorder %s23, 1
      %s325 = scalar_select %p324, %s23, 1
      %p326 = scmp.lt.s32.totalorder %s24, 1
      %s327 = scalar_select %p326, %s24, 1
      %p328 = scmp.lt.s32.totalorder %s25, 1
      %s329 = scalar_select %p328, %s25, 1
      %s330 = smul.addr %s327, 2
      %s331 = sadd.s32 %s329, %s330
      %s332 = smul.addr %s325, 4
      %s333 = sadd.s32 %s331, %s332
      %s334 = smul.addr %s333, 8
      %s335 = scalar_lea.vmem %s1, %s334
      %p336 = pneg %p92
      %p337 = pneg %p89
      %p338 = scmp.lt.s32.totalorder %s23, 1
      %s339 = scalar_select %p338, %s23, 1
      %p340 = scmp.lt.s32.totalorder %s24, 1
      %s341 = scalar_select %p340, %s24, 1
      %s342 = smul.addr %s339, 2
      %s343 = sadd.s32 %s341, %s342
      %s344 = smul.addr %s343, 8
      %s345 = scalar_lea.vmem %s2, %s344
      %p346 = pneg %p120
      %p347 = pneg %p117
      %p348 = scmp.lt.s32.totalorder %s23, 1
      %s349 = scalar_select %p348, %s23, 1
      %p350 = scmp.lt.s32.totalorder %s24, 1
      %s351 = scalar_select %p350, %s24, 1
      %s352 = smul.addr %s349, 2
      %s353 = sadd.s32 %s351, %s352
      %s354 = smul.addr %s353, 8
      %s355 = scalar_lea.vmem %s3, %s354
      %p356 = pneg %p148
      %p357 = pneg %p145
      %p358 = pneg %p169
      %p359 = pneg %p166
      %p360 = pneg %p199
      %p361 = pneg %p196
      %p362 = scmp.lt.s32.totalorder %s23, 1
      %s363 = scalar_select %p362, %s23, 1
      %p364 = scmp.lt.s32.totalorder %s24, 1
      %s365 = scalar_select %p364, %s24, 1
      %p366 = scmp.lt.s32.totalorder %s25, 1
      %s367 = scalar_select %p366, %s25, 1
      %s368 = smul.addr %s365, 2
      %s369 = sadd.s32 %s367, %s368
      %s370 = smul.addr %s363, 4
      %s371 = sadd.s32 %s369, %s370
      %s372 = scalar_lea.vmem %s5, %s371
      %p373 = pneg %p229
      %p374 = pneg %p226
      %p375 = scmp.lt.s32.totalorder %s23, 1
      %s376 = scalar_select %p375, %s23, 1
      %p377 = scmp.lt.s32.totalorder %s24, 1
      %s378 = scalar_select %p377, %s24, 1
      %p379 = scmp.lt.s32.totalorder %s25, 1
      %s380 = scalar_select %p379, %s25, 1
      %s381 = smul.addr %s378, 2
      %s382 = sadd.s32 %s380, %s381
      %s383 = smul.addr %s376, 4
      %s384 = sadd.s32 %s382, %s383
      %s385 = scalar_lea.vmem %s6, %s384
      %p386 = scmp.lt.s32.totalorder %s23, 1
      %s387 = scalar_select %p386, %s23, 1
      %p388 = scmp.lt.s32.totalorder %s24, 1
      %s389 = scalar_select %p388, %s24, 1
      %p390 = scmp.lt.s32.totalorder %s25, 1
      %s391 = scalar_select %p390, %s25, 1
      %s392 = smul.addr %s389, 2
      %s393 = sadd.s32 %s391, %s392
      %s394 = smul.addr %s387, 4
      %s395 = sadd.s32 %s393, %s394
      %s396 = smul.addr %s395, 8
      %s397 = scalar_lea.vmem %s0, %s396
      %p398 = scmp.lt.s32.totalorder %s23, 1
      %s399 = scalar_select %p398, %s23, 1
      %p400 = scmp.lt.s32.totalorder %s24, 1
      %s401 = scalar_select %p400, %s24, 1
      %p402 = scmp.lt.s32.totalorder %s25, 1
      %s403 = scalar_select %p402, %s25, 1
      %s404 = smul.addr %s401, 2
      %s405 = sadd.s32 %s403, %s404
      %s406 = smul.addr %s399, 4
      %s407 = sadd.s32 %s405, %s406
      %s408 = smul.addr %s407, 8
      %s409 = scalar_lea.vmem %s1, %s408
      %p410 = scmp.lt.s32.totalorder %s23, 1
      %s411 = scalar_select %p410, %s23, 1
      %p412 = scmp.lt.s32.totalorder %s24, 1
      %s413 = scalar_select %p412, %s24, 1
      %s414 = smul.addr %s411, 2
      %s415 = sadd.s32 %s413, %s414
      %s416 = smul.addr %s415, 8
      %s417 = scalar_lea.vmem %s2, %s416
      %p418 = scmp.lt.s32.totalorder %s23, 1
      %s419 = scalar_select %p418, %s23, 1
      %p420 = scmp.lt.s32.totalorder %s24, 1
      %s421 = scalar_select %p420, %s24, 1
      %s422 = smul.addr %s419, 2
      %s423 = sadd.s32 %s421, %s422
      %s424 = smul.addr %s423, 8
      %s425 = scalar_lea.vmem %s3, %s424
      %p426 = scmp.lt.s32.totalorder %s23, 1
      %s427 = scalar_select %p426, %s23, 1
      %p428 = scmp.lt.s32.totalorder %s24, 1
      %s429 = scalar_select %p428, %s24, 1
      %p430 = scmp.lt.s32.totalorder %s25, 1
      %s431 = scalar_select %p430, %s25, 1
      %s432 = smul.addr %s429, 2
      %s433 = sadd.s32 %s431, %s432
      %s434 = smul.addr %s427, 4
      %s435 = sadd.s32 %s433, %s434
      %s436 = scalar_lea.vmem %s5, %s435
      %p437 = scmp.lt.s32.totalorder %s23, 1
      %s438 = scalar_select %p437, %s23, 1
      %p439 = scmp.lt.s32.totalorder %s24, 1
      %s440 = scalar_select %p439, %s24, 1
      %p441 = scmp.lt.s32.totalorder %s25, 1
      %s442 = scalar_select %p441, %s25, 1
      %s443 = smul.addr %s440, 2
      %s444 = sadd.s32 %s442, %s443
      %s445 = smul.addr %s438, 4
      %s446 = sadd.s32 %s444, %s445
      %s447 = scalar_lea.vmem %s6, %s446
      %v448 = vld [vmem:[%s4] sm:$0xff]
      %v449 = vld [vmem:[%s4 + $0x8] sm:$0xff]
      %v450 = vld [vmem:[%s397] sm:$0xff]
      %vm451 = vcmask 130048
      %v453 = vsel %vm451, %v450, 0
      %455 = vmatprep.subr.mxu0 0.0
      %456 = vmatpush1.msra.mxu0 0.0
      %457 = vmatprep.subr.mxu0 0.0
      %458 = vmatpush1.msra.mxu0 0.0
      %459 = vmatprep.subr.mxu0 0.0
      %460 = vmatpush1.msra.mxu0 0.0
      %461 = vmatprep.subr.mxu0 0.0
      %462 = vmatpush1.msra.mxu0 0.0
      %463 = vmatprep.subr.mxu0 0.0
      %464 = vmatpush1.msra.mxu0 0.0
      %465 = vmatprep.subr.mxu0 0.0
      %466 = vmatpush1.msra.mxu0 0.0
      %467 = vmatprep.subr.mxu0 0.0
      %468 = vmatpush1.msra.mxu0 0.0
      %469 = vmatprep.subr.mxu0 0.0
      %470 = vmatpush1.msra.mxu0 0.0
      %471 = vmatprep.subr.mxu0 0.0
      %472 = vmatpush1.msra.mxu0 0.0
      %473 = vmatprep.subr.mxu0 0.0
      %474 = vmatpush1.msra.mxu0 0.0
      %475 = vmatprep.subr.mxu0 0.0
      %476 = vmatpush1.msra.mxu0 0.0
      %477 = vmatprep.subr.mxu0 0.0
      %478 = vmatpush1.msra.mxu0 0.0
      %479 = vmatprep.subr.mxu0 0.0
      %480 = vmatpush1.msra.mxu0 0.0
      %481 = vmatprep.subr.mxu0 0.0
      %482 = vmatpush1.msra.mxu0 0.0
      %483 = vmatprep.subr.mxu0 0.0
      %484 = vmatpush1.msra.mxu0 %v449
      %485 = vmatprep.subr.mxu0 0.0
      %486 = vmatpush1.msra.mxu0 %v448
      %487 = vmatprep.subr.mxu0 0.0
      %488 = vmatpush2.msra.mxu0 0.0
      %489 = vmatprep.subr.mxu0 0.0
      %490 = vmatpush2.msra.mxu0 0.0
      %491 = vmatprep.subr.mxu0 0.0
      %492 = vmatpush2.msra.mxu0 0.0
      %493 = vmatprep.subr.mxu0 0.0
      %494 = vmatpush2.msra.mxu0 0.0
      %495 = vmatprep.subr.mxu0 0.0
      %496 = vmatpush2.msra.mxu0 0.0
      %497 = vmatprep.subr.mxu0 0.0
      %498 = vmatpush2.msra.mxu0 0.0
      %499 = vmatprep.subr.mxu0 0.0
      %500 = vmatpush2.msra.mxu0 0.0
      %501 = vmatprep.subr.mxu0 0.0
      %502 = vmatpush2.msra.mxu0 0.0
      %503 = vmatprep.subr.mxu0 0.0
      %504 = vmatpush2.msra.mxu0 0.0
      %505 = vmatprep.subr.mxu0 0.0
      %506 = vmatpush2.msra.mxu0 0.0
      %507 = vmatprep.subr.mxu0 0.0
      %508 = vmatpush2.msra.mxu0 0.0
      %509 = vmatprep.subr.mxu0 0.0
      %510 = vmatpush2.msra.mxu0 0.0
      %511 = vmatprep.subr.mxu0 0.0
      %512 = vmatpush2.msra.mxu0 0.0
      %513 = vmatprep.subr.mxu0 0.0
      %514 = vmatpush2.msra.mxu0 0.0
      %515 = vmatprep.subr.mxu0 0.0
      %516 = vmatpush2.msra.mxu0 0.0
      %517 = vmatprep.subr.mxu0 0.0
      %518 = vmatpush2.msra.mxu0 0.0
      %519 = vmatprep.mubr.f32.mxu0 0.0
      %520 = vmatmul.mubr.f32.gmra.mxu0 %v453
      %v521 = vpop.f32.mrf.mxu0
      %v522 = vadd.f32 0.0, %v521
      %v523 = vpop.f32.mrf.mxu0
      %524 = vdwg.mxu0
      %v525 = vld [vmem:[%s409] sm:$0xff]
      %v527 = vsel %vm451, %v525, 0
      %529 = vmatprep.subr.mxu0 0.0
      %530 = vmatpush1.msra.mxu0 0.0
      %531 = vmatprep.subr.mxu0 0.0
      %532 = vmatpush1.msra.mxu0 0.0
      %533 = vmatprep.subr.mxu0 0.0
      %534 = vmatpush1.msra.mxu0 0.0
      %535 = vmatprep.subr.mxu0 0.0
      %536 = vmatpush1.msra.mxu0 0.0
      %537 = vmatprep.subr.mxu0 0.0
      %538 = vmatpush1.msra.mxu0 0.0
      %539 = vmatprep.subr.mxu0 0.0
      %540 = vmatpush1.msra.mxu0 0.0
      %541 = vmatprep.subr.mxu0 0.0
      %542 = vmatpush1.msra.mxu0 0.0
      %543 = vmatprep.subr.mxu0 0.0
      %544 = vmatpush1.msra.mxu0 0.0
      %545 = vmatprep.subr.mxu0 0.0
      %546 = vmatpush1.msra.mxu0 0.0
      %547 = vmatprep.subr.mxu0 0.0
      %548 = vmatpush1.msra.mxu0 0.0
      %549 = vmatprep.subr.mxu0 0.0
      %550 = vmatpush1.msra.mxu0 0.0
      %551 = vmatprep.subr.mxu0 0.0
      %552 = vmatpush1.msra.mxu0 0.0
      %553 = vmatprep.subr.mxu0 0.0
      %554 = vmatpush1.msra.mxu0 0.0
      %555 = vmatprep.subr.mxu0 0.0
      %556 = vmatpush1.msra.mxu0 0.0
      %557 = vmatprep.subr.mxu0 0.0
      %558 = vmatpush1.msra.mxu0 %v449
      %559 = vmatprep.subr.mxu0 0.0
      %560 = vmatpush1.msra.mxu0 %v448
      %561 = vmatprep.subr.mxu0 0.0
      %562 = vmatpush2.msra.mxu0 0.0
      %563 = vmatprep.subr.mxu0 0.0
      %564 = vmatpush2.msra.mxu0 0.0
      %565 = vmatprep.subr.mxu0 0.0
      %566 = vmatpush2.msra.mxu0 0.0
      %567 = vmatprep.subr.mxu0 0.0
      %568 = vmatpush2.msra.mxu0 0.0
      %569 = vmatprep.subr.mxu0 0.0
      %570 = vmatpush2.msra.mxu0 0.0
      %571 = vmatprep.subr.mxu0 0.0
      %572 = vmatpush2.msra.mxu0 0.0
      %573 = vmatprep.subr.mxu0 0.0
      %574 = vmatpush2.msra.mxu0 0.0
      %575 = vmatprep.subr.mxu0 0.0
      %576 = vmatpush2.msra.mxu0 0.0
      %577 = vmatprep.subr.mxu0 0.0
      %578 = vmatpush2.msra.mxu0 0.0
      %579 = vmatprep.subr.mxu0 0.0
      %580 = vmatpush2.msra.mxu0 0.0
      %581 = vmatprep.subr.mxu0 0.0
      %582 = vmatpush2.msra.mxu0 0.0
      %583 = vmatprep.subr.mxu0 0.0
      %584 = vmatpush2.msra.mxu0 0.0
      %585 = vmatprep.subr.mxu0 0.0
      %586 = vmatpush2.msra.mxu0 0.0
      %587 = vmatprep.subr.mxu0 0.0
      %588 = vmatpush2.msra.mxu0 0.0
      %589 = vmatprep.subr.mxu0 0.0
      %590 = vmatpush2.msra.mxu0 0.0
      %591 = vmatprep.subr.mxu0 0.0
      %592 = vmatpush2.msra.mxu0 0.0
      %593 = vmatprep.mubr.f32.mxu0 0.0
      %594 = vmatmul.mubr.f32.gmra.mxu0 %v527
      %v595 = vpop.f32.mrf.mxu0
      %v596 = vadd.f32 0.0, %v595
      %v597 = vpop.f32.mrf.mxu0
      %598 = vdwg.mxu0
      %v599 = vld [vmem:[%s417] sm:$0xff]
      %v600 = vld [vmem:[%s425] sm:$0xff]
      %v601 = vmul.f32 %v522, %v599
      %v602 = vmul.f32 %v596, %v600
      %v603 = vsub.f32 %v601, %v602
      %v604 = vrot.slane %v603, 4
      %v605 = vadd.f32 %v603, %v604
      %v606 = vrot.slane %v605, 2
      %v607 = vadd.f32 %v605, %v606
      %v608 = vrot.slane %v607, 1
      %v609 = vadd.f32 %v607, %v608
      %610 = vst [vmem:[%s436] sm:$0x1] %v609
      %v611 = vmul.f32 %v522, %v600
      %v612 = vmul.f32 %v596, %v599
      %v613 = vadd.f32 %v611, %v612
      %v614 = vrot.slane %v613, 4
      %v615 = vadd.f32 %v613, %v614
      %v616 = vrot.slane %v615, 2
      %v617 = vadd.f32 %v615, %v616
      %v618 = vrot.slane %v617, 1
      %v619 = vadd.f32 %v617, %v618
      %620 = vst [vmem:[%s447] sm:$0x1] %v619
      %p621 = scmp.lt.s32.totalorder %s23, 1
      %s622 = scalar_select %p621, %s23, 1
      %p623 = scmp.lt.s32.totalorder %s24, 1
      %s624 = scalar_select %p623, %s24, 1
      %p625 = scmp.lt.s32.totalorder %s25, 1
      %s626 = scalar_select %p625, %s25, 1
      %s627 = smul.addr %s624, 2
      %s628 = sadd.s32 %s626, %s627
      %s629 = smul.addr %s622, 4
      %s630 = sadd.s32 %s628, %s629
      %s631 = scalar_lea.vmem %s5, %s630
      %p632 = scmp.lt.s32.totalorder %s23, 1
      %s633 = scalar_select %p632, %s23, 1
      %p634 = scmp.lt.s32.totalorder %s24, 1
      %s635 = scalar_select %p634, %s24, 1
      %p636 = scmp.lt.s32.totalorder %s25, 1
      %s637 = scalar_select %p636, %s25, 1
      %s638 = smul.addr %s635, 2
      %s639 = sadd.s32 %s637, %s638
      %s640 = smul.addr %s633, 4
      %s641 = sadd.s32 %s639, %s640
      %s642 = scalar_lea.vmem %s6, %s641
      // Predicated region
      $region41: #{gray_group_fno2d.11} parent=39 // pred_check
        %p643 = pneg %p196
      $region42: #{gray_group_fno2d.11} parent=39 // pred_check_branch
        %645 = sbr.rel (%p643) target = $region44
      $region43: #{gray_group_fno2d.11} parent=39 // pred_region
        _
      $region44: #{gray_group_fno2d.11} parent=39 // pred_fallthru
        _
      // Predicated region
      $region45: #{gray_group_fno2d.11} parent=39 // pred_check
        %p646 = pneg %p226
      $region46: #{gray_group_fno2d.11} parent=39 // pred_check_branch
        %648 = sbr.rel (%p646) target = $region48
      $region47: #{gray_group_fno2d.11} parent=39 // pred_region
        _
      $region48: #{gray_group_fno2d.11} parent=39 // pred_fallthru
        _
    $region40: #{gray_group_fno2d.11} parent=5 // pred_fallthru
      _
    %p649 = scmp.le.s32.totalorder 2, %s13
    // Predicated region
    $region49: #{gray_group_fno2d.11} parent=5 // pred_check
      %p650 = pneg %p649
    $region50: #{gray_group_fno2d.11} parent=5 // pred_check_branch
      %652 = sbr.rel (%p650) target = $region52
    $region51: #{gray_group_fno2d.11} parent=5 // pred_region
      %s653 = ssub.s32 %s13, 2
      // Predicated region
      $region53: #{gray_group_fno2d.11} parent=51 // pred_check
        %p654 = pneg %p202
      $region54: #{gray_group_fno2d.11} parent=51 // pred_check_branch
        %656 = sbr.rel (%p654) target = $region56
      $region55: #{gray_group_fno2d.11} parent=51 // pred_region
        %p657 = scmp.lt.s32.totalorder %s26, 1
        %s658 = scalar_select %p657, %s26, 1
        %p659 = scmp.lt.s32.totalorder %s27, 1
        %s660 = scalar_select %p659, %s27, 1
        %p661 = scmp.lt.s32.totalorder %s28, 1
        %s662 = scalar_select %p661, %s28, 1
        %s663 = smul.addr %s660, 2
        %s664 = sadd.s32 %s662, %s663
        %s665 = smul.addr %s658, 4
        %s666 = sadd.s32 %s664, %s665
        %s667 = scalar_lea.vmem %s5, %s666
      $region56: #{gray_group_fno2d.11} parent=51 // pred_fallthru
        _
      // Predicated region
      $region57: #{gray_group_fno2d.11} parent=51 // pred_check
        %p668 = pneg %p232
      $region58: #{gray_group_fno2d.11} parent=51 // pred_check_branch
        %670 = sbr.rel (%p668) target = $region60
      $region59: #{gray_group_fno2d.11} parent=51 // pred_region
        %p671 = scmp.lt.s32.totalorder %s26, 1
        %s672 = scalar_select %p671, %s26, 1
        %p673 = scmp.lt.s32.totalorder %s27, 1
        %s674 = scalar_select %p673, %s27, 1
        %p675 = scmp.lt.s32.totalorder %s28, 1
        %s676 = scalar_select %p675, %s28, 1
        %s677 = smul.addr %s674, 2
        %s678 = sadd.s32 %s676, %s677
        %s679 = smul.addr %s672, 4
        %s680 = sadd.s32 %s678, %s679
        %s681 = scalar_lea.vmem %s6, %s680
      $region60: #{gray_group_fno2d.11} parent=51 // pred_fallthru
        _
    $region52: #{gray_group_fno2d.11} parent=5 // pred_fallthru
      _
  $region6: #{gray_group_fno2d.11} parent=0 // loop_footer
    %s17 = sadd.s32 1, %s13
  $region7: #{gray_group_fno2d.11} parent=0 // loop_footer_branch
    %12 = sbr.rel target = $region3
  $region8: #{gray_group_fno2d.11} parent=0 // loop_exit
    _

// kernel: reverse.9
$region0: #{reverse.9}
  %s0 = inlined_call_operand.vmem [shape: f32[8,4,16,7], index: 0, kind: input, shape index: {}]
  %s1 = inlined_call_operand.vmem [shape: f32[8,4,16,7], index: 1, kind: output, shape index: {}]
  $region1: #{reverse.9} parent=0
    #allocation0 [shape = 'u8[262144]{0}', space=vmem, size = 0x40000, scoped, tag = 'operand span for operand 0']
    #allocation1 [shape = 'u8[131072]{0}', space=vmem, size = 0x20000, scoped, tag = 'operand span for operand 1']
    %s2 = scalar_lea.vmem [#allocation0], 8
    // Predicated region
    $region2: #{reverse.9} parent=1 // pred_check
      _
    $region3: #{reverse.9} parent=1 // pred_check_branch
      %4 = sbr.rel (0) target = $region5
    $region4: #{reverse.9} parent=1 // pred_region
      // Predicated region
      $region6: #{reverse.9} parent=4 // pred_check
        _
      $region7: #{reverse.9} parent=4 // pred_check_branch
        %6 = sbr.rel (0) target = $region9
      $region8: #{reverse.9} parent=4 // pred_region
        // Predicated region
        $region21: #{reverse.9} parent=8 // pred_check
          _
        $region22: #{reverse.9} parent=8 // pred_check_branch
          %84 = sbr.rel (0) target = $region24
        $region23: #{reverse.9} parent=8 // pred_region
          loop: start=0, step=1, limit=1
          $region25: #{reverse.9} parent=23 // loop_pre_header
            _
          $region26: #{reverse.9} parent=23 // loop_header
            %s86 = sphi 0, %s90
            %p87 = scmp.ge.s32.totalorder %s86, 1
            %s91 = sphi %s0, %s0
            %s92 = sphi %s2, %s2
          $region27: #{reverse.9} parent=23 // loop_header_branch
            %89 = sbr.rel (%p87) target = $region31
          $region28: #{reverse.9} parent=23 // loop_body
            %v93 = vld [vmem:[%s91] sm:$0xff]
            %94 = vst [vmem:[%s92] sm:$0xff] %v93
            %v95 = vld [vmem:[%s91 + $0x8] sm:$0xff]
            %96 = vst [vmem:[%s92 + $0x10] sm:$0xff] %v95
            %v97 = vld [vmem:[%s91 + $0x10] sm:$0xff]
            %98 = vst [vmem:[%s92 + $0x20] sm:$0xff] %v97
            %v99 = vld [vmem:[%s91 + $0x18] sm:$0xff]
            %100 = vst [vmem:[%s92 + $0x30] sm:$0xff] %v99
            %v101 = vld [vmem:[%s91 + $0x20] sm:$0xff]
            %102 = vst [vmem:[%s92 + $0x40] sm:$0xff] %v101
            %v103 = vld [vmem:[%s91 + $0x28] sm:$0xff]
            %104 = vst [vmem:[%s92 + $0x50] sm:$0xff] %v103
            %v105 = vld [vmem:[%s91 + $0x30] sm:$0xff]
            %106 = vst [vmem:[%s92 + $0x60] sm:$0xff] %v105
            %v107 = vld [vmem:[%s91 + $0x38] sm:$0xff]
            %108 = vst [vmem:[%s92 + $0x70] sm:$0xff] %v107
            %v109 = vld [vmem:[%s91 + $0x40] sm:$0xff]
            %110 = vst [vmem:[%s92 + $0x80] sm:$0xff] %v109
            %v111 = vld [vmem:[%s91 + $0x48] sm:$0xff]
            %112 = vst [vmem:[%s92 + $0x90] sm:$0xff] %v111
            %v113 = vld [vmem:[%s91 + $0x50] sm:$0xff]
            %114 = vst [vmem:[%s92 + $0xa0] sm:$0xff] %v113
            %v115 = vld [vmem:[%s91 + $0x58] sm:$0xff]
            %116 = vst [vmem:[%s92 + $0xb0] sm:$0xff] %v115
            %v117 = vld [vmem:[%s91 + $0x60] sm:$0xff]
            %118 = vst [vmem:[%s92 + $0xc0] sm:$0xff] %v117
            %v119 = vld [vmem:[%s91 + $0x68] sm:$0xff]
            %120 = vst [vmem:[%s92 + $0xd0] sm:$0xff] %v119
            %v121 = vld [vmem:[%s91 + $0x70] sm:$0xff]
            %122 = vst [vmem:[%s92 + $0xe0] sm:$0xff] %v121
            %v123 = vld [vmem:[%s91 + $0x78] sm:$0xff]
            %124 = vst [vmem:[%s92 + $0xf0] sm:$0xff] %v123
            %v125 = vld [vmem:[%s91 + $0x80] sm:$0xff]
            %126 = vst [vmem:[%s92 + $0x100] sm:$0xff] %v125
            %v127 = vld [vmem:[%s91 + $0x88] sm:$0xff]
            %128 = vst [vmem:[%s92 + $0x110] sm:$0xff] %v127
            %v129 = vld [vmem:[%s91 + $0x90] sm:$0xff]
            %130 = vst [vmem:[%s92 + $0x120] sm:$0xff] %v129
            %v131 = vld [vmem:[%s91 + $0x98] sm:$0xff]
            %132 = vst [vmem:[%s92 + $0x130] sm:$0xff] %v131
            %v133 = vld [vmem:[%s91 + $0xa0] sm:$0xff]
            %134 = vst [vmem:[%s92 + $0x140] sm:$0xff] %v133
            %v135 = vld [vmem:[%s91 + $0xa8] sm:$0xff]
            %136 = vst [vmem:[%s92 + $0x150] sm:$0xff] %v135
            %v137 = vld [vmem:[%s91 + $0xb0] sm:$0xff]
            %138 = vst [vmem:[%s92 + $0x160] sm:$0xff] %v137
            %v139 = vld [vmem:[%s91 + $0xb8] sm:$0xff]
            %140 = vst [vmem:[%s92 + $0x170] sm:$0xff] %v139
            %v141 = vld [vmem:[%s91 + $0xc0] sm:$0xff]
            %142 = vst [vmem:[%s92 + $0x180] sm:$0xff] %v141
            %v143 = vld [vmem:[%s91 + $0xc8] sm:$0xff]
            %144 = vst [vmem:[%s92 + $0x190] sm:$0xff] %v143
            %v145 = vld [vmem:[%s91 + $0xd0] sm:$0xff]
            %146 = vst [vmem:[%s92 + $0x1a0] sm:$0xff] %v145
            %v147 = vld [vmem:[%s91 + $0xd8] sm:$0xff]
            %148 = vst [vmem:[%s92 + $0x1b0] sm:$0xff] %v147
            %v149 = vld [vmem:[%s91 + $0xe0] sm:$0xff]
            %150 = vst [vmem:[%s92 + $0x1c0] sm:$0xff] %v149
            %v151 = vld [vmem:[%s91 + $0xe8] sm:$0xff]
            %152 = vst [vmem:[%s92 + $0x1d0] sm:$0xff] %v151
            %v153 = vld [vmem:[%s91 + $0xf0] sm:$0xff]
            %154 = vst [vmem:[%s92 + $0x1e0] sm:$0xff] %v153
            %v155 = vld [vmem:[%s91 + $0xf8] sm:$0xff]
            %156 = vst [vmem:[%s92 + $0x1f0] sm:$0xff] %v155
          $region29: #{reverse.9} parent=23 // loop_footer
            %s90 = sadd.s32 1, %s86
          $region30: #{reverse.9} parent=23 // loop_footer_branch
            %85 = sbr.rel target = $region26
          $region31: #{reverse.9} parent=23 // loop_exit
            _
        $region24: #{reverse.9} parent=8 // pred_fallthru
          _
        // Predicated region
        $region32: #{reverse.9} parent=8 // pred_check
          _
        $region33: #{reverse.9} parent=8 // pred_check_branch
          %158 = sbr.rel target = $region35
        $region34: #{reverse.9} parent=8 // pred_region
          _
        $region35: #{reverse.9} parent=8 // pred_fallthru
          _
      $region9: #{reverse.9} parent=4 // pred_fallthru
        _
      // Predicated region
      $region10: #{reverse.9} parent=4 // pred_check
        _
      $region11: #{reverse.9} parent=4 // pred_check_branch
        %8 = sbr.rel target = $region13
      $region12: #{reverse.9} parent=4 // pred_region
        %s10 = ssub.s32 256, 1
        loop: start=0, step=1, limit=1
        $region14: #{reverse.9} parent=12 // loop_pre_header
          _
        $region15: #{reverse.9} parent=12 // loop_header
          %s12 = sphi 0, %s16
          %p13 = scmp.ge.s32.totalorder %s12, 1
          %s17 = sphi %s0, %s0
          %s18 = sphi %s2, %s2
        $region16: #{reverse.9} parent=12 // loop_header_branch
          %15 = sbr.rel (%p13) target = $region20
        $region17: #{reverse.9} parent=12 // loop_body
          %v19 = vld [vmem:[%s17] sm:%s10]
          %20 = vst [vmem:[%s18] sm:%s10] %v19
          %v21 = vld [vmem:[%s17 + $0x8] sm:%s10]
          %22 = vst [vmem:[%s18 + $0x10] sm:%s10] %v21
          %v23 = vld [vmem:[%s17 + $0x10] sm:%s10]
          %24 = vst [vmem:[%s18 + $0x20] sm:%s10] %v23
          %v25 = vld [vmem:[%s17 + $0x18] sm:%s10]
          %26 = vst [vmem:[%s18 + $0x30] sm:%s10] %v25
          %v27 = vld [vmem:[%s17 + $0x20] sm:%s10]
          %28 = vst [vmem:[%s18 + $0x40] sm:%s10] %v27
          %v29 = vld [vmem:[%s17 + $0x28] sm:%s10]
          %30 = vst [vmem:[%s18 + $0x50] sm:%s10] %v29
          %v31 = vld [vmem:[%s17 + $0x30] sm:%s10]
          %32 = vst [vmem:[%s18 + $0x60] sm:%s10] %v31
          %v33 = vld [vmem:[%s17 + $0x38] sm:%s10]
          %34 = vst [vmem:[%s18 + $0x70] sm:%s10] %v33
          %v35 = vld [vmem:[%s17 + $0x40] sm:%s10]
          %36 = vst [vmem:[%s18 + $0x80] sm:%s10] %v35
          %v37 = vld [vmem:[%s17 + $0x48] sm:%s10]
          %38 = vst [vmem:[%s18 + $0x90] sm:%s10] %v37
          %v39 = vld [vmem:[%s17 + $0x50] sm:%s10]
          %40 = vst [vmem:[%s18 + $0xa0] sm:%s10] %v39
          %v41 = vld [vmem:[%s17 + $0x58] sm:%s10]
          %42 = vst [vmem:[%s18 + $0xb0] sm:%s10] %v41
          %v43 = vld [vmem:[%s17 + $0x60] sm:%s10]
          %44 = vst [vmem:[%s18 + $0xc0] sm:%s10] %v43
          %v45 = vld [vmem:[%s17 + $0x68] sm:%s10]
          %46 = vst [vmem:[%s18 + $0xd0] sm:%s10] %v45
          %v47 = vld [vmem:[%s17 + $0x70] sm:%s10]
          %48 = vst [vmem:[%s18 + $0xe0] sm:%s10] %v47
          %v49 = vld [vmem:[%s17 + $0x78] sm:%s10]
          %50 = vst [vmem:[%s18 + $0xf0] sm:%s10] %v49
          %v51 = vld [vmem:[%s17 + $0x80] sm:%s10]
          %52 = vst [vmem:[%s18 + $0x100] sm:%s10] %v51
          %v53 = vld [vmem:[%s17 + $0x88] sm:%s10]
          %54 = vst [vmem:[%s18 + $0x110] sm:%s10] %v53
          %v55 = vld [vmem:[%s17 + $0x90] sm:%s10]
          %56 = vst [vmem:[%s18 + $0x120] sm:%s10] %v55
          %v57 = vld [vmem:[%s17 + $0x98] sm:%s10]
          %58 = vst [vmem:[%s18 + $0x130] sm:%s10] %v57
          %v59 = vld [vmem:[%s17 + $0xa0] sm:%s10]
          %60 = vst [vmem:[%s18 + $0x140] sm:%s10] %v59
          %v61 = vld [vmem:[%s17 + $0xa8] sm:%s10]
          %62 = vst [vmem:[%s18 + $0x150] sm:%s10] %v61
          %v63 = vld [vmem:[%s17 + $0xb0] sm:%s10]
          %64 = vst [vmem:[%s18 + $0x160] sm:%s10] %v63
          %v65 = vld [vmem:[%s17 + $0xb8] sm:%s10]
          %66 = vst [vmem:[%s18 + $0x170] sm:%s10] %v65
          %v67 = vld [vmem:[%s17 + $0xc0] sm:%s10]
          %68 = vst [vmem:[%s18 + $0x180] sm:%s10] %v67
          %v69 = vld [vmem:[%s17 + $0xc8] sm:%s10]
          %70 = vst [vmem:[%s18 + $0x190] sm:%s10] %v69
          %v71 = vld [vmem:[%s17 + $0xd0] sm:%s10]
          %72 = vst [vmem:[%s18 + $0x1a0] sm:%s10] %v71
          %v73 = vld [vmem:[%s17 + $0xd8] sm:%s10]
          %74 = vst [vmem:[%s18 + $0x1b0] sm:%s10] %v73
          %v75 = vld [vmem:[%s17 + $0xe0] sm:%s10]
          %76 = vst [vmem:[%s18 + $0x1c0] sm:%s10] %v75
          %v77 = vld [vmem:[%s17 + $0xe8] sm:%s10]
          %78 = vst [vmem:[%s18 + $0x1d0] sm:%s10] %v77
          %v79 = vld [vmem:[%s17 + $0xf0] sm:%s10]
          %80 = vst [vmem:[%s18 + $0x1e0] sm:%s10] %v79
          %v81 = vld [vmem:[%s17 + $0xf8] sm:%s10]
          %82 = vst [vmem:[%s18 + $0x1f0] sm:%s10] %v81
        $region18: #{reverse.9} parent=12 // loop_footer
          %s16 = sadd.s32 1, %s12
        $region19: #{reverse.9} parent=12 // loop_footer_branch
          %11 = sbr.rel target = $region15
        $region20: #{reverse.9} parent=12 // loop_exit
          _
      $region13: #{reverse.9} parent=4 // pred_fallthru
        _
    $region5: #{reverse.9} parent=1 // pred_fallthru
      _
    %159 = vnop
    %s160 = scalar_lea.vmem [#allocation0], 7
    %v161 = vld [vmem:[%s160] ss:$-1 sm:$0xff]
    %v162 = vrot.slane %v161, 1
    %163 = vst [vmem:[#allocation1] sm:$0xff] %v162
    %s164 = scalar_lea.vmem [#allocation0], 8
    %s165 = scalar_lea.vmem %s164, 7 [#allocation0]
    %v166 = vld [vmem:[%s165] ss:$-1 sm:$0xff]
    %v167 = vrot.slane %v166, 1
    %v168 = vlaneseq
    %v169 = vshrl.u32 %v168, 7
    %vm170 = vcmp.lt.s32.totalorder %v169, 7
    %171 = vst.msk [vmem:[#allocation1] sm:$0xff] %vm170, %v167
    %s172 = scalar_lea.vmem [#allocation1], 8
    %s173 = scalar_lea.vmem [#allocation0], 16
    %s174 = scalar_lea.vmem %s173, 7 [#allocation0]
    %v175 = vld [vmem:[%s174] ss:$-1 sm:$0xff]
    %v176 = vrot.slane %v175, 1
    %177 = vst [vmem:[%s172] sm:$0xff] %v176
    %s178 = scalar_lea.vmem %s173, 8 [#allocation0]
    %s179 = scalar_lea.vmem %s178, 7 [#allocation0]
    %v180 = vld [vmem:[%s179] ss:$-1 sm:$0xff]
    %v181 = vrot.slane %v180, 1
    %v182 = vlaneseq
    %v183 = vshrl.u32 %v182, 7
    %vm184 = vcmp.lt.s32.totalorder %v183, 7
    %185 = vst.msk [vmem:[%s172] sm:$0xff] %vm184, %v181
    %s186 = scalar_lea.vmem [#allocation1], 16
    %s187 = scalar_lea.vmem [#allocation0], 32
    %s188 = scalar_lea.vmem %s187, 7 [#allocation0]
    %v189 = vld [vmem:[%s188] ss:$-1 sm:$0xff]
    %v190 = vrot.slane %v189, 1
    %191 = vst [vmem:[%s186] sm:$0xff] %v190
    %s192 = scalar_lea.vmem %s187, 8 [#allocation0]
    %s193 = scalar_lea.vmem %s192, 7 [#allocation0]
    %v194 = vld [vmem:[%s193] ss:$-1 sm:$0xff]
    %v195 = vrot.slane %v194, 1
    %v196 = vlaneseq
    %v197 = vshrl.u32 %v196, 7
    %vm198 = vcmp.lt.s32.totalorder %v197, 7
    %199 = vst.msk [vmem:[%s186] sm:$0xff] %vm198, %v195
    %s200 = scalar_lea.vmem [#allocation1], 24
    %s201 = scalar_lea.vmem [#allocation0], 48
    %s202 = scalar_lea.vmem %s201, 7 [#allocation0]
    %v203 = vld [vmem:[%s202] ss:$-1 sm:$0xff]
    %v204 = vrot.slane %v203, 1
    %205 = vst [vmem:[%s200] sm:$0xff] %v204
    %s206 = scalar_lea.vmem %s201, 8 [#allocation0]
    %s207 = scalar_lea.vmem %s206, 7 [#allocation0]
    %v208 = vld [vmem:[%s207] ss:$-1 sm:$0xff]
    %v209 = vrot.slane %v208, 1
    %v210 = vlaneseq
    %v211 = vshrl.u32 %v210, 7
    %vm212 = vcmp.lt.s32.totalorder %v211, 7
    %213 = vst.msk [vmem:[%s200] sm:$0xff] %vm212, %v209
    %s214 = scalar_lea.vmem [#allocation1], 32
    %s215 = scalar_lea.vmem [#allocation0], 64
    %s216 = scalar_lea.vmem %s215, 7 [#allocation0]
    %v217 = vld [vmem:[%s216] ss:$-1 sm:$0xff]
    %v218 = vrot.slane %v217, 1
    %219 = vst [vmem:[%s214] sm:$0xff] %v218
    %s220 = scalar_lea.vmem %s215, 8 [#allocation0]
    %s221 = scalar_lea.vmem %s220, 7 [#allocation0]
    %v222 = vld [vmem:[%s221] ss:$-1 sm:$0xff]
    %v223 = vrot.slane %v222, 1
    %v224 = vlaneseq
    %v225 = vshrl.u32 %v224, 7
    %vm226 = vcmp.lt.s32.totalorder %v225, 7
    %227 = vst.msk [vmem:[%s214] sm:$0xff] %vm226, %v223
    %s228 = scalar_lea.vmem [#allocation1], 40
    %s229 = scalar_lea.vmem [#allocation0], 80
    %s230 = scalar_lea.vmem %s229, 7 [#allocation0]
    %v231 = vld [vmem:[%s230] ss:$-1 sm:$0xff]
    %v232 = vrot.slane %v231, 1
    %233 = vst [vmem:[%s228] sm:$0xff] %v232
    %s234 = scalar_lea.vmem %s229, 8 [#allocation0]
    %s235 = scalar_lea.vmem %s234, 7 [#allocation0]
    %v236 = vld [vmem:[%s235] ss:$-1 sm:$0xff]
    %v237 = vrot.slane %v236, 1
    %v238 = vlaneseq
    %v239 = vshrl.u32 %v238, 7
    %vm240 = vcmp.lt.s32.totalorder %v239, 7
    %241 = vst.msk [vmem:[%s228] sm:$0xff] %vm240, %v237
    %s242 = scalar_lea.vmem [#allocation1], 48
    %s243 = scalar_lea.vmem [#allocation0], 96
    %s244 = scalar_lea.vmem %s243, 7 [#allocation0]
    %v245 = vld [vmem:[%s244] ss:$-1 sm:$0xff]
    %v246 = vrot.slane %v245, 1
    %247 = vst [vmem:[%s242] sm:$0xff] %v246
    %s248 = scalar_lea.vmem %s243, 8 [#allocation0]
    %s249 = scalar_lea.vmem %s248, 7 [#allocation0]
    %v250 = vld [vmem:[%s249] ss:$-1 sm:$0xff]
    %v251 = vrot.slane %v250, 1
    %v252 = vlaneseq
    %v253 = vshrl.u32 %v252, 7
    %vm254 = vcmp.lt.s32.totalorder %v253, 7
    %255 = vst.msk [vmem:[%s242] sm:$0xff] %vm254, %v251
    %s256 = scalar_lea.vmem [#allocation1], 56
    %s257 = scalar_lea.vmem [#allocation0], 112
    %s258 = scalar_lea.vmem %s257, 7 [#allocation0]
    %v259 = vld [vmem:[%s258] ss:$-1 sm:$0xff]
    %v260 = vrot.slane %v259, 1
    %261 = vst [vmem:[%s256] sm:$0xff] %v260
    %s262 = scalar_lea.vmem %s257, 8 [#allocation0]
    %s263 = scalar_lea.vmem %s262, 7 [#allocation0]
    %v264 = vld [vmem:[%s263] ss:$-1 sm:$0xff]
    %v265 = vrot.slane %v264, 1
    %v266 = vlaneseq
    %v267 = vshrl.u32 %v266, 7
    %vm268 = vcmp.lt.s32.totalorder %v267, 7
    %269 = vst.msk [vmem:[%s256] sm:$0xff] %vm268, %v265
    %s270 = scalar_lea.vmem [#allocation1], 64
    %s271 = scalar_lea.vmem [#allocation0], 128
    %s272 = scalar_lea.vmem %s271, 7 [#allocation0]
    %v273 = vld [vmem:[%s272] ss:$-1 sm:$0xff]
    %v274 = vrot.slane %v273, 1
    %275 = vst [vmem:[%s270] sm:$0xff] %v274
    %s276 = scalar_lea.vmem %s271, 8 [#allocation0]
    %s277 = scalar_lea.vmem %s276, 7 [#allocation0]
    %v278 = vld [vmem:[%s277] ss:$-1 sm:$0xff]
    %v279 = vrot.slane %v278, 1
    %v280 = vlaneseq
    %v281 = vshrl.u32 %v280, 7
    %vm282 = vcmp.lt.s32.totalorder %v281, 7
    %283 = vst.msk [vmem:[%s270] sm:$0xff] %vm282, %v279
    %s284 = scalar_lea.vmem [#allocation1], 72
    %s285 = scalar_lea.vmem [#allocation0], 144
    %s286 = scalar_lea.vmem %s285, 7 [#allocation0]
    %v287 = vld [vmem:[%s286] ss:$-1 sm:$0xff]
    %v288 = vrot.slane %v287, 1
    %289 = vst [vmem:[%s284] sm:$0xff] %v288
    %s290 = scalar_lea.vmem %s285, 8 [#allocation0]
    %s291 = scalar_lea.vmem %s290, 7 [#allocation0]
    %v292 = vld [vmem:[%s291] ss:$-1 sm:$0xff]
    %v293 = vrot.slane %v292, 1
    %v294 = vlaneseq
    %v295 = vshrl.u32 %v294, 7
    %vm296 = vcmp.lt.s32.totalorder %v295, 7
    %297 = vst.msk [vmem:[%s284] sm:$0xff] %vm296, %v293
    %s298 = scalar_lea.vmem [#allocation1], 80
    %s299 = scalar_lea.vmem [#allocation0], 160
    %s300 = scalar_lea.vmem %s299, 7 [#allocation0]
    %v301 = vld [vmem:[%s300] ss:$-1 sm:$0xff]
    %v302 = vrot.slane %v301, 1
    %303 = vst [vmem:[%s298] sm:$0xff] %v302
    %s304 = scalar_lea.vmem %s299, 8 [#allocation0]
    %s305 = scalar_lea.vmem %s304, 7 [#allocation0]
    %v306 = vld [vmem:[%s305] ss:$-1 sm:$0xff]
    %v307 = vrot.slane %v306, 1
    %v308 = vlaneseq
    %v309 = vshrl.u32 %v308, 7
    %vm310 = vcmp.lt.s32.totalorder %v309, 7
    %311 = vst.msk [vmem:[%s298] sm:$0xff] %vm310, %v307
    %s312 = scalar_lea.vmem [#allocation1], 88
    %s313 = scalar_lea.vmem [#allocation0], 176
    %s314 = scalar_lea.vmem %s313, 7 [#allocation0]
    %v315 = vld [vmem:[%s314] ss:$-1 sm:$0xff]
    %v316 = vrot.slane %v315, 1
    %317 = vst [vmem:[%s312] sm:$0xff] %v316
    %s318 = scalar_lea.vmem %s313, 8 [#allocation0]
    %s319 = scalar_lea.vmem %s318, 7 [#allocation0]
    %v320 = vld [vmem:[%s319] ss:$-1 sm:$0xff]
    %v321 = vrot.slane %v320, 1
    %v322 = vlaneseq
    %v323 = vshrl.u32 %v322, 7
    %vm324 = vcmp.lt.s32.totalorder %v323, 7
    %325 = vst.msk [vmem:[%s312] sm:$0xff] %vm324, %v321
    %s326 = scalar_lea.vmem [#allocation1], 96
    %s327 = scalar_lea.vmem [#allocation0], 192
    %s328 = scalar_lea.vmem %s327, 7 [#allocation0]
    %v329 = vld [vmem:[%s328] ss:$-1 sm:$0xff]
    %v330 = vrot.slane %v329, 1
    %331 = vst [vmem:[%s326] sm:$0xff] %v330
    %s332 = scalar_lea.vmem %s327, 8 [#allocation0]
    %s333 = scalar_lea.vmem %s332, 7 [#allocation0]
    %v334 = vld [vmem:[%s333] ss:$-1 sm:$0xff]
    %v335 = vrot.slane %v334, 1
    %v336 = vlaneseq
    %v337 = vshrl.u32 %v336, 7
    %vm338 = vcmp.lt.s32.totalorder %v337, 7
    %339 = vst.msk [vmem:[%s326] sm:$0xff] %vm338, %v335
    %s340 = scalar_lea.vmem [#allocation1], 104
    %s341 = scalar_lea.vmem [#allocation0], 208
    %s342 = scalar_lea.vmem %s341, 7 [#allocation0]
    %v343 = vld [vmem:[%s342] ss:$-1 sm:$0xff]
    %v344 = vrot.slane %v343, 1
    %345 = vst [vmem:[%s340] sm:$0xff] %v344
    %s346 = scalar_lea.vmem %s341, 8 [#allocation0]
    %s347 = scalar_lea.vmem %s346, 7 [#allocation0]
    %v348 = vld [vmem:[%s347] ss:$-1 sm:$0xff]
    %v349 = vrot.slane %v348, 1
    %v350 = vlaneseq
    %v351 = vshrl.u32 %v350, 7
    %vm352 = vcmp.lt.s32.totalorder %v351, 7
    %353 = vst.msk [vmem:[%s340] sm:$0xff] %vm352, %v349
    %s354 = scalar_lea.vmem [#allocation1], 112
    %s355 = scalar_lea.vmem [#allocation0], 224
    %s356 = scalar_lea.vmem %s355, 7 [#allocation0]
    %v357 = vld [vmem:[%s356] ss:$-1 sm:$0xff]
    %v358 = vrot.slane %v357, 1
    %359 = vst [vmem:[%s354] sm:$0xff] %v358
    %s360 = scalar_lea.vmem %s355, 8 [#allocation0]
    %s361 = scalar_lea.vmem %s360, 7 [#allocation0]
    %v362 = vld [vmem:[%s361] ss:$-1 sm:$0xff]
    %v363 = vrot.slane %v362, 1
    %v364 = vlaneseq
    %v365 = vshrl.u32 %v364, 7
    %vm366 = vcmp.lt.s32.totalorder %v365, 7
    %367 = vst.msk [vmem:[%s354] sm:$0xff] %vm366, %v363
    %s368 = scalar_lea.vmem [#allocation1], 120
    %s369 = scalar_lea.vmem [#allocation0], 240
    %s370 = scalar_lea.vmem %s369, 7 [#allocation0]
    %v371 = vld [vmem:[%s370] ss:$-1 sm:$0xff]
    %v372 = vrot.slane %v371, 1
    %373 = vst [vmem:[%s368] sm:$0xff] %v372
    %s374 = scalar_lea.vmem %s369, 8 [#allocation0]
    %s375 = scalar_lea.vmem %s374, 7 [#allocation0]
    %v376 = vld [vmem:[%s375] ss:$-1 sm:$0xff]
    %v377 = vrot.slane %v376, 1
    %v378 = vlaneseq
    %v379 = vshrl.u32 %v378, 7
    %vm380 = vcmp.lt.s32.totalorder %v379, 7
    %381 = vst.msk [vmem:[%s368] sm:$0xff] %vm380, %v377
    %s382 = scalar_lea.vmem [#allocation1], 128
    %s383 = scalar_lea.vmem [#allocation0], 256
    %s384 = scalar_lea.vmem %s383, 7 [#allocation0]
    %v385 = vld [vmem:[%s384] ss:$-1 sm:$0xff]
    %v386 = vrot.slane %v385, 1
    %387 = vst [vmem:[%s382] sm:$0xff] %v386
    %s388 = scalar_lea.vmem %s383, 8 [#allocation0]
    %s389 = scalar_lea.vmem %s388, 7 [#allocation0]
    %v390 = vld [vmem:[%s389] ss:$-1 sm:$0xff]
    %v391 = vrot.slane %v390, 1
    %v392 = vlaneseq
    %v393 = vshrl.u32 %v392, 7
    %vm394 = vcmp.lt.s32.totalorder %v393, 7
    %395 = vst.msk [vmem:[%s382] sm:$0xff] %vm394, %v391
    %s396 = scalar_lea.vmem [#allocation1], 136
    %s397 = scalar_lea.vmem [#allocation0], 272
    %s398 = scalar_lea.vmem %s397, 7 [#allocation0]
    %v399 = vld [vmem:[%s398] ss:$-1 sm:$0xff]
    %v400 = vrot.slane %v399, 1
    %401 = vst [vmem:[%s396] sm:$0xff] %v400
    %s402 = scalar_lea.vmem %s397, 8 [#allocation0]
    %s403 = scalar_lea.vmem %s402, 7 [#allocation0]
    %v404 = vld [vmem:[%s403] ss:$-1 sm:$0xff]
    %v405 = vrot.slane %v404, 1
    %v406 = vlaneseq
    %v407 = vshrl.u32 %v406, 7
    %vm408 = vcmp.lt.s32.totalorder %v407, 7
    %409 = vst.msk [vmem:[%s396] sm:$0xff] %vm408, %v405
    %s410 = scalar_lea.vmem [#allocation1], 144
    %s411 = scalar_lea.vmem [#allocation0], 288
    %s412 = scalar_lea.vmem %s411, 7 [#allocation0]
    %v413 = vld [vmem:[%s412] ss:$-1 sm:$0xff]
    %v414 = vrot.slane %v413, 1
    %415 = vst [vmem:[%s410] sm:$0xff] %v414
    %s416 = scalar_lea.vmem %s411, 8 [#allocation0]
    %s417 = scalar_lea.vmem %s416, 7 [#allocation0]
    %v418 = vld [vmem:[%s417] ss:$-1 sm:$0xff]
    %v419 = vrot.slane %v418, 1
    %v420 = vlaneseq
    %v421 = vshrl.u32 %v420, 7
    %vm422 = vcmp.lt.s32.totalorder %v421, 7
    %423 = vst.msk [vmem:[%s410] sm:$0xff] %vm422, %v419
    %s424 = scalar_lea.vmem [#allocation1], 152
    %s425 = scalar_lea.vmem [#allocation0], 304
    %s426 = scalar_lea.vmem %s425, 7 [#allocation0]
    %v427 = vld [vmem:[%s426] ss:$-1 sm:$0xff]
    %v428 = vrot.slane %v427, 1
    %429 = vst [vmem:[%s424] sm:$0xff] %v428
    %s430 = scalar_lea.vmem %s425, 8 [#allocation0]
    %s431 = scalar_lea.vmem %s430, 7 [#allocation0]
    %v432 = vld [vmem:[%s431] ss:$-1 sm:$0xff]
    %v433 = vrot.slane %v432, 1
    %v434 = vlaneseq
    %v435 = vshrl.u32 %v434, 7
    %vm436 = vcmp.lt.s32.totalorder %v435, 7
    %437 = vst.msk [vmem:[%s424] sm:$0xff] %vm436, %v433
    %s438 = scalar_lea.vmem [#allocation1], 160
    %s439 = scalar_lea.vmem [#allocation0], 320
    %s440 = scalar_lea.vmem %s439, 7 [#allocation0]
    %v441 = vld [vmem:[%s440] ss:$-1 sm:$0xff]
    %v442 = vrot.slane %v441, 1
    %443 = vst [vmem:[%s438] sm:$0xff] %v442
    %s444 = scalar_lea.vmem %s439, 8 [#allocation0]
    %s445 = scalar_lea.vmem %s444, 7 [#allocation0]
    %v446 = vld [vmem:[%s445] ss:$-1 sm:$0xff]
    %v447 = vrot.slane %v446, 1
    %v448 = vlaneseq
    %v449 = vshrl.u32 %v448, 7
    %vm450 = vcmp.lt.s32.totalorder %v449, 7
    %451 = vst.msk [vmem:[%s438] sm:$0xff] %vm450, %v447
    %s452 = scalar_lea.vmem [#allocation1], 168
    %s453 = scalar_lea.vmem [#allocation0], 336
    %s454 = scalar_lea.vmem %s453, 7 [#allocation0]
    %v455 = vld [vmem:[%s454] ss:$-1 sm:$0xff]
    %v456 = vrot.slane %v455, 1
    %457 = vst [vmem:[%s452] sm:$0xff] %v456
    %s458 = scalar_lea.vmem %s453, 8 [#allocation0]
    %s459 = scalar_lea.vmem %s458, 7 [#allocation0]
    %v460 = vld [vmem:[%s459] ss:$-1 sm:$0xff]
    %v461 = vrot.slane %v460, 1
    %v462 = vlaneseq
    %v463 = vshrl.u32 %v462, 7
    %vm464 = vcmp.lt.s32.totalorder %v463, 7
    %465 = vst.msk [vmem:[%s452] sm:$0xff] %vm464, %v461
    %s466 = scalar_lea.vmem [#allocation1], 176
    %s467 = scalar_lea.vmem [#allocation0], 352
    %s468 = scalar_lea.vmem %s467, 7 [#allocation0]
    %v469 = vld [vmem:[%s468] ss:$-1 sm:$0xff]
    %v470 = vrot.slane %v469, 1
    %471 = vst [vmem:[%s466] sm:$0xff] %v470
    %s472 = scalar_lea.vmem %s467, 8 [#allocation0]
    %s473 = scalar_lea.vmem %s472, 7 [#allocation0]
    %v474 = vld [vmem:[%s473] ss:$-1 sm:$0xff]
    %v475 = vrot.slane %v474, 1
    %v476 = vlaneseq
    %v477 = vshrl.u32 %v476, 7
    %vm478 = vcmp.lt.s32.totalorder %v477, 7
    %479 = vst.msk [vmem:[%s466] sm:$0xff] %vm478, %v475
    %s480 = scalar_lea.vmem [#allocation1], 184
    %s481 = scalar_lea.vmem [#allocation0], 368
    %s482 = scalar_lea.vmem %s481, 7 [#allocation0]
    %v483 = vld [vmem:[%s482] ss:$-1 sm:$0xff]
    %v484 = vrot.slane %v483, 1
    %485 = vst [vmem:[%s480] sm:$0xff] %v484
    %s486 = scalar_lea.vmem %s481, 8 [#allocation0]
    %s487 = scalar_lea.vmem %s486, 7 [#allocation0]
    %v488 = vld [vmem:[%s487] ss:$-1 sm:$0xff]
    %v489 = vrot.slane %v488, 1
    %v490 = vlaneseq
    %v491 = vshrl.u32 %v490, 7
    %vm492 = vcmp.lt.s32.totalorder %v491, 7
    %493 = vst.msk [vmem:[%s480] sm:$0xff] %vm492, %v489
    %s494 = scalar_lea.vmem [#allocation1], 192
    %s495 = scalar_lea.vmem [#allocation0], 384
    %s496 = scalar_lea.vmem %s495, 7 [#allocation0]
    %v497 = vld [vmem:[%s496] ss:$-1 sm:$0xff]
    %v498 = vrot.slane %v497, 1
    %499 = vst [vmem:[%s494] sm:$0xff] %v498
    %s500 = scalar_lea.vmem %s495, 8 [#allocation0]
    %s501 = scalar_lea.vmem %s500, 7 [#allocation0]
    %v502 = vld [vmem:[%s501] ss:$-1 sm:$0xff]
    %v503 = vrot.slane %v502, 1
    %v504 = vlaneseq
    %v505 = vshrl.u32 %v504, 7
    %vm506 = vcmp.lt.s32.totalorder %v505, 7
    %507 = vst.msk [vmem:[%s494] sm:$0xff] %vm506, %v503
    %s508 = scalar_lea.vmem [#allocation1], 200
    %s509 = scalar_lea.vmem [#allocation0], 400
    %s510 = scalar_lea.vmem %s509, 7 [#allocation0]
    %v511 = vld [vmem:[%s510] ss:$-1 sm:$0xff]
    %v512 = vrot.slane %v511, 1
    %513 = vst [vmem:[%s508] sm:$0xff] %v512
    %s514 = scalar_lea.vmem %s509, 8 [#allocation0]
    %s515 = scalar_lea.vmem %s514, 7 [#allocation0]
    %v516 = vld [vmem:[%s515] ss:$-1 sm:$0xff]
    %v517 = vrot.slane %v516, 1
    %v518 = vlaneseq
    %v519 = vshrl.u32 %v518, 7
    %vm520 = vcmp.lt.s32.totalorder %v519, 7
    %521 = vst.msk [vmem:[%s508] sm:$0xff] %vm520, %v517
    %s522 = scalar_lea.vmem [#allocation1], 208
    %s523 = scalar_lea.vmem [#allocation0], 416
    %s524 = scalar_lea.vmem %s523, 7 [#allocation0]
    %v525 = vld [vmem:[%s524] ss:$-1 sm:$0xff]
    %v526 = vrot.slane %v525, 1
    %527 = vst [vmem:[%s522] sm:$0xff] %v526
    %s528 = scalar_lea.vmem %s523, 8 [#allocation0]
    %s529 = scalar_lea.vmem %s528, 7 [#allocation0]
    %v530 = vld [vmem:[%s529] ss:$-1 sm:$0xff]
    %v531 = vrot.slane %v530, 1
    %v532 = vlaneseq
    %v533 = vshrl.u32 %v532, 7
    %vm534 = vcmp.lt.s32.totalorder %v533, 7
    %535 = vst.msk [vmem:[%s522] sm:$0xff] %vm534, %v531
    %s536 = scalar_lea.vmem [#allocation1], 216
    %s537 = scalar_lea.vmem [#allocation0], 432
    %s538 = scalar_lea.vmem %s537, 7 [#allocation0]
    %v539 = vld [vmem:[%s538] ss:$-1 sm:$0xff]
    %v540 = vrot.slane %v539, 1
    %541 = vst [vmem:[%s536] sm:$0xff] %v540
    %s542 = scalar_lea.vmem %s537, 8 [#allocation0]
    %s543 = scalar_lea.vmem %s542, 7 [#allocation0]
    %v544 = vld [vmem:[%s543] ss:$-1 sm:$0xff]
    %v545 = vrot.slane %v544, 1
    %v546 = vlaneseq
    %v547 = vshrl.u32 %v546, 7
    %vm548 = vcmp.lt.s32.totalorder %v547, 7
    %549 = vst.msk [vmem:[%s536] sm:$0xff] %vm548, %v545
    %s550 = scalar_lea.vmem [#allocation1], 224
    %s551 = scalar_lea.vmem [#allocation0], 448
    %s552 = scalar_lea.vmem %s551, 7 [#allocation0]
    %v553 = vld [vmem:[%s552] ss:$-1 sm:$0xff]
    %v554 = vrot.slane %v553, 1
    %555 = vst [vmem:[%s550] sm:$0xff] %v554
    %s556 = scalar_lea.vmem %s551, 8 [#allocation0]
    %s557 = scalar_lea.vmem %s556, 7 [#allocation0]
    %v558 = vld [vmem:[%s557] ss:$-1 sm:$0xff]
    %v559 = vrot.slane %v558, 1
    %v560 = vlaneseq
    %v561 = vshrl.u32 %v560, 7
    %vm562 = vcmp.lt.s32.totalorder %v561, 7
    %563 = vst.msk [vmem:[%s550] sm:$0xff] %vm562, %v559
    %s564 = scalar_lea.vmem [#allocation1], 232
    %s565 = scalar_lea.vmem [#allocation0], 464
    %s566 = scalar_lea.vmem %s565, 7 [#allocation0]
    %v567 = vld [vmem:[%s566] ss:$-1 sm:$0xff]
    %v568 = vrot.slane %v567, 1
    %569 = vst [vmem:[%s564] sm:$0xff] %v568
    %s570 = scalar_lea.vmem %s565, 8 [#allocation0]
    %s571 = scalar_lea.vmem %s570, 7 [#allocation0]
    %v572 = vld [vmem:[%s571] ss:$-1 sm:$0xff]
    %v573 = vrot.slane %v572, 1
    %v574 = vlaneseq
    %v575 = vshrl.u32 %v574, 7
    %vm576 = vcmp.lt.s32.totalorder %v575, 7
    %577 = vst.msk [vmem:[%s564] sm:$0xff] %vm576, %v573
    %s578 = scalar_lea.vmem [#allocation1], 240
    %s579 = scalar_lea.vmem [#allocation0], 480
    %s580 = scalar_lea.vmem %s579, 7 [#allocation0]
    %v581 = vld [vmem:[%s580] ss:$-1 sm:$0xff]
    %v582 = vrot.slane %v581, 1
    %583 = vst [vmem:[%s578] sm:$0xff] %v582
    %s584 = scalar_lea.vmem %s579, 8 [#allocation0]
    %s585 = scalar_lea.vmem %s584, 7 [#allocation0]
    %v586 = vld [vmem:[%s585] ss:$-1 sm:$0xff]
    %v587 = vrot.slane %v586, 1
    %v588 = vlaneseq
    %v589 = vshrl.u32 %v588, 7
    %vm590 = vcmp.lt.s32.totalorder %v589, 7
    %591 = vst.msk [vmem:[%s578] sm:$0xff] %vm590, %v587
    %s592 = scalar_lea.vmem [#allocation1], 248
    %s593 = scalar_lea.vmem [#allocation0], 496
    %s594 = scalar_lea.vmem %s593, 7 [#allocation0]
    %v595 = vld [vmem:[%s594] ss:$-1 sm:$0xff]
    %v596 = vrot.slane %v595, 1
    %597 = vst [vmem:[%s592] sm:$0xff] %v596
    %s598 = scalar_lea.vmem %s593, 8 [#allocation0]
    %s599 = scalar_lea.vmem %s598, 7 [#allocation0]
    %v600 = vld [vmem:[%s599] ss:$-1 sm:$0xff]
    %v601 = vrot.slane %v600, 1
    %v602 = vlaneseq
    %v603 = vshrl.u32 %v602, 7
    %vm604 = vcmp.lt.s32.totalorder %v603, 7
    %605 = vst.msk [vmem:[%s592] sm:$0xff] %vm604, %v601
    // Predicated region
    $region36: #{reverse.9} parent=1 // pred_check
      _
    $region37: #{reverse.9} parent=1 // pred_check_branch
      %607 = sbr.rel (0) target = $region39
    $region38: #{reverse.9} parent=1 // pred_region
      // Predicated region
      $region40: #{reverse.9} parent=38 // pred_check
        _
      $region41: #{reverse.9} parent=38 // pred_check_branch
        %609 = sbr.rel (0) target = $region43
      $region42: #{reverse.9} parent=38 // pred_region
        // Predicated region
        $region55: #{reverse.9} parent=42 // pred_check
          _
        $region56: #{reverse.9} parent=42 // pred_check_branch
          %687 = sbr.rel (0) target = $region58
        $region57: #{reverse.9} parent=42 // pred_region
          loop: start=0, step=1, limit=1
          $region59: #{reverse.9} parent=57 // loop_pre_header
            _
          $region60: #{reverse.9} parent=57 // loop_header
            %s689 = sphi 0, %s693
            %p690 = scmp.ge.s32.totalorder %s689, 1
            %s694 = sphi [#allocation1], [#allocation1]
            %s695 = sphi %s1, %s1
          $region61: #{reverse.9} parent=57 // loop_header_branch
            %692 = sbr.rel (%p690) target = $region65
          $region62: #{reverse.9} parent=57 // loop_body
            %v696 = vld [vmem:[%s694] sm:$0xff]
            %697 = vst [vmem:[%s695] sm:$0xff] %v696
            %v698 = vld [vmem:[%s694 + $0x8] sm:$0xff]
            %699 = vst [vmem:[%s695 + $0x8] sm:$0xff] %v698
            %v700 = vld [vmem:[%s694 + $0x10] sm:$0xff]
            %701 = vst [vmem:[%s695 + $0x10] sm:$0xff] %v700
            %v702 = vld [vmem:[%s694 + $0x18] sm:$0xff]
            %703 = vst [vmem:[%s695 + $0x18] sm:$0xff] %v702
            %v704 = vld [vmem:[%s694 + $0x20] sm:$0xff]
            %705 = vst [vmem:[%s695 + $0x20] sm:$0xff] %v704
            %v706 = vld [vmem:[%s694 + $0x28] sm:$0xff]
            %707 = vst [vmem:[%s695 + $0x28] sm:$0xff] %v706
            %v708 = vld [vmem:[%s694 + $0x30] sm:$0xff]
            %709 = vst [vmem:[%s695 + $0x30] sm:$0xff] %v708
            %v710 = vld [vmem:[%s694 + $0x38] sm:$0xff]
            %711 = vst [vmem:[%s695 + $0x38] sm:$0xff] %v710
            %v712 = vld [vmem:[%s694 + $0x40] sm:$0xff]
            %713 = vst [vmem:[%s695 + $0x40] sm:$0xff] %v712
            %v714 = vld [vmem:[%s694 + $0x48] sm:$0xff]
            %715 = vst [vmem:[%s695 + $0x48] sm:$0xff] %v714
            %v716 = vld [vmem:[%s694 + $0x50] sm:$0xff]
            %717 = vst [vmem:[%s695 + $0x50] sm:$0xff] %v716
            %v718 = vld [vmem:[%s694 + $0x58] sm:$0xff]
            %719 = vst [vmem:[%s695 + $0x58] sm:$0xff] %v718
            %v720 = vld [vmem:[%s694 + $0x60] sm:$0xff]
            %721 = vst [vmem:[%s695 + $0x60] sm:$0xff] %v720
            %v722 = vld [vmem:[%s694 + $0x68] sm:$0xff]
            %723 = vst [vmem:[%s695 + $0x68] sm:$0xff] %v722
            %v724 = vld [vmem:[%s694 + $0x70] sm:$0xff]
            %725 = vst [vmem:[%s695 + $0x70] sm:$0xff] %v724
            %v726 = vld [vmem:[%s694 + $0x78] sm:$0xff]
            %727 = vst [vmem:[%s695 + $0x78] sm:$0xff] %v726
            %v728 = vld [vmem:[%s694 + $0x80] sm:$0xff]
            %729 = vst [vmem:[%s695 + $0x80] sm:$0xff] %v728
            %v730 = vld [vmem:[%s694 + $0x88] sm:$0xff]
            %731 = vst [vmem:[%s695 + $0x88] sm:$0xff] %v730
            %v732 = vld [vmem:[%s694 + $0x90] sm:$0xff]
            %733 = vst [vmem:[%s695 + $0x90] sm:$0xff] %v732
            %v734 = vld [vmem:[%s694 + $0x98] sm:$0xff]
            %735 = vst [vmem:[%s695 + $0x98] sm:$0xff] %v734
            %v736 = vld [vmem:[%s694 + $0xa0] sm:$0xff]
            %737 = vst [vmem:[%s695 + $0xa0] sm:$0xff] %v736
            %v738 = vld [vmem:[%s694 + $0xa8] sm:$0xff]
            %739 = vst [vmem:[%s695 + $0xa8] sm:$0xff] %v738
            %v740 = vld [vmem:[%s694 + $0xb0] sm:$0xff]
            %741 = vst [vmem:[%s695 + $0xb0] sm:$0xff] %v740
            %v742 = vld [vmem:[%s694 + $0xb8] sm:$0xff]
            %743 = vst [vmem:[%s695 + $0xb8] sm:$0xff] %v742
            %v744 = vld [vmem:[%s694 + $0xc0] sm:$0xff]
            %745 = vst [vmem:[%s695 + $0xc0] sm:$0xff] %v744
            %v746 = vld [vmem:[%s694 + $0xc8] sm:$0xff]
            %747 = vst [vmem:[%s695 + $0xc8] sm:$0xff] %v746
            %v748 = vld [vmem:[%s694 + $0xd0] sm:$0xff]
            %749 = vst [vmem:[%s695 + $0xd0] sm:$0xff] %v748
            %v750 = vld [vmem:[%s694 + $0xd8] sm:$0xff]
            %751 = vst [vmem:[%s695 + $0xd8] sm:$0xff] %v750
            %v752 = vld [vmem:[%s694 + $0xe0] sm:$0xff]
            %753 = vst [vmem:[%s695 + $0xe0] sm:$0xff] %v752
            %v754 = vld [vmem:[%s694 + $0xe8] sm:$0xff]
            %755 = vst [vmem:[%s695 + $0xe8] sm:$0xff] %v754
            %v756 = vld [vmem:[%s694 + $0xf0] sm:$0xff]
            %757 = vst [vmem:[%s695 + $0xf0] sm:$0xff] %v756
            %v758 = vld [vmem:[%s694 + $0xf8] sm:$0xff]
            %759 = vst [vmem:[%s695 + $0xf8] sm:$0xff] %v758
          $region63: #{reverse.9} parent=57 // loop_footer
            %s693 = sadd.s32 1, %s689
          $region64: #{reverse.9} parent=57 // loop_footer_branch
            %688 = sbr.rel target = $region60
          $region65: #{reverse.9} parent=57 // loop_exit
            _
        $region58: #{reverse.9} parent=42 // pred_fallthru
          _
        // Predicated region
        $region66: #{reverse.9} parent=42 // pred_check
          _
        $region67: #{reverse.9} parent=42 // pred_check_branch
          %761 = sbr.rel target = $region69
        $region68: #{reverse.9} parent=42 // pred_region
          _
        $region69: #{reverse.9} parent=42 // pred_fallthru
          _
      $region43: #{reverse.9} parent=38 // pred_fallthru
        _
      // Predicated region
      $region44: #{reverse.9} parent=38 // pred_check
        _
      $region45: #{reverse.9} parent=38 // pred_check_branch
        %611 = sbr.rel target = $region47
      $region46: #{reverse.9} parent=38 // pred_region
        %s613 = ssub.s32 256, 1
        loop: start=0, step=1, limit=1
        $region48: #{reverse.9} parent=46 // loop_pre_header
          _
        $region49: #{reverse.9} parent=46 // loop_header
          %s615 = sphi 0, %s619
          %p616 = scmp.ge.s32.totalorder %s615, 1
          %s620 = sphi [#allocation1], [#allocation1]
          %s621 = sphi %s1, %s1
        $region50: #{reverse.9} parent=46 // loop_header_branch
          %618 = sbr.rel (%p616) target = $region54
        $region51: #{reverse.9} parent=46 // loop_body
          %v622 = vld [vmem:[%s620] sm:%s613]
          %623 = vst [vmem:[%s621] sm:%s613] %v622
          %v624 = vld [vmem:[%s620 + $0x8] sm:%s613]
          %625 = vst [vmem:[%s621 + $0x8] sm:%s613] %v624
          %v626 = vld [vmem:[%s620 + $0x10] sm:%s613]
          %627 = vst [vmem:[%s621 + $0x10] sm:%s613] %v626
          %v628 = vld [vmem:[%s620 + $0x18] sm:%s613]
          %629 = vst [vmem:[%s621 + $0x18] sm:%s613] %v628
          %v630 = vld [vmem:[%s620 + $0x20] sm:%s613]
          %631 = vst [vmem:[%s621 + $0x20] sm:%s613] %v630
          %v632 = vld [vmem:[%s620 + $0x28] sm:%s613]
          %633 = vst [vmem:[%s621 + $0x28] sm:%s613] %v632
          %v634 = vld [vmem:[%s620 + $0x30] sm:%s613]
          %635 = vst [vmem:[%s621 + $0x30] sm:%s613] %v634
          %v636 = vld [vmem:[%s620 + $0x38] sm:%s613]
          %637 = vst [vmem:[%s621 + $0x38] sm:%s613] %v636
          %v638 = vld [vmem:[%s620 + $0x40] sm:%s613]
          %639 = vst [vmem:[%s621 + $0x40] sm:%s613] %v638
          %v640 = vld [vmem:[%s620 + $0x48] sm:%s613]
          %641 = vst [vmem:[%s621 + $0x48] sm:%s613] %v640
          %v642 = vld [vmem:[%s620 + $0x50] sm:%s613]
          %643 = vst [vmem:[%s621 + $0x50] sm:%s613] %v642
          %v644 = vld [vmem:[%s620 + $0x58] sm:%s613]
          %645 = vst [vmem:[%s621 + $0x58] sm:%s613] %v644
          %v646 = vld [vmem:[%s620 + $0x60] sm:%s613]
          %647 = vst [vmem:[%s621 + $0x60] sm:%s613] %v646
          %v648 = vld [vmem:[%s620 + $0x68] sm:%s613]
          %649 = vst [vmem:[%s621 + $0x68] sm:%s613] %v648
          %v650 = vld [vmem:[%s620 + $0x70] sm:%s613]
          %651 = vst [vmem:[%s621 + $0x70] sm:%s613] %v650
          %v652 = vld [vmem:[%s620 + $0x78] sm:%s613]
          %653 = vst [vmem:[%s621 + $0x78] sm:%s613] %v652
          %v654 = vld [vmem:[%s620 + $0x80] sm:%s613]
          %655 = vst [vmem:[%s621 + $0x80] sm:%s613] %v654
          %v656 = vld [vmem:[%s620 + $0x88] sm:%s613]
          %657 = vst [vmem:[%s621 + $0x88] sm:%s613] %v656
          %v658 = vld [vmem:[%s620 + $0x90] sm:%s613]
          %659 = vst [vmem:[%s621 + $0x90] sm:%s613] %v658
          %v660 = vld [vmem:[%s620 + $0x98] sm:%s613]
          %661 = vst [vmem:[%s621 + $0x98] sm:%s613] %v660
          %v662 = vld [vmem:[%s620 + $0xa0] sm:%s613]
          %663 = vst [vmem:[%s621 + $0xa0] sm:%s613] %v662
          %v664 = vld [vmem:[%s620 + $0xa8] sm:%s613]
          %665 = vst [vmem:[%s621 + $0xa8] sm:%s613] %v664
          %v666 = vld [vmem:[%s620 + $0xb0] sm:%s613]
          %667 = vst [vmem:[%s621 + $0xb0] sm:%s613] %v666
          %v668 = vld [vmem:[%s620 + $0xb8] sm:%s613]
          %669 = vst [vmem:[%s621 + $0xb8] sm:%s613] %v668
          %v670 = vld [vmem:[%s620 + $0xc0] sm:%s613]
          %671 = vst [vmem:[%s621 + $0xc0] sm:%s613] %v670
          %v672 = vld [vmem:[%s620 + $0xc8] sm:%s613]
          %673 = vst [vmem:[%s621 + $0xc8] sm:%s613] %v672
          %v674 = vld [vmem:[%s620 + $0xd0] sm:%s613]
          %675 = vst [vmem:[%s621 + $0xd0] sm:%s613] %v674
          %v676 = vld [vmem:[%s620 + $0xd8] sm:%s613]
          %677 = vst [vmem:[%s621 + $0xd8] sm:%s613] %v676
          %v678 = vld [vmem:[%s620 + $0xe0] sm:%s613]
          %679 = vst [vmem:[%s621 + $0xe0] sm:%s613] %v678
          %v680 = vld [vmem:[%s620 + $0xe8] sm:%s613]
          %681 = vst [vmem:[%s621 + $0xe8] sm:%s613] %v680
          %v682 = vld [vmem:[%s620 + $0xf0] sm:%s613]
          %683 = vst [vmem:[%s621 + $0xf0] sm:%s613] %v682
          %v684 = vld [vmem:[%s620 + $0xf8] sm:%s613]
          %685 = vst [vmem:[%s621 + $0xf8] sm:%s613] %v684
        $region52: #{reverse.9} parent=46 // loop_footer
          %s619 = sadd.s32 1, %s615
        $region53: #{reverse.9} parent=46 // loop_footer_branch
          %614 = sbr.rel target = $region49
        $region54: #{reverse.9} parent=46 // loop_exit
          _
      $region47: #{reverse.9} parent=38 // pred_fallthru
        _
    $region39: #{reverse.9} parent=1 // pred_fallthru
      _
    %762 = vnop

// kernel: gray_group_fno2d.12
$region0: #{gray_group_fno2d.12}
  #allocation0 [shape = 'u32[]', space=smem, size = 0x4, offset = 0x4, fixed_abs, tag = 'smem constant byte address 0x4 - core index']
  #allocation1 [shape = 'u32[144,128]{1,0:T(1,128)}', space=vmem, size = 0x12000, scoped, tag = 'internal scratch']
  %s0 = inlined_call_operand.vmem [shape: f32[8,1024], index: 0, kind: input, shape index: {}, may-alias: {0,4}]
  %s1 = inlined_call_operand.vmem [shape: f32[8,8], index: 1, kind: input, shape index: {}]
  %s2 = inlined_call_operand.vmem [shape: f32[8,1], index: 2, kind: input, shape index: {}]
  %s3 = inlined_call_operand.vmem [shape: f32[8,1024], index: 3, kind: input, shape index: {}]
  %s4 = inlined_call_operand.vmem [shape: f32[8,1024], index: 4, kind: output, shape index: {}, may-alias: {0,4}]
  %s5 = sld [smem:[#allocation0]]
  $region49: #{gray_group_fno2d.12} parent=0
    _
  %s7 = ssub.s32 1, %s5
  %s8 = scalar_select 0, %s7, %s5
  loop: start=0, step=1, limit=6
  $region2: #{gray_group_fno2d.12} parent=0 // loop_pre_header
    _
  $region3: #{gray_group_fno2d.12} parent=0 // loop_header
    %s10 = sphi 0, %s14
    %p11 = scmp.ge.s32.totalorder %s10, 6
    %s20 = sphi 0, %s22
    %s23 = sphi 0, %s20
    %s24 = sphi 0, %s23
    %s40 = sphi 0, %s24
    %s44 = sphi 0, %s44
    %s46 = sphi 0, %s44
    %s47 = sphi 0, %s46
    %s61 = sphi 0, %s47
    %s65 = sphi 0, %s65
    %s67 = sphi 0, %s65
    %s68 = sphi 0, %s67
    %s82 = sphi 0, %s68
    %s88 = sphi 0, %s90
    %s91 = sphi 0, %s88
    %s92 = sphi 0, %s91
    %s108 = sphi 0, %s92
    %s114 = sphi 0, %s116
    %s117 = sphi 0, %s114
    %s118 = sphi 0, %s117
    %s134 = sphi 0, %s118
  $region4: #{gray_group_fno2d.12} parent=0 // loop_header_branch
    %13 = sbr.rel (%p11) target = $region8
  $region5: #{gray_group_fno2d.12} parent=0 // loop_body
    %s15 = ssub.s32 %s10, 1
    %s16 = ssub.s32 %s10, 2
    %s17 = sadd.s32 %s10, 1
    %s18 = ssub.s32 %s10, %s17
    %p19 = scmp.eq.s32.totalorder %s18, 0
    %s21 = sadd.s32 %s20, 1
    %s22 = scalar_select %p19, %s20, %s21
    %p25 = pneg %p19
    %p26 = scmp.eq.s32.totalorder %s10, 3
    %p27 = por %p25, %p26
    %p28 = scmp.ne.s32.totalorder %s20, %s23
    %p29 = scmp.eq.s32.totalorder %s10, 0
    %p30 = por %p28, %p29
    %p31 = scmp.ne.s32.totalorder %s20, %s23
    %p32 = scmp.eq.s32.totalorder %s15, 3
    %p33 = por %p31, %p32
    %p34 = scmp.ne.s32.totalorder %s23, %s24
    %p35 = scmp.eq.s32.totalorder %s15, 0
    %p36 = por %p34, %p35
    %p37 = scmp.ne.s32.totalorder %s23, %s24
    %p38 = scmp.eq.s32.totalorder %s16, 3
    %p39 = por %p37, %p38
    %p41 = scmp.ne.s32.totalorder %s24, %s40
    %p42 = scmp.eq.s32.totalorder %s16, 0
    %p43 = por %p41, %p42
    %s45 = sadd.s32 %s44, 1
    %p48 = scmp.eq.s32.totalorder %s10, 3
    %p49 = scmp.ne.s32.totalorder %s44, %s46
    %p50 = scmp.eq.s32.totalorder %s10, 0
    %p51 = por %p49, %p50
    %p52 = scmp.ne.s32.totalorder %s44, %s46
    %p53 = scmp.eq.s32.totalorder %s15, 3
    %p54 = por %p52, %p53
    %p55 = scmp.ne.s32.totalorder %s46, %s47
    %p56 = scmp.eq.s32.totalorder %s15, 0
    %p57 = por %p55, %p56
    %p58 = scmp.ne.s32.totalorder %s46, %s47
    %p59 = scmp.eq.s32.totalorder %s16, 3
    %p60 = por %p58, %p59
    %p62 = scmp.ne.s32.totalorder %s47, %s61
    %p63 = scmp.eq.s32.totalorder %s16, 0
    %p64 = por %p62, %p63
    %s66 = sadd.s32 %s65, 1
    %p69 = scmp.eq.s32.totalorder %s10, 3
    %p70 = scmp.ne.s32.totalorder %s65, %s67
    %p71 = scmp.eq.s32.totalorder %s10, 0
    %p72 = por %p70, %p71
    %p73 = scmp.ne.s32.totalorder %s65, %s67
    %p74 = scmp.eq.s32.totalorder %s15, 3
    %p75 = por %p73, %p74
    %p76 = scmp.ne.s32.totalorder %s67, %s68
    %p77 = scmp.eq.s32.totalorder %s15, 0
    %p78 = por %p76, %p77
    %p79 = scmp.ne.s32.totalorder %s67, %s68
    %p80 = scmp.eq.s32.totalorder %s16, 3
    %p81 = por %p79, %p80
    %p83 = scmp.ne.s32.totalorder %s68, %s82
    %p84 = scmp.eq.s32.totalorder %s16, 0
    %p85 = por %p83, %p84
    %s86 = ssub.s32 %s10, %s17
    %p87 = scmp.eq.s32.totalorder %s86, 0
    %s89 = sadd.s32 %s88, 1
    %s90 = scalar_select %p87, %s88, %s89
    %p93 = pneg %p87
    %p94 = scmp.eq.s32.totalorder %s10, 3
    %p95 = por %p93, %p94
    %p96 = scmp.ne.s32.totalorder %s88, %s91
    %p97 = scmp.eq.s32.totalorder %s10, 0
    %p98 = por %p96, %p97
    %p99 = scmp.ne.s32.totalorder %s88, %s91
    %p100 = scmp.eq.s32.totalorder %s15, 3
    %p101 = por %p99, %p100
    %p102 = scmp.ne.s32.totalorder %s91, %s92
    %p103 = scmp.eq.s32.totalorder %s15, 0
    %p104 = por %p102, %p103
    %p105 = scmp.ne.s32.totalorder %s91, %s92
    %p106 = scmp.eq.s32.totalorder %s16, 3
    %p107 = por %p105, %p106
    %p109 = scmp.ne.s32.totalorder %s92, %s108
    %p110 = scmp.eq.s32.totalorder %s16, 0
    %p111 = por %p109, %p110
    %s112 = ssub.s32 %s10, %s17
    %p113 = scmp.eq.s32.totalorder %s112, 0
    %s115 = sadd.s32 %s114, 1
    %s116 = scalar_select %p113, %s114, %s115
    %p119 = pneg %p113
    %p120 = scmp.eq.s32.totalorder %s10, 3
    %p121 = por %p119, %p120
    %p122 = scmp.ne.s32.totalorder %s114, %s117
    %p123 = scmp.eq.s32.totalorder %s10, 0
    %p124 = por %p122, %p123
    %p125 = scmp.ne.s32.totalorder %s114, %s117
    %p126 = scmp.eq.s32.totalorder %s15, 3
    %p127 = por %p125, %p126
    %p128 = scmp.ne.s32.totalorder %s117, %s118
    %p129 = scmp.eq.s32.totalorder %s15, 0
    %p130 = por %p128, %p129
    %p131 = scmp.ne.s32.totalorder %s117, %s118
    %p132 = scmp.eq.s32.totalorder %s16, 3
    %p133 = por %p131, %p132
    %p135 = scmp.ne.s32.totalorder %s118, %s134
    %p136 = scmp.eq.s32.totalorder %s16, 0
    %p137 = por %p135, %p136
    %p138 = scmp.le.s32.totalorder 1, %s10
    %p139 = scmp.lt.s32.totalorder %s10, 5
    %p140 = pnand %p138, %p139
    %p141 = pneg %p140
    // Predicated region
    $region9: #{gray_group_fno2d.12} parent=5 // pred_check
      _
    $region10: #{gray_group_fno2d.12} parent=5 // pred_check_branch
      %143 = sbr.rel (%p140) target = $region12
    $region11: #{gray_group_fno2d.12} parent=5 // pred_region
      %s144 = ssub.s32 %s10, 1
      // Predicated region
      $region13: #{gray_group_fno2d.12} parent=11 // pred_check
        %p145 = pneg %p57
      $region14: #{gray_group_fno2d.12} parent=11 // pred_check_branch
        %147 = sbr.rel (%p145) target = $region16
      $region15: #{gray_group_fno2d.12} parent=11 // pred_region
        _
      $region16: #{gray_group_fno2d.12} parent=11 // pred_fallthru
        _
      // Predicated region
      $region17: #{gray_group_fno2d.12} parent=11 // pred_check
        %p148 = pneg %p78
      $region18: #{gray_group_fno2d.12} parent=11 // pred_check_branch
        %150 = sbr.rel (%p148) target = $region20
      $region19: #{gray_group_fno2d.12} parent=11 // pred_region
        _
      $region20: #{gray_group_fno2d.12} parent=11 // pred_fallthru
        _
    $region12: #{gray_group_fno2d.12} parent=5 // pred_fallthru
      _
    %p151 = scmp.lt.s32.totalorder %s10, 4
    // Predicated region
    $region21: #{gray_group_fno2d.12} parent=5 // pred_check
      %p152 = pneg %p151
    $region22: #{gray_group_fno2d.12} parent=5 // pred_check_branch
      %154 = sbr.rel (%p152) target = $region24
    $region23: #{gray_group_fno2d.12} parent=5 // pred_region
      // Predicated region
      $region25: #{gray_group_fno2d.12} parent=23 // pred_check
        %p155 = pneg %p30
      $region26: #{gray_group_fno2d.12} parent=23 // pred_check_branch
        %157 = sbr.rel (%p155) target = $region28
      $region27: #{gray_group_fno2d.12} parent=23 // pred_region
        %s158 = smul.u32 2, %s10
        %p159 = scmp.lt.s32.totalorder %s158, 7
        %s160 = scalar_select %p159, %s158, 7
        %s161 = smul.addr %s160, 8
        %s162 = scalar_lea.vmem %s0, %s161
        %s163 = smul.u32 2, %s10
      $region28: #{gray_group_fno2d.12} parent=23 // pred_fallthru
        _
      // Predicated region
      $region29: #{gray_group_fno2d.12} parent=23 // pred_check
        %p164 = pneg %p98
      $region30: #{gray_group_fno2d.12} parent=23 // pred_check_branch
        %166 = sbr.rel (%p164) target = $region32
      $region31: #{gray_group_fno2d.12} parent=23 // pred_region
        %s167 = smul.u32 2, %s10
        %p168 = scmp.lt.s32.totalorder %s167, 7
        %s169 = scalar_select %p168, %s167, 7
        %s170 = smul.addr %s169, 8
        %s171 = scalar_lea.vmem %s3, %s170
        %s172 = smul.u32 2, %s10
      $region32: #{gray_group_fno2d.12} parent=23 // pred_fallthru
        _
    $region24: #{gray_group_fno2d.12} parent=5 // pred_fallthru
      _
    %p173 = scmp.le.s32.totalorder 1, %s10
    %p174 = scmp.lt.s32.totalorder %s10, 5
    %p175 = pnand %p173, %p174
    %p176 = pneg %p175
    // Predicated region
    $region33: #{gray_group_fno2d.12} parent=5 // pred_check
      _
    $region34: #{gray_group_fno2d.12} parent=5 // pred_check_branch
      %178 = sbr.rel (%p175) target = $region36
    $region35: #{gray_group_fno2d.12} parent=5 // pred_region
      %s179 = ssub.s32 %s10, 1
      %s180 = smul.u32 2, %s15
      %p181 = scmp.lt.s32.totalorder %s180, 7
      %s182 = scalar_select %p181, %s180, 7
      %s183 = smul.addr %s182, 8
      %s184 = scalar_lea.vmem %s0, %s183
      %p185 = pneg %p36
      %p186 = pneg %p33
      %p187 = pneg %p57
      %p188 = pneg %p54
      %p189 = pneg %p78
      %p190 = pneg %p75
      %s191 = smul.u32 2, %s15
      %p192 = scmp.lt.s32.totalorder %s191, 7
      %s193 = scalar_select %p192, %s191, 7
      %s194 = smul.addr %s193, 8
      %s195 = scalar_lea.vmem %s3, %s194
      %p196 = pneg %p104
      %p197 = pneg %p101
      %p198 = pneg %p130
      %p199 = pneg %p127
      %s200 = smul.u32 2, %s15
      %p201 = scmp.lt.s32.totalorder %s200, 7
      %s202 = scalar_select %p201, %s200, 7
      %s203 = smul.addr %s202, 8
      %s204 = scalar_lea.vmem %s4, %s203
      %s205 = smul.u32 2, %s15
      %p206 = scmp.lt.s32.totalorder %s205, 7
      %s207 = scalar_select %p206, %s205, 7
      %s208 = smul.addr %s207, 8
      %s209 = scalar_lea.vmem %s0, %s208
      %s210 = smul.u32 2, %s15
      %s211 = smul.u32 2, %s15
      %p212 = scmp.lt.s32.totalorder %s211, 7
      %s213 = scalar_select %p212, %s211, 7
      %s214 = smul.addr %s213, 8
      %s215 = scalar_lea.vmem %s3, %s214
      %s216 = smul.u32 2, %s15
      %s217 = smul.u32 2, %s15
      %p218 = scmp.lt.s32.totalorder %s217, 7
      %s219 = scalar_select %p218, %s217, 7
      %s220 = smul.addr %s219, 8
      %s221 = scalar_lea.vmem %s4, %s220
      %s222 = smul.u32 2, %s15
      %v223 = vld [vmem:[%s209] sm:$0xff]
      %v224 = vld [vmem:[%s209 + $0x8] sm:$0xff]
      %v225 = vld [vmem:[%s1] sm:$0xff]
      %v226 = vld [vmem:[%s2] sm:$0xff]
      %228 = vset.pattern.permute.xlu0 0
      %229 = vperm.xlu0 %228, %v226
      %v230 = vpop.permute.xlu0 %229
      %vm232 = vcmask 64512
      %v234 = vsel %vm232, %v225, 0
      %236 = vmatprep.subr.mxu0 0.0
      %237 = vmatpush1.msra.mxu0 0.0
      %238 = vmatprep.subr.mxu0 0.0
      %239 = vmatpush1.msra.mxu0 0.0
      %240 = vmatprep.subr.mxu0 0.0
      %241 = vmatpush1.msra.mxu0 0.0
      %242 = vmatprep.subr.mxu0 0.0
      %243 = vmatpush1.msra.mxu0 0.0
      %244 = vmatprep.subr.mxu0 0.0
      %245 = vmatpush1.msra.mxu0 0.0
      %246 = vmatprep.subr.mxu0 0.0
      %247 = vmatpush1.msra.mxu0 0.0
      %248 = vmatprep.subr.mxu0 0.0
      %249 = vmatpush1.msra.mxu0 0.0
      %250 = vmatprep.subr.mxu0 0.0
      %251 = vmatpush1.msra.mxu0 0.0
      %252 = vmatprep.subr.mxu0 0.0
      %253 = vmatpush1.msra.mxu0 0.0
      %254 = vmatprep.subr.mxu0 0.0
      %255 = vmatpush1.msra.mxu0 0.0
      %256 = vmatprep.subr.mxu0 0.0
      %257 = vmatpush1.msra.mxu0 0.0
      %258 = vmatprep.subr.mxu0 0.0
      %259 = vmatpush1.msra.mxu0 0.0
      %260 = vmatprep.subr.mxu0 0.0
      %261 = vmatpush1.msra.mxu0 0.0
      %262 = vmatprep.subr.mxu0 0.0
      %263 = vmatpush1.msra.mxu0 0.0
      %264 = vmatprep.subr.mxu0 0.0
      %265 = vmatpush1.msra.mxu0 0.0
      %266 = vmatprep.subr.mxu0 %v224
      %267 = vmatpush1.msra.mxu0 %v223
      %268 = vmatprep.subr.mxu0 0.0
      %269 = vmatpush2.msra.mxu0 0.0
      %270 = vmatprep.subr.mxu0 0.0
      %271 = vmatpush2.msra.mxu0 0.0
      %272 = vmatprep.subr.mxu0 0.0
      %273 = vmatpush2.msra.mxu0 0.0
      %274 = vmatprep.subr.mxu0 0.0
      %275 = vmatpush2.msra.mxu0 0.0
      %276 = vmatprep.subr.mxu0 0.0
      %277 = vmatpush2.msra.mxu0 0.0
      %278 = vmatprep.subr.mxu0 0.0
      %279 = vmatpush2.msra.mxu0 0.0
      %280 = vmatprep.subr.mxu0 0.0
      %281 = vmatpush2.msra.mxu0 0.0
      %282 = vmatprep.subr.mxu0 0.0
      %283 = vmatpush2.msra.mxu0 0.0
      %284 = vmatprep.subr.mxu0 0.0
      %285 = vmatpush2.msra.mxu0 0.0
      %286 = vmatprep.subr.mxu0 0.0
      %287 = vmatpush2.msra.mxu0 0.0
      %288 = vmatprep.subr.mxu0 0.0
      %289 = vmatpush2.msra.mxu0 0.0
      %290 = vmatprep.subr.mxu0 0.0
      %291 = vmatpush2.msra.mxu0 0.0
      %292 = vmatprep.subr.mxu0 0.0
      %293 = vmatpush2.msra.mxu0 0.0
      %294 = vmatprep.subr.mxu0 0.0
      %295 = vmatpush2.msra.mxu0 0.0
      %296 = vmatprep.subr.mxu0 0.0
      %297 = vmatpush2.msra.mxu0 0.0
      %298 = vmatprep.subr.mxu0 0.0
      %299 = vmatpush2.msra.mxu0 0.0
      %300 = vmatprep.mubr.f32.mxu0 0.0
      %301 = vmatmul.mubr.f32.gmra.mxu0 %v234
      %v302 = vpop.f32.mrf.mxu0
      %v303 = vadd.f32 %v230, %v302
      %v304 = vpop.f32.mrf.mxu0
      %v305 = vadd.f32 %v230, %v304
      %306 = vdwg.mxu0
      %v307 = vld [vmem:[%s215] sm:$0xff]
      %v308 = vld [vmem:[%s215 + $0x8] sm:$0xff]
      %v309 = vadd.f32 %v303, %v307
      %v310 = vadd.f32 %v305, %v308
      %v311 = vxor.u32 %v309, 2147483648
      %v312 = vxor.u32 %v310, 2147483648
      %v313 = vmul.f32 %v311, 1.442695
      %v314 = vpow.pop %v313
      %v315 = vmul.f32 %v312, 1.442695
      %v316 = vpow.pop %v315
      %v317 = vadd.f32 %v314, 1.0
      %v318 = vadd.f32 %v316, 1.0
      %v319 = vrcp.pop %v317
      %v320 = vmul.f32 1.0, %v319
      %v321 = vrcp.pop %v318
      %v322 = vmul.f32 1.0, %v321
      %v323 = vmul.f32 %v309, %v320
      %v324 = vmul.f32 %v310, %v322
      %325 = vst [vmem:[%s221] sm:$0xff] %v323
      %326 = vst [vmem:[%s221 + $0x8] sm:$0xff] %v324
      %s327 = smul.u32 2, %s15
      %p328 = scmp.lt.s32.totalorder %s327, 7
      %s329 = scalar_select %p328, %s327, 7
      %s330 = smul.addr %s329, 8
      %s331 = scalar_lea.vmem %s4, %s330
      // Predicated region
      $region37: #{gray_group_fno2d.12} parent=35 // pred_check
        %p332 = pneg %p127
      $region38: #{gray_group_fno2d.12} parent=35 // pred_check_branch
        %334 = sbr.rel (%p332) target = $region40
      $region39: #{gray_group_fno2d.12} parent=35 // pred_region
        %s335 = smul.u32 2, %s15
      $region40: #{gray_group_fno2d.12} parent=35 // pred_fallthru
        _
    $region36: #{gray_group_fno2d.12} parent=5 // pred_fallthru
      _
    %p336 = scmp.le.s32.totalorder 2, %s10
    // Predicated region
    $region41: #{gray_group_fno2d.12} parent=5 // pred_check
      %p337 = pneg %p336
    $region42: #{gray_group_fno2d.12} parent=5 // pred_check_branch
      %339 = sbr.rel (%p337) target = $region44
    $region43: #{gray_group_fno2d.12} parent=5 // pred_region
      %s340 = ssub.s32 %s10, 2
      // Predicated region
      $region45: #{gray_group_fno2d.12} parent=43 // pred_check
        %p341 = pneg %p133
      $region46: #{gray_group_fno2d.12} parent=43 // pred_check_branch
        %343 = sbr.rel (%p341) target = $region48
      $region47: #{gray_group_fno2d.12} parent=43 // pred_region
        %s344 = smul.u32 2, %s16
        %p345 = scmp.lt.s32.totalorder %s344, 7
        %s346 = scalar_select %p345, %s344, 7
        %s347 = smul.addr %s346, 8
        %s348 = scalar_lea.vmem %s4, %s347
      $region48: #{gray_group_fno2d.12} parent=43 // pred_fallthru
        _
    $region44: #{gray_group_fno2d.12} parent=5 // pred_fallthru
      _
  $region6: #{gray_group_fno2d.12} parent=0 // loop_footer
    %s14 = sadd.s32 1, %s10
  $region7: #{gray_group_fno2d.12} parent=0 // loop_footer_branch
    %9 = sbr.rel target = $region3
  $region8: #{gray_group_fno2d.12} parent=0 // loop_exit
    _

// kernel: gray_group_fno2d.18
$region0: #{gray_group_fno2d.18}
  #allocation0 [shape = 'u32[]', space=smem, size = 0x4, offset = 0x4, fixed_abs, tag = 'smem constant byte address 0x4 - core index']
  #allocation1 [shape = 'u32[144,128]{1,0:T(1,128)}', space=vmem, size = 0x12000, scoped, tag = 'internal scratch']
  %s0 = inlined_call_operand.vmem [shape: f32[8,1024], index: 0, kind: input, shape index: {}]
  %s1 = inlined_call_operand.vmem [shape: f32[8,8], index: 1, kind: input, shape index: {}]
  %s2 = inlined_call_operand.vmem [shape: f32[8,1], index: 2, kind: input, shape index: {}]
  %s3 = inlined_call_operand.vmem [shape: f32[8,1024], index: 3, kind: input, shape index: {}]
  %s4 = inlined_call_operand.vmem [shape: bf16[8,1024], index: 4, kind: output, shape index: {}]
  %s5 = sld [smem:[#allocation0]]
  $region49: #{gray_group_fno2d.18} parent=0
    _
  %s7 = ssub.s32 1, %s5
  %s8 = scalar_select 0, %s7, %s5
  loop: start=0, step=1, limit=6
  $region2: #{gray_group_fno2d.18} parent=0 // loop_pre_header
    _
  $region3: #{gray_group_fno2d.18} parent=0 // loop_header
    %s10 = sphi 0, %s14
    %p11 = scmp.ge.s32.totalorder %s10, 6
    %s20 = sphi 0, %s22
    %s23 = sphi 0, %s20
    %s24 = sphi 0, %s23
    %s40 = sphi 0, %s24
    %s44 = sphi 0, %s44
    %s46 = sphi 0, %s44
    %s47 = sphi 0, %s46
    %s61 = sphi 0, %s47
    %s65 = sphi 0, %s65
    %s67 = sphi 0, %s65
    %s68 = sphi 0, %s67
    %s82 = sphi 0, %s68
    %s88 = sphi 0, %s90
    %s91 = sphi 0, %s88
    %s92 = sphi 0, %s91
    %s108 = sphi 0, %s92
    %s114 = sphi 0, %s116
    %s117 = sphi 0, %s114
    %s118 = sphi 0, %s117
    %s134 = sphi 0, %s118
  $region4: #{gray_group_fno2d.18} parent=0 // loop_header_branch
    %13 = sbr.rel (%p11) target = $region8
  $region5: #{gray_group_fno2d.18} parent=0 // loop_body
    %s15 = ssub.s32 %s10, 1
    %s16 = ssub.s32 %s10, 2
    %s17 = sadd.s32 %s10, 1
    %s18 = ssub.s32 %s10, %s17
    %p19 = scmp.eq.s32.totalorder %s18, 0
    %s21 = sadd.s32 %s20, 1
    %s22 = scalar_select %p19, %s20, %s21
    %p25 = pneg %p19
    %p26 = scmp.eq.s32.totalorder %s10, 3
    %p27 = por %p25, %p26
    %p28 = scmp.ne.s32.totalorder %s20, %s23
    %p29 = scmp.eq.s32.totalorder %s10, 0
    %p30 = por %p28, %p29
    %p31 = scmp.ne.s32.totalorder %s20, %s23
    %p32 = scmp.eq.s32.totalorder %s15, 3
    %p33 = por %p31, %p32
    %p34 = scmp.ne.s32.totalorder %s23, %s24
    %p35 = scmp.eq.s32.totalorder %s15, 0
    %p36 = por %p34, %p35
    %p37 = scmp.ne.s32.totalorder %s23, %s24
    %p38 = scmp.eq.s32.totalorder %s16, 3
    %p39 = por %p37, %p38
    %p41 = scmp.ne.s32.totalorder %s24, %s40
    %p42 = scmp.eq.s32.totalorder %s16, 0
    %p43 = por %p41, %p42
    %s45 = sadd.s32 %s44, 1
    %p48 = scmp.eq.s32.totalorder %s10, 3
    %p49 = scmp.ne.s32.totalorder %s44, %s46
    %p50 = scmp.eq.s32.totalorder %s10, 0
    %p51 = por %p49, %p50
    %p52 = scmp.ne.s32.totalorder %s44, %s46
    %p53 = scmp.eq.s32.totalorder %s15, 3
    %p54 = por %p52, %p53
    %p55 = scmp.ne.s32.totalorder %s46, %s47
    %p56 = scmp.eq.s32.totalorder %s15, 0
    %p57 = por %p55, %p56
    %p58 = scmp.ne.s32.totalorder %s46, %s47
    %p59 = scmp.eq.s32.totalorder %s16, 3
    %p60 = por %p58, %p59
    %p62 = scmp.ne.s32.totalorder %s47, %s61
    %p63 = scmp.eq.s32.totalorder %s16, 0
    %p64 = por %p62, %p63
    %s66 = sadd.s32 %s65, 1
    %p69 = scmp.eq.s32.totalorder %s10, 3
    %p70 = scmp.ne.s32.totalorder %s65, %s67
    %p71 = scmp.eq.s32.totalorder %s10, 0
    %p72 = por %p70, %p71
    %p73 = scmp.ne.s32.totalorder %s65, %s67
    %p74 = scmp.eq.s32.totalorder %s15, 3
    %p75 = por %p73, %p74
    %p76 = scmp.ne.s32.totalorder %s67, %s68
    %p77 = scmp.eq.s32.totalorder %s15, 0
    %p78 = por %p76, %p77
    %p79 = scmp.ne.s32.totalorder %s67, %s68
    %p80 = scmp.eq.s32.totalorder %s16, 3
    %p81 = por %p79, %p80
    %p83 = scmp.ne.s32.totalorder %s68, %s82
    %p84 = scmp.eq.s32.totalorder %s16, 0
    %p85 = por %p83, %p84
    %s86 = ssub.s32 %s10, %s17
    %p87 = scmp.eq.s32.totalorder %s86, 0
    %s89 = sadd.s32 %s88, 1
    %s90 = scalar_select %p87, %s88, %s89
    %p93 = pneg %p87
    %p94 = scmp.eq.s32.totalorder %s10, 3
    %p95 = por %p93, %p94
    %p96 = scmp.ne.s32.totalorder %s88, %s91
    %p97 = scmp.eq.s32.totalorder %s10, 0
    %p98 = por %p96, %p97
    %p99 = scmp.ne.s32.totalorder %s88, %s91
    %p100 = scmp.eq.s32.totalorder %s15, 3
    %p101 = por %p99, %p100
    %p102 = scmp.ne.s32.totalorder %s91, %s92
    %p103 = scmp.eq.s32.totalorder %s15, 0
    %p104 = por %p102, %p103
    %p105 = scmp.ne.s32.totalorder %s91, %s92
    %p106 = scmp.eq.s32.totalorder %s16, 3
    %p107 = por %p105, %p106
    %p109 = scmp.ne.s32.totalorder %s92, %s108
    %p110 = scmp.eq.s32.totalorder %s16, 0
    %p111 = por %p109, %p110
    %s112 = ssub.s32 %s10, %s17
    %p113 = scmp.eq.s32.totalorder %s112, 0
    %s115 = sadd.s32 %s114, 1
    %s116 = scalar_select %p113, %s114, %s115
    %p119 = pneg %p113
    %p120 = scmp.eq.s32.totalorder %s10, 3
    %p121 = por %p119, %p120
    %p122 = scmp.ne.s32.totalorder %s114, %s117
    %p123 = scmp.eq.s32.totalorder %s10, 0
    %p124 = por %p122, %p123
    %p125 = scmp.ne.s32.totalorder %s114, %s117
    %p126 = scmp.eq.s32.totalorder %s15, 3
    %p127 = por %p125, %p126
    %p128 = scmp.ne.s32.totalorder %s117, %s118
    %p129 = scmp.eq.s32.totalorder %s15, 0
    %p130 = por %p128, %p129
    %p131 = scmp.ne.s32.totalorder %s117, %s118
    %p132 = scmp.eq.s32.totalorder %s16, 3
    %p133 = por %p131, %p132
    %p135 = scmp.ne.s32.totalorder %s118, %s134
    %p136 = scmp.eq.s32.totalorder %s16, 0
    %p137 = por %p135, %p136
    %p138 = scmp.le.s32.totalorder 1, %s10
    %p139 = scmp.lt.s32.totalorder %s10, 5
    %p140 = pnand %p138, %p139
    %p141 = pneg %p140
    // Predicated region
    $region9: #{gray_group_fno2d.18} parent=5 // pred_check
      _
    $region10: #{gray_group_fno2d.18} parent=5 // pred_check_branch
      %143 = sbr.rel (%p140) target = $region12
    $region11: #{gray_group_fno2d.18} parent=5 // pred_region
      %s144 = ssub.s32 %s10, 1
      // Predicated region
      $region13: #{gray_group_fno2d.18} parent=11 // pred_check
        %p145 = pneg %p57
      $region14: #{gray_group_fno2d.18} parent=11 // pred_check_branch
        %147 = sbr.rel (%p145) target = $region16
      $region15: #{gray_group_fno2d.18} parent=11 // pred_region
        _
      $region16: #{gray_group_fno2d.18} parent=11 // pred_fallthru
        _
      // Predicated region
      $region17: #{gray_group_fno2d.18} parent=11 // pred_check
        %p148 = pneg %p78
      $region18: #{gray_group_fno2d.18} parent=11 // pred_check_branch
        %150 = sbr.rel (%p148) target = $region20
      $region19: #{gray_group_fno2d.18} parent=11 // pred_region
        _
      $region20: #{gray_group_fno2d.18} parent=11 // pred_fallthru
        _
    $region12: #{gray_group_fno2d.18} parent=5 // pred_fallthru
      _
    %p151 = scmp.lt.s32.totalorder %s10, 4
    // Predicated region
    $region21: #{gray_group_fno2d.18} parent=5 // pred_check
      %p152 = pneg %p151
    $region22: #{gray_group_fno2d.18} parent=5 // pred_check_branch
      %154 = sbr.rel (%p152) target = $region24
    $region23: #{gray_group_fno2d.18} parent=5 // pred_region
      // Predicated region
      $region25: #{gray_group_fno2d.18} parent=23 // pred_check
        %p155 = pneg %p30
      $region26: #{gray_group_fno2d.18} parent=23 // pred_check_branch
        %157 = sbr.rel (%p155) target = $region28
      $region27: #{gray_group_fno2d.18} parent=23 // pred_region
        %s158 = smul.u32 2, %s10
        %p159 = scmp.lt.s32.totalorder %s158, 7
        %s160 = scalar_select %p159, %s158, 7
        %s161 = smul.addr %s160, 8
        %s162 = scalar_lea.vmem %s0, %s161
        %s163 = smul.u32 2, %s10
      $region28: #{gray_group_fno2d.18} parent=23 // pred_fallthru
        _
      // Predicated region
      $region29: #{gray_group_fno2d.18} parent=23 // pred_check
        %p164 = pneg %p98
      $region30: #{gray_group_fno2d.18} parent=23 // pred_check_branch
        %166 = sbr.rel (%p164) target = $region32
      $region31: #{gray_group_fno2d.18} parent=23 // pred_region
        %s167 = smul.u32 2, %s10
        %p168 = scmp.lt.s32.totalorder %s167, 7
        %s169 = scalar_select %p168, %s167, 7
        %s170 = smul.addr %s169, 8
        %s171 = scalar_lea.vmem %s3, %s170
        %s172 = smul.u32 2, %s10
      $region32: #{gray_group_fno2d.18} parent=23 // pred_fallthru
        _
    $region24: #{gray_group_fno2d.18} parent=5 // pred_fallthru
      _
    %p173 = scmp.le.s32.totalorder 1, %s10
    %p174 = scmp.lt.s32.totalorder %s10, 5
    %p175 = pnand %p173, %p174
    %p176 = pneg %p175
    // Predicated region
    $region33: #{gray_group_fno2d.18} parent=5 // pred_check
      _
    $region34: #{gray_group_fno2d.18} parent=5 // pred_check_branch
      %178 = sbr.rel (%p175) target = $region36
    $region35: #{gray_group_fno2d.18} parent=5 // pred_region
      %s179 = ssub.s32 %s10, 1
      %s180 = smul.u32 2, %s15
      %p181 = scmp.lt.s32.totalorder %s180, 7
      %s182 = scalar_select %p181, %s180, 7
      %s183 = smul.addr %s182, 8
      %s184 = scalar_lea.vmem %s0, %s183
      %p185 = pneg %p36
      %p186 = pneg %p33
      %p187 = pneg %p57
      %p188 = pneg %p54
      %p189 = pneg %p78
      %p190 = pneg %p75
      %s191 = smul.u32 2, %s15
      %p192 = scmp.lt.s32.totalorder %s191, 7
      %s193 = scalar_select %p192, %s191, 7
      %s194 = smul.addr %s193, 8
      %s195 = scalar_lea.vmem %s3, %s194
      %p196 = pneg %p104
      %p197 = pneg %p101
      %p198 = pneg %p130
      %p199 = pneg %p127
      %s200 = smul.u32 2, %s15
      %p201 = scmp.lt.s32.totalorder %s200, 7
      %s202 = scalar_select %p201, %s200, 7
      %s203 = smul.addr %s202, 4
      %s204 = scalar_lea.vmem %s4, %s203
      %s205 = smul.u32 2, %s15
      %p206 = scmp.lt.s32.totalorder %s205, 7
      %s207 = scalar_select %p206, %s205, 7
      %s208 = smul.addr %s207, 8
      %s209 = scalar_lea.vmem %s0, %s208
      %s210 = smul.u32 2, %s15
      %s211 = smul.u32 2, %s15
      %p212 = scmp.lt.s32.totalorder %s211, 7
      %s213 = scalar_select %p212, %s211, 7
      %s214 = smul.addr %s213, 8
      %s215 = scalar_lea.vmem %s3, %s214
      %s216 = smul.u32 2, %s15
      %s217 = smul.u32 2, %s15
      %p218 = scmp.lt.s32.totalorder %s217, 7
      %s219 = scalar_select %p218, %s217, 7
      %s220 = smul.addr %s219, 4
      %s221 = scalar_lea.vmem %s4, %s220
      %s222 = smul.u32 2, %s15
      %v223 = vld [vmem:[%s209] sm:$0xff]
      %v224 = vld [vmem:[%s209 + $0x8] sm:$0xff]
      %v225 = vld [vmem:[%s1] sm:$0xff]
      %v226 = vld [vmem:[%s2] sm:$0xff]
      %228 = vset.pattern.permute.xlu0 0
      %229 = vperm.xlu0 %228, %v226
      %v230 = vpop.permute.xlu0 %229
      %vm232 = vcmask 64512
      %v234 = vsel %vm232, %v225, 0
      %236 = vmatprep.subr.mxu0 0.0
      %237 = vmatpush1.msra.mxu0 0.0
      %238 = vmatprep.subr.mxu0 0.0
      %239 = vmatpush1.msra.mxu0 0.0
      %240 = vmatprep.subr.mxu0 0.0
      %241 = vmatpush1.msra.mxu0 0.0
      %242 = vmatprep.subr.mxu0 0.0
      %243 = vmatpush1.msra.mxu0 0.0
      %244 = vmatprep.subr.mxu0 0.0
      %245 = vmatpush1.msra.mxu0 0.0
      %246 = vmatprep.subr.mxu0 0.0
      %247 = vmatpush1.msra.mxu0 0.0
      %248 = vmatprep.subr.mxu0 0.0
      %249 = vmatpush1.msra.mxu0 0.0
      %250 = vmatprep.subr.mxu0 0.0
      %251 = vmatpush1.msra.mxu0 0.0
      %252 = vmatprep.subr.mxu0 0.0
      %253 = vmatpush1.msra.mxu0 0.0
      %254 = vmatprep.subr.mxu0 0.0
      %255 = vmatpush1.msra.mxu0 0.0
      %256 = vmatprep.subr.mxu0 0.0
      %257 = vmatpush1.msra.mxu0 0.0
      %258 = vmatprep.subr.mxu0 0.0
      %259 = vmatpush1.msra.mxu0 0.0
      %260 = vmatprep.subr.mxu0 0.0
      %261 = vmatpush1.msra.mxu0 0.0
      %262 = vmatprep.subr.mxu0 0.0
      %263 = vmatpush1.msra.mxu0 0.0
      %264 = vmatprep.subr.mxu0 0.0
      %265 = vmatpush1.msra.mxu0 0.0
      %266 = vmatprep.subr.mxu0 %v224
      %267 = vmatpush1.msra.mxu0 %v223
      %268 = vmatprep.subr.mxu0 0.0
      %269 = vmatpush2.msra.mxu0 0.0
      %270 = vmatprep.subr.mxu0 0.0
      %271 = vmatpush2.msra.mxu0 0.0
      %272 = vmatprep.subr.mxu0 0.0
      %273 = vmatpush2.msra.mxu0 0.0
      %274 = vmatprep.subr.mxu0 0.0
      %275 = vmatpush2.msra.mxu0 0.0
      %276 = vmatprep.subr.mxu0 0.0
      %277 = vmatpush2.msra.mxu0 0.0
      %278 = vmatprep.subr.mxu0 0.0
      %279 = vmatpush2.msra.mxu0 0.0
      %280 = vmatprep.subr.mxu0 0.0
      %281 = vmatpush2.msra.mxu0 0.0
      %282 = vmatprep.subr.mxu0 0.0
      %283 = vmatpush2.msra.mxu0 0.0
      %284 = vmatprep.subr.mxu0 0.0
      %285 = vmatpush2.msra.mxu0 0.0
      %286 = vmatprep.subr.mxu0 0.0
      %287 = vmatpush2.msra.mxu0 0.0
      %288 = vmatprep.subr.mxu0 0.0
      %289 = vmatpush2.msra.mxu0 0.0
      %290 = vmatprep.subr.mxu0 0.0
      %291 = vmatpush2.msra.mxu0 0.0
      %292 = vmatprep.subr.mxu0 0.0
      %293 = vmatpush2.msra.mxu0 0.0
      %294 = vmatprep.subr.mxu0 0.0
      %295 = vmatpush2.msra.mxu0 0.0
      %296 = vmatprep.subr.mxu0 0.0
      %297 = vmatpush2.msra.mxu0 0.0
      %298 = vmatprep.subr.mxu0 0.0
      %299 = vmatpush2.msra.mxu0 0.0
      %300 = vmatprep.mubr.f32.mxu0 0.0
      %301 = vmatmul.mubr.f32.gmra.mxu0 %v234
      %v302 = vpop.f32.mrf.mxu0
      %v303 = vadd.f32 %v230, %v302
      %v304 = vpop.f32.mrf.mxu0
      %v305 = vadd.f32 %v230, %v304
      %306 = vdwg.mxu0
      %v307 = vld [vmem:[%s215] sm:$0xff]
      %v308 = vld [vmem:[%s215 + $0x8] sm:$0xff]
      %v309 = vadd.f32 %v303, %v307
      %v310 = vadd.f32 %v305, %v308
      %v311 = vpack.c.bf16 %v309, %v309
      %v312 = vpack.c.bf16 %v310, %v310
      %v315 = vunpack.c.l.b16 %v311
      %v316 = vunpack.c.l.b16 %v312
      %v317 = vpack.c.b16 %v316, %v315
      %319 = vst [vmem:[%s221] sm:$0xff] %v317
      %s320 = smul.u32 2, %s15
      %p321 = scmp.lt.s32.totalorder %s320, 7
      %s322 = scalar_select %p321, %s320, 7
      %s323 = smul.addr %s322, 4
      %s324 = scalar_lea.vmem %s4, %s323
      // Predicated region
      $region37: #{gray_group_fno2d.18} parent=35 // pred_check
        %p325 = pneg %p127
      $region38: #{gray_group_fno2d.18} parent=35 // pred_check_branch
        %327 = sbr.rel (%p325) target = $region40
      $region39: #{gray_group_fno2d.18} parent=35 // pred_region
        %s328 = smul.u32 2, %s15
      $region40: #{gray_group_fno2d.18} parent=35 // pred_fallthru
        _
    $region36: #{gray_group_fno2d.18} parent=5 // pred_fallthru
      _
    %p329 = scmp.le.s32.totalorder 2, %s10
    // Predicated region
    $region41: #{gray_group_fno2d.18} parent=5 // pred_check
      %p330 = pneg %p329
    $region42: #{gray_group_fno2d.18} parent=5 // pred_check_branch
      %332 = sbr.rel (%p330) target = $region44
    $region43: #{gray_group_fno2d.18} parent=5 // pred_region
      %s333 = ssub.s32 %s10, 2
      // Predicated region
      $region45: #{gray_group_fno2d.18} parent=43 // pred_check
        %p334 = pneg %p133
      $region46: #{gray_group_fno2d.18} parent=43 // pred_check_branch
        %336 = sbr.rel (%p334) target = $region48
      $region47: #{gray_group_fno2d.18} parent=43 // pred_region
        %s337 = smul.u32 2, %s16
        %p338 = scmp.lt.s32.totalorder %s337, 7
        %s339 = scalar_select %p338, %s337, 7
        %s340 = smul.addr %s339, 4
        %s341 = scalar_lea.vmem %s4, %s340
      $region48: #{gray_group_fno2d.18} parent=43 // pred_fallthru
        _
    $region44: #{gray_group_fno2d.18} parent=5 // pred_fallthru
      _
  $region6: #{gray_group_fno2d.18} parent=0 // loop_footer
    %s14 = sadd.s32 1, %s10
  $region7: #{gray_group_fno2d.18} parent=0 // loop_footer_branch
    %9 = sbr.rel target = $region3
  $region8: #{gray_group_fno2d.18} parent=0 // loop_exit
    _

// kernel: gray_group_fno2d.19
$region0: #{gray_group_fno2d.19}
  #allocation0 [shape = 'u32[]', space=smem, size = 0x4, offset = 0x4, fixed_abs, tag = 'smem constant byte address 0x4 - core index']
  #allocation1 [shape = 'u32[144,128]{1,0:T(1,128)}', space=vmem, size = 0x12000, scoped, tag = 'internal scratch']
  %s0 = inlined_call_operand.vmem [shape: bf16[8,1024], index: 0, kind: input, shape index: {}]
  %s1 = inlined_call_operand.vmem [shape: f32[16,8], index: 1, kind: input, shape index: {}]
  %s2 = inlined_call_operand.vmem [shape: f32[16,1], index: 2, kind: input, shape index: {}]
  %s3 = inlined_call_operand.vmem [shape: f32[4,16], index: 3, kind: input, shape index: {}]
  %s4 = inlined_call_operand.vmem [shape: f32[4,1], index: 4, kind: input, shape index: {}]
  %s5 = inlined_call_operand.vmem [shape: f32[4,1024], index: 5, kind: output, shape index: {}]
  %s6 = sld [smem:[#allocation0]]
  $region53: #{gray_group_fno2d.19} parent=0
    _
  %s8 = ssub.s32 1, %s6
  %s9 = scalar_select 0, %s8, %s6
  loop: start=0, step=1, limit=6
  $region2: #{gray_group_fno2d.19} parent=0 // loop_pre_header
    _
  $region3: #{gray_group_fno2d.19} parent=0 // loop_header
    %s11 = sphi 0, %s15
    %p12 = scmp.ge.s32.totalorder %s11, 6
    %s21 = sphi 0, %s23
    %s24 = sphi 0, %s21
    %s25 = sphi 0, %s24
    %s41 = sphi 0, %s25
    %s45 = sphi 0, %s45
    %s47 = sphi 0, %s45
    %s48 = sphi 0, %s47
    %s62 = sphi 0, %s48
    %s66 = sphi 0, %s66
    %s68 = sphi 0, %s66
    %s69 = sphi 0, %s68
    %s83 = sphi 0, %s69
    %s87 = sphi 0, %s87
    %s89 = sphi 0, %s87
    %s90 = sphi 0, %s89
    %s104 = sphi 0, %s90
    %s108 = sphi 0, %s108
    %s110 = sphi 0, %s108
    %s111 = sphi 0, %s110
    %s125 = sphi 0, %s111
    %s131 = sphi 0, %s133
    %s134 = sphi 0, %s131
    %s135 = sphi 0, %s134
    %s151 = sphi 0, %s135
  $region4: #{gray_group_fno2d.19} parent=0 // loop_header_branch
    %14 = sbr.rel (%p12) target = $region8
  $region5: #{gray_group_fno2d.19} parent=0 // loop_body
    %s16 = ssub.s32 %s11, 1
    %s17 = ssub.s32 %s11, 2
    %s18 = sadd.s32 %s11, 1
    %s19 = ssub.s32 %s11, %s18
    %p20 = scmp.eq.s32.totalorder %s19, 0
    %s22 = sadd.s32 %s21, 1
    %s23 = scalar_select %p20, %s21, %s22
    %p26 = pneg %p20
    %p27 = scmp.eq.s32.totalorder %s11, 3
    %p28 = por %p26, %p27
    %p29 = scmp.ne.s32.totalorder %s21, %s24
    %p30 = scmp.eq.s32.totalorder %s11, 0
    %p31 = por %p29, %p30
    %p32 = scmp.ne.s32.totalorder %s21, %s24
    %p33 = scmp.eq.s32.totalorder %s16, 3
    %p34 = por %p32, %p33
    %p35 = scmp.ne.s32.totalorder %s24, %s25
    %p36 = scmp.eq.s32.totalorder %s16, 0
    %p37 = por %p35, %p36
    %p38 = scmp.ne.s32.totalorder %s24, %s25
    %p39 = scmp.eq.s32.totalorder %s17, 3
    %p40 = por %p38, %p39
    %p42 = scmp.ne.s32.totalorder %s25, %s41
    %p43 = scmp.eq.s32.totalorder %s17, 0
    %p44 = por %p42, %p43
    %s46 = sadd.s32 %s45, 1
    %p49 = scmp.eq.s32.totalorder %s11, 3
    %p50 = scmp.ne.s32.totalorder %s45, %s47
    %p51 = scmp.eq.s32.totalorder %s11, 0
    %p52 = por %p50, %p51
    %p53 = scmp.ne.s32.totalorder %s45, %s47
    %p54 = scmp.eq.s32.totalorder %s16, 3
    %p55 = por %p53, %p54
    %p56 = scmp.ne.s32.totalorder %s47, %s48
    %p57 = scmp.eq.s32.totalorder %s16, 0
    %p58 = por %p56, %p57
    %p59 = scmp.ne.s32.totalorder %s47, %s48
    %p60 = scmp.eq.s32.totalorder %s17, 3
    %p61 = por %p59, %p60
    %p63 = scmp.ne.s32.totalorder %s48, %s62
    %p64 = scmp.eq.s32.totalorder %s17, 0
    %p65 = por %p63, %p64
    %s67 = sadd.s32 %s66, 1
    %p70 = scmp.eq.s32.totalorder %s11, 3
    %p71 = scmp.ne.s32.totalorder %s66, %s68
    %p72 = scmp.eq.s32.totalorder %s11, 0
    %p73 = por %p71, %p72
    %p74 = scmp.ne.s32.totalorder %s66, %s68
    %p75 = scmp.eq.s32.totalorder %s16, 3
    %p76 = por %p74, %p75
    %p77 = scmp.ne.s32.totalorder %s68, %s69
    %p78 = scmp.eq.s32.totalorder %s16, 0
    %p79 = por %p77, %p78
    %p80 = scmp.ne.s32.totalorder %s68, %s69
    %p81 = scmp.eq.s32.totalorder %s17, 3
    %p82 = por %p80, %p81
    %p84 = scmp.ne.s32.totalorder %s69, %s83
    %p85 = scmp.eq.s32.totalorder %s17, 0
    %p86 = por %p84, %p85
    %s88 = sadd.s32 %s87, 1
    %p91 = scmp.eq.s32.totalorder %s11, 3
    %p92 = scmp.ne.s32.totalorder %s87, %s89
    %p93 = scmp.eq.s32.totalorder %s11, 0
    %p94 = por %p92, %p93
    %p95 = scmp.ne.s32.totalorder %s87, %s89
    %p96 = scmp.eq.s32.totalorder %s16, 3
    %p97 = por %p95, %p96
    %p98 = scmp.ne.s32.totalorder %s89, %s90
    %p99 = scmp.eq.s32.totalorder %s16, 0
    %p100 = por %p98, %p99
    %p101 = scmp.ne.s32.totalorder %s89, %s90
    %p102 = scmp.eq.s32.totalorder %s17, 3
    %p103 = por %p101, %p102
    %p105 = scmp.ne.s32.totalorder %s90, %s104
    %p106 = scmp.eq.s32.totalorder %s17, 0
    %p107 = por %p105, %p106
    %s109 = sadd.s32 %s108, 1
    %p112 = scmp.eq.s32.totalorder %s11, 3
    %p113 = scmp.ne.s32.totalorder %s108, %s110
    %p114 = scmp.eq.s32.totalorder %s11, 0
    %p115 = por %p113, %p114
    %p116 = scmp.ne.s32.totalorder %s108, %s110
    %p117 = scmp.eq.s32.totalorder %s16, 3
    %p118 = por %p116, %p117
    %p119 = scmp.ne.s32.totalorder %s110, %s111
    %p120 = scmp.eq.s32.totalorder %s16, 0
    %p121 = por %p119, %p120
    %p122 = scmp.ne.s32.totalorder %s110, %s111
    %p123 = scmp.eq.s32.totalorder %s17, 3
    %p124 = por %p122, %p123
    %p126 = scmp.ne.s32.totalorder %s111, %s125
    %p127 = scmp.eq.s32.totalorder %s17, 0
    %p128 = por %p126, %p127
    %s129 = ssub.s32 %s11, %s18
    %p130 = scmp.eq.s32.totalorder %s129, 0
    %s132 = sadd.s32 %s131, 1
    %s133 = scalar_select %p130, %s131, %s132
    %p136 = pneg %p130
    %p137 = scmp.eq.s32.totalorder %s11, 3
    %p138 = por %p136, %p137
    %p139 = scmp.ne.s32.totalorder %s131, %s134
    %p140 = scmp.eq.s32.totalorder %s11, 0
    %p141 = por %p139, %p140
    %p142 = scmp.ne.s32.totalorder %s131, %s134
    %p143 = scmp.eq.s32.totalorder %s16, 3
    %p144 = por %p142, %p143
    %p145 = scmp.ne.s32.totalorder %s134, %s135
    %p146 = scmp.eq.s32.totalorder %s16, 0
    %p147 = por %p145, %p146
    %p148 = scmp.ne.s32.totalorder %s134, %s135
    %p149 = scmp.eq.s32.totalorder %s17, 3
    %p150 = por %p148, %p149
    %p152 = scmp.ne.s32.totalorder %s135, %s151
    %p153 = scmp.eq.s32.totalorder %s17, 0
    %p154 = por %p152, %p153
    %p155 = scmp.le.s32.totalorder 1, %s11
    %p156 = scmp.lt.s32.totalorder %s11, 5
    %p157 = pnand %p155, %p156
    %p158 = pneg %p157
    // Predicated region
    $region9: #{gray_group_fno2d.19} parent=5 // pred_check
      _
    $region10: #{gray_group_fno2d.19} parent=5 // pred_check_branch
      %160 = sbr.rel (%p157) target = $region12
    $region11: #{gray_group_fno2d.19} parent=5 // pred_region
      %s161 = ssub.s32 %s11, 1
      // Predicated region
      $region13: #{gray_group_fno2d.19} parent=11 // pred_check
        %p162 = pneg %p58
      $region14: #{gray_group_fno2d.19} parent=11 // pred_check_branch
        %164 = sbr.rel (%p162) target = $region16
      $region15: #{gray_group_fno2d.19} parent=11 // pred_region
        _
      $region16: #{gray_group_fno2d.19} parent=11 // pred_fallthru
        _
      // Predicated region
      $region17: #{gray_group_fno2d.19} parent=11 // pred_check
        %p165 = pneg %p79
      $region18: #{gray_group_fno2d.19} parent=11 // pred_check_branch
        %167 = sbr.rel (%p165) target = $region20
      $region19: #{gray_group_fno2d.19} parent=11 // pred_region
        _
      $region20: #{gray_group_fno2d.19} parent=11 // pred_fallthru
        _
      // Predicated region
      $region21: #{gray_group_fno2d.19} parent=11 // pred_check
        %p168 = pneg %p100
      $region22: #{gray_group_fno2d.19} parent=11 // pred_check_branch
        %170 = sbr.rel (%p168) target = $region24
      $region23: #{gray_group_fno2d.19} parent=11 // pred_region
        _
      $region24: #{gray_group_fno2d.19} parent=11 // pred_fallthru
        _
      // Predicated region
      $region25: #{gray_group_fno2d.19} parent=11 // pred_check
        %p171 = pneg %p121
      $region26: #{gray_group_fno2d.19} parent=11 // pred_check_branch
        %173 = sbr.rel (%p171) target = $region28
      $region27: #{gray_group_fno2d.19} parent=11 // pred_region
        _
      $region28: #{gray_group_fno2d.19} parent=11 // pred_fallthru
        _
    $region12: #{gray_group_fno2d.19} parent=5 // pred_fallthru
      _
    %p174 = scmp.lt.s32.totalorder %s11, 4
    // Predicated region
    $region29: #{gray_group_fno2d.19} parent=5 // pred_check
      %p175 = pneg %p174
    $region30: #{gray_group_fno2d.19} parent=5 // pred_check_branch
      %177 = sbr.rel (%p175) target = $region32
    $region31: #{gray_group_fno2d.19} parent=5 // pred_region
      // Predicated region
      $region33: #{gray_group_fno2d.19} parent=31 // pred_check
        %p178 = pneg %p31
      $region34: #{gray_group_fno2d.19} parent=31 // pred_check_branch
        %180 = sbr.rel (%p178) target = $region36
      $region35: #{gray_group_fno2d.19} parent=31 // pred_region
        %s181 = smul.u32 2, %s11
        %p182 = scmp.lt.s32.totalorder %s181, 7
        %s183 = scalar_select %p182, %s181, 7
        %s184 = smul.addr %s183, 4
        %s185 = scalar_lea.vmem %s0, %s184
        %s186 = smul.u32 2, %s11
      $region36: #{gray_group_fno2d.19} parent=31 // pred_fallthru
        _
    $region32: #{gray_group_fno2d.19} parent=5 // pred_fallthru
      _
    %p187 = scmp.le.s32.totalorder 1, %s11
    %p188 = scmp.lt.s32.totalorder %s11, 5
    %p189 = pnand %p187, %p188
    %p190 = pneg %p189
    // Predicated region
    $region37: #{gray_group_fno2d.19} parent=5 // pred_check
      _
    $region38: #{gray_group_fno2d.19} parent=5 // pred_check_branch
      %192 = sbr.rel (%p189) target = $region40
    $region39: #{gray_group_fno2d.19} parent=5 // pred_region
      %s193 = ssub.s32 %s11, 1
      %s194 = smul.u32 2, %s16
      %p195 = scmp.lt.s32.totalorder %s194, 7
      %s196 = scalar_select %p195, %s194, 7
      %s197 = smul.addr %s196, 4
      %s198 = scalar_lea.vmem %s0, %s197
      %p199 = pneg %p37
      %p200 = pneg %p34
      %p201 = pneg %p58
      %p202 = pneg %p55
      %p203 = pneg %p79
      %p204 = pneg %p76
      %p205 = pneg %p100
      %p206 = pneg %p97
      %p207 = pneg %p121
      %p208 = pneg %p118
      %p209 = pneg %p147
      %p210 = pneg %p144
      %s211 = smul.u32 2, %s16
      %p212 = scmp.lt.s32.totalorder %s211, 7
      %s213 = scalar_select %p212, %s211, 7
      %s214 = smul.addr %s213, 4
      %s215 = scalar_lea.vmem %s5, %s214
      %s216 = smul.u32 2, %s16
      %p217 = scmp.lt.s32.totalorder %s216, 7
      %s218 = scalar_select %p217, %s216, 7
      %s219 = smul.addr %s218, 4
      %s220 = scalar_lea.vmem %s0, %s219
      %s221 = smul.u32 2, %s16
      %s222 = smul.u32 2, %s16
      %p223 = scmp.lt.s32.totalorder %s222, 7
      %s224 = scalar_select %p223, %s222, 7
      %s225 = smul.addr %s224, 4
      %s226 = scalar_lea.vmem %s5, %s225
      %s227 = smul.u32 2, %s16
      %v228 = vld [vmem:[%s220] sm:$0xff]
      %v229 = vunpack.c.l.bf16 %v228
      %v230 = vunpack.c.h.bf16 %v228
      %v231 = vld [vmem:[%s1] sm:$0xff]
      %v232 = vld [vmem:[%s1 + $0x8] sm:$0xff]
      %v233 = vld [vmem:[%s2] sm:$0xff]
      %v234 = vld [vmem:[%s2 + $0x8] sm:$0xff]
      %236 = vset.pattern.permute.xlu0 0
      %237 = vperm.xlu0 %236, %v233
      %v238 = vpop.permute.xlu0 %237
      %241 = vset.pattern.permute.xlu0 0
      %242 = vperm.xlu0 %241, %v234
      %v243 = vpop.permute.xlu0 %242
      %vm245 = vcmask 64512
      %v247 = vsel %vm245, %v231, 0
      %v250 = vsel %vm245, %v232, 0
      %252 = vmatprep.subr.mxu0 0.0
      %253 = vmatpush1.msra.mxu0 0.0
      %254 = vmatprep.subr.mxu0 0.0
      %255 = vmatpush1.msra.mxu0 0.0
      %256 = vmatprep.subr.mxu0 0.0
      %257 = vmatpush1.msra.mxu0 0.0
      %258 = vmatprep.subr.mxu0 0.0
      %259 = vmatpush1.msra.mxu0 0.0
      %260 = vmatprep.subr.mxu0 0.0
      %261 = vmatpush1.msra.mxu0 0.0
      %262 = vmatprep.subr.mxu0 0.0
      %263 = vmatpush1.msra.mxu0 0.0
      %264 = vmatprep.subr.mxu0 0.0
      %265 = vmatpush1.msra.mxu0 0.0
      %266 = vmatprep.subr.mxu0 0.0
      %267 = vmatpush1.msra.mxu0 0.0
      %268 = vmatprep.subr.mxu0 0.0
      %269 = vmatpush1.msra.mxu0 0.0
      %270 = vmatprep.subr.mxu0 0.0
      %271 = vmatpush1.msra.mxu0 0.0
      %272 = vmatprep.subr.mxu0 0.0
      %273 = vmatpush1.msra.mxu0 0.0
      %274 = vmatprep.subr.mxu0 0.0
      %275 = vmatpush1.msra.mxu0 0.0
      %276 = vmatprep.subr.mxu0 0.0
      %277 = vmatpush1.msra.mxu0 0.0
      %278 = vmatprep.subr.mxu0 0.0
      %279 = vmatpush1.msra.mxu0 0.0
      %280 = vmatprep.subr.mxu0 0.0
      %281 = vmatpush1.msra.mxu0 0.0
      %282 = vmatprep.subr.mxu0 %v230
      %283 = vmatpush1.msra.mxu0 %v229
      %284 = vmatprep.subr.mxu0 0.0
      %285 = vmatpush2.msra.mxu0 0.0
      %286 = vmatprep.subr.mxu0 0.0
      %287 = vmatpush2.msra.mxu0 0.0
      %288 = vmatprep.subr.mxu0 0.0
      %289 = vmatpush2.msra.mxu0 0.0
      %290 = vmatprep.subr.mxu0 0.0
      %291 = vmatpush2.msra.mxu0 0.0
      %292 = vmatprep.subr.mxu0 0.0
      %293 = vmatpush2.msra.mxu0 0.0
      %294 = vmatprep.subr.mxu0 0.0
      %295 = vmatpush2.msra.mxu0 0.0
      %296 = vmatprep.subr.mxu0 0.0
      %297 = vmatpush2.msra.mxu0 0.0
      %298 = vmatprep.subr.mxu0 0.0
      %299 = vmatpush2.msra.mxu0 0.0
      %300 = vmatprep.subr.mxu0 0.0
      %301 = vmatpush2.msra.mxu0 0.0
      %302 = vmatprep.subr.mxu0 0.0
      %303 = vmatpush2.msra.mxu0 0.0
      %304 = vmatprep.subr.mxu0 0.0
      %305 = vmatpush2.msra.mxu0 0.0
      %306 = vmatprep.subr.mxu0 0.0
      %307 = vmatpush2.msra.mxu0 0.0
      %308 = vmatprep.subr.mxu0 0.0
      %309 = vmatpush2.msra.mxu0 0.0
      %310 = vmatprep.subr.mxu0 0.0
      %311 = vmatpush2.msra.mxu0 0.0
      %312 = vmatprep.subr.mxu0 0.0
      %313 = vmatpush2.msra.mxu0 0.0
      %314 = vmatprep.subr.mxu0 0.0
      %315 = vmatpush2.msra.mxu0 0.0
      %316 = vmatprep.mubr.f32.mxu0 0.0
      %317 = vmatmul.mubr.f32.gmra.mxu0 %v247
      %v318 = vpop.f32.mrf.mxu0
      %v319 = vadd.f32 %v238, %v318
      %v320 = vpop.f32.mrf.mxu0
      %v321 = vadd.f32 %v238, %v320
      %322 = vmatprep.mubr.f32.mxu0 0.0
      %323 = vmatmul.mubr.f32.gmra.mxu0 %v250
      %v324 = vpop.f32.mrf.mxu0
      %v325 = vadd.f32 %v243, %v324
      %v326 = vpop.f32.mrf.mxu0
      %v327 = vadd.f32 %v243, %v326
      %328 = vdwg.mxu0
      %v329 = vxor.u32 %v319, 2147483648
      %v330 = vxor.u32 %v321, 2147483648
      %v331 = vxor.u32 %v325, 2147483648
      %v332 = vxor.u32 %v327, 2147483648
      %v333 = vmul.f32 %v329, 1.442695
      %v334 = vpow.pop %v333
      %v335 = vmul.f32 %v330, 1.442695
      %v336 = vpow.pop %v335
      %v337 = vmul.f32 %v331, 1.442695
      %v338 = vpow.pop %v337
      %v339 = vmul.f32 %v332, 1.442695
      %v340 = vpow.pop %v339
      %v341 = vadd.f32 %v334, 1.0
      %v342 = vadd.f32 %v336, 1.0
      %v343 = vadd.f32 %v338, 1.0
      %v344 = vadd.f32 %v340, 1.0
      %v345 = vrcp.pop %v341
      %v346 = vmul.f32 1.0, %v345
      %v347 = vrcp.pop %v342
      %v348 = vmul.f32 1.0, %v347
      %v349 = vrcp.pop %v343
      %v350 = vmul.f32 1.0, %v349
      %v351 = vrcp.pop %v344
      %v352 = vmul.f32 1.0, %v351
      %v353 = vmul.f32 %v319, %v346
      %v354 = vmul.f32 %v321, %v348
      %v355 = vmul.f32 %v325, %v350
      %v356 = vmul.f32 %v327, %v352
      %v357 = vld [vmem:[%s3] sm:$0xf]
      %v358 = vld [vmem:[%s4] sm:$0xf]
      %360 = vset.pattern.permute.xlu0 0
      %361 = vperm.xlu0 %360, %v358
      %v362 = vpop.permute.xlu0 %361
      %vm364 = vcmask 130048
      %v366 = vsel %vm364, %v357, 0
      %368 = vmatprep.subr.mxu0 0.0
      %369 = vmatpush1.msra.mxu0 0.0
      %370 = vmatprep.subr.mxu0 0.0
      %371 = vmatpush1.msra.mxu0 0.0
      %372 = vmatprep.subr.mxu0 0.0
      %373 = vmatpush1.msra.mxu0 0.0
      %374 = vmatprep.subr.mxu0 0.0
      %375 = vmatpush1.msra.mxu0 0.0
      %376 = vmatprep.subr.mxu0 0.0
      %377 = vmatpush1.msra.mxu0 0.0
      %378 = vmatprep.subr.mxu0 0.0
      %379 = vmatpush1.msra.mxu0 0.0
      %380 = vmatprep.subr.mxu0 0.0
      %381 = vmatpush1.msra.mxu0 0.0
      %382 = vmatprep.subr.mxu0 0.0
      %383 = vmatpush1.msra.mxu0 0.0
      %384 = vmatprep.subr.mxu0 0.0
      %385 = vmatpush1.msra.mxu0 0.0
      %386 = vmatprep.subr.mxu0 0.0
      %387 = vmatpush1.msra.mxu0 0.0
      %388 = vmatprep.subr.mxu0 0.0
      %389 = vmatpush1.msra.mxu0 0.0
      %390 = vmatprep.subr.mxu0 0.0
      %391 = vmatpush1.msra.mxu0 0.0
      %392 = vmatprep.subr.mxu0 0.0
      %393 = vmatpush1.msra.mxu0 0.0
      %394 = vmatprep.subr.mxu0 0.0
      %395 = vmatpush1.msra.mxu0 0.0
      %396 = vmatprep.subr.mxu0 %v356
      %397 = vmatpush1.msra.mxu0 %v355
      %398 = vmatprep.subr.mxu0 %v354
      %399 = vmatpush1.msra.mxu0 %v353
      %400 = vmatprep.subr.mxu0 0.0
      %401 = vmatpush2.msra.mxu0 0.0
      %402 = vmatprep.subr.mxu0 0.0
      %403 = vmatpush2.msra.mxu0 0.0
      %404 = vmatprep.subr.mxu0 0.0
      %405 = vmatpush2.msra.mxu0 0.0
      %406 = vmatprep.subr.mxu0 0.0
      %407 = vmatpush2.msra.mxu0 0.0
      %408 = vmatprep.subr.mxu0 0.0
      %409 = vmatpush2.msra.mxu0 0.0
      %410 = vmatprep.subr.mxu0 0.0
      %411 = vmatpush2.msra.mxu0 0.0
      %412 = vmatprep.subr.mxu0 0.0
      %413 = vmatpush2.msra.mxu0 0.0
      %414 = vmatprep.subr.mxu0 0.0
      %415 = vmatpush2.msra.mxu0 0.0
      %416 = vmatprep.subr.mxu0 0.0
      %417 = vmatpush2.msra.mxu0 0.0
      %418 = vmatprep.subr.mxu0 0.0
      %419 = vmatpush2.msra.mxu0 0.0
      %420 = vmatprep.subr.mxu0 0.0
      %421 = vmatpush2.msra.mxu0 0.0
      %422 = vmatprep.subr.mxu0 0.0
      %423 = vmatpush2.msra.mxu0 0.0
      %424 = vmatprep.subr.mxu0 0.0
      %425 = vmatpush2.msra.mxu0 0.0
      %426 = vmatprep.subr.mxu0 0.0
      %427 = vmatpush2.msra.mxu0 0.0
      %428 = vmatprep.subr.mxu0 0.0
      %429 = vmatpush2.msra.mxu0 0.0
      %430 = vmatprep.subr.mxu0 0.0
      %431 = vmatpush2.msra.mxu0 0.0
      %432 = vmatprep.mubr.f32.mxu0 0.0
      %433 = vmatmul.mubr.f32.gmra.mxu0 %v366
      %v434 = vpop.f32.mrf.mxu0
      %v435 = vadd.f32 %v362, %v434
      %v436 = vpop.f32.mrf.mxu0
      %v437 = vadd.f32 %v362, %v436
      %438 = vdwg.mxu0
      %v441 = vcombine.low %v435, %v437
      %443 = vst [vmem:[%s226] sm:$0xff] %v441
      %s444 = smul.u32 2, %s16
      %p445 = scmp.lt.s32.totalorder %s444, 7
      %s446 = scalar_select %p445, %s444, 7
      %s447 = smul.addr %s446, 4
      %s448 = scalar_lea.vmem %s5, %s447
      // Predicated region
      $region41: #{gray_group_fno2d.19} parent=39 // pred_check
        %p449 = pneg %p144
      $region42: #{gray_group_fno2d.19} parent=39 // pred_check_branch
        %451 = sbr.rel (%p449) target = $region44
      $region43: #{gray_group_fno2d.19} parent=39 // pred_region
        %s452 = smul.u32 2, %s16
      $region44: #{gray_group_fno2d.19} parent=39 // pred_fallthru
        _
    $region40: #{gray_group_fno2d.19} parent=5 // pred_fallthru
      _
    %p453 = scmp.le.s32.totalorder 2, %s11
    // Predicated region
    $region45: #{gray_group_fno2d.19} parent=5 // pred_check
      %p454 = pneg %p453
    $region46: #{gray_group_fno2d.19} parent=5 // pred_check_branch
      %456 = sbr.rel (%p454) target = $region48
    $region47: #{gray_group_fno2d.19} parent=5 // pred_region
      %s457 = ssub.s32 %s11, 2
      // Predicated region
      $region49: #{gray_group_fno2d.19} parent=47 // pred_check
        %p458 = pneg %p150
      $region50: #{gray_group_fno2d.19} parent=47 // pred_check_branch
        %460 = sbr.rel (%p458) target = $region52
      $region51: #{gray_group_fno2d.19} parent=47 // pred_region
        %s461 = smul.u32 2, %s17
        %p462 = scmp.lt.s32.totalorder %s461, 7
        %s463 = scalar_select %p462, %s461, 7
        %s464 = smul.addr %s463, 4
        %s465 = scalar_lea.vmem %s5, %s464
      $region52: #{gray_group_fno2d.19} parent=47 // pred_fallthru
        _
    $region48: #{gray_group_fno2d.19} parent=5 // pred_fallthru
      _
  $region6: #{gray_group_fno2d.19} parent=0 // loop_footer
    %s15 = sadd.s32 1, %s11
  $region7: #{gray_group_fno2d.19} parent=0 // loop_footer_branch
    %10 = sbr.rel target = $region3
  $region8: #{gray_group_fno2d.19} parent=0 // loop_exit
    _

</llo_original>
